<compile_context>
chip_gen: v6e
topology: v6e:2x2x1
jax: 0.10.0
libtpu: 0.0.40
codegen_flags: <defaults>
</compile_context>

<pallas_src>
import numpy as np

import jax
import jax.numpy as jnp
from jax import lax
from jax.experimental import pallas as pl
from jax.experimental.pallas import tpu as pltpu


K = 5  # every convolution in Net2 is 5x5


# ---------------------------------------------------------------------------
# Fused Pallas kernel: whole Net2 forward for one batch element per grid step.
# ---------------------------------------------------------------------------
def _net2_kernel(x_ref, rg1_ref, t1_ref, b1_ref,
                 re_ref, ro_ref, se_ref, so_ref,
                 rg2_ref, t2_ref, b2_ref,
                 rgt_ref, tt_ref, bt_ref,
                 rg3_ref, t3_ref, b3_ref,
                 o_ref):
    def mm(a, b):
        return jnp.dot(a, b, preferred_element_type=jnp.float32)

    def toeplitz_conv(rg_ref, act, t_ref, hout):
        """sum_kh shift_kh(act) @ T[kh] using the row-shift-stack trick.

        Static Python loop -> fully unrolled, 1 + K small MXU matmuls.
        """
        st = mm(rg_ref[...], act)                 # (K*hout, Win*Ci) row-shift stack
        acc = mm(st[0:hout], t_ref[0])
        for kh in range(1, K):
            acc = acc + mm(st[kh * hout:(kh + 1) * hout], t_ref[kh])
        return acc

    x = x_ref[...]                                                # (16, 16), Ci == 1

    # conv1: 1 -> 8, 5x5, pad 2, ReLU.  Output layout (H=16, W*C=128).
    a1 = jnp.maximum(toeplitz_conv(rg1_ref, x, t1_ref, 16) + b1_ref[...], 0.0)
    # a1 is the skip tensor "y" in the PyTorch module.

    # 2x2 max pool (stride 2): 0/1 selection matmuls + elementwise max, in-register.
    rm = jnp.maximum(mm(re_ref[...], a1), mm(ro_ref[...], a1))        # (8, 128)
    pooled = jnp.maximum(mm(rm, se_ref[...]), mm(rm, so_ref[...]))    # (8, 64)

    # conv2: 8 -> 16, 5x5, pad 2, ReLU.  Output layout (8, 128).
    a2 = jnp.maximum(toeplitz_conv(rg2_ref, pooled, t2_ref, 8) + b2_ref[...], 0.0)

    # upconv1: ConvTranspose2d(16 -> 8, 5, stride=2, pad=2, output_padding=1), ReLU.
    # Row gather implements the H dilation + padding; W-dilation zeros are folded
    # into the Toeplitz weights tt, so no wasted MXU columns.
    a3 = jnp.maximum(toeplitz_conv(rgt_ref, a2, tt_ref, 16) + bt_ref[...], 0.0)  # (16, 128)

    # conv3 on channel-concat [upconv out, skip]: 16 -> 4, 5x5, pad 2, no ReLU.
    # Lane-aligned (128 | 128) concat, then ONE shared row gather; w3 pre-split
    # so its rows match the [a3-channels | a1-channels] column order.
    cat = jnp.concatenate([a3, a1], axis=1)                       # (16, 256)
    o_ref[...] = toeplitz_conv(rg3_ref, cat, t3_ref, 16) + b3_ref[...]  # (16, 64)


# ---------------------------------------------------------------------------
# One-time weight preprocessing (host side): PyTorch weights -> matmul operands.
# ---------------------------------------------------------------------------
def _conv_band(win, wout, pad):
    """band[kw, wi, wo] = 1  iff  wi == wo + kw - pad."""
    band = np.zeros((K, win, wout), np.float32)
    for kw in range(K):
        for wo in range(wout):
            wi = wo + kw - pad
            if 0 <= wi < win:
                band[kw, wi, wo] = 1.0
    return jnp.asarray(band)


def _convt_band(win, wout):
    """band[q, wi, wo] = 1  iff  wo == 2*wi - 2 + q  (stride-2 transposed conv in W)."""
    band = np.zeros((K, win, wout), np.float32)
    for q in range(K):
        for wi in range(win):
            wo = 2 * wi - 2 + q
            if 0 <= wo < wout:
                band[q, wi, wo] = 1.0
    return jnp.asarray(band)


def _row_gather(hout, hin, pad):
    """g[kh*hout + h, hi] = 1  iff  hi == h + kh - pad  (zero rows == H zero-padding)."""
    g = np.zeros((K, hout, hin), np.float32)
    for kh in range(K):
        for h in range(hout):
            hi = h + kh - pad
            if 0 <= hi < hin:
                g[kh, h, hi] = 1.0
    return jnp.asarray(g.reshape(K * hout, hin))


def _row_gather_transposed(hout, hin):
    """g[kh*hout + ho, hi] = 1  iff  ho + kh - 2 == 2*hi  (H dilation + padding)."""
    g = np.zeros((K, hout, hin), np.float32)
    for kh in range(K):
        for ho in range(hout):
            t = ho + kh - 2
            if t >= 0 and t % 2 == 0 and t // 2 < hin:
                g[kh, ho, t // 2] = 1.0
    return jnp.asarray(g.reshape(K * hout, hin))


def _pool_selectors(hout, wout, c):
    re = np.zeros((hout, 2 * hout), np.float32)
    ro = np.zeros((hout, 2 * hout), np.float32)
    for r in range(hout):
        re[r, 2 * r] = 1.0
        ro[r, 2 * r + 1] = 1.0
    se = np.zeros((2 * wout * c, wout * c), np.float32)
    so = np.zeros((2 * wout * c, wout * c), np.float32)
    for w in range(wout):
        for cc in range(c):
            se[(2 * w) * c + cc, w * c + cc] = 1.0
            so[(2 * w + 1) * c + cc, w * c + cc] = 1.0
    return jnp.asarray(re), jnp.asarray(ro), jnp.asarray(se), jnp.asarray(so)


def prepare_params(p):
    """Build the block-Toeplitz / selection operands consumed by the fused kernel."""
    w1, w2, w3, wt = p["w1"], p["w2"], p["w3"], p["wt"]

    band16 = _conv_band(16, 16, 2)
    band8 = _conv_band(8, 8, 2)
    bandt = _convt_band(8, 16)

    # T[kh, wi*Ci+ci, wo*Co+co] = W[co, ci, kh, wi - wo + 2]   (W-direction Toeplitz)
    t1 = jnp.einsum("qiw,ockq->kicwo", band16, w1).reshape(K, 16 * 1, 16 * 8)
    t2 = jnp.einsum("qiw,ockq->kicwo", band8, w2).reshape(K, 8 * 8, 8 * 16)

    # Transposed conv: tt[kh, wi*16+ci, wo*8+co] = Wt[ci, co, 4-kh, wo - 2*wi + 2]
    tt = jnp.einsum("qiw,cokq->kicwo", bandt, wt[:, :, ::-1, :]).reshape(K, 8 * 16, 16 * 8)

    # conv3 weights, split along input channels (upconv half | skip half) so the
    # concat can stay a lane-aligned VMEM concatenate inside the kernel.
    t3_5d = jnp.einsum("qiw,ockq->kicwo", band16, w3)             # (K, 16, 16, 16, 4)
    t3 = jnp.concatenate(
        [t3_5d[:, :, 0:8].reshape(K, 128, 64),
         t3_5d[:, :, 8:16].reshape(K, 128, 64)],
        axis=1)                                                   # (K, 256, 64)

    rg1 = _row_gather(16, 16, 2)           # (80, 16)
    rg2 = _row_gather(8, 8, 2)             # (40, 8)
    rgt = _row_gather_transposed(16, 8)    # (80, 8)
    rg3 = rg1                              # same geometry as conv1

    re, ro, se, so = _pool_selectors(8, 8, 8)

    b1r = jnp.tile(p["b1"], 16).reshape(1, 128)
    b2r = jnp.tile(p["b2"], 8).reshape(1, 128)
    btr = jnp.tile(p["bt"], 16).reshape(1, 128)
    b3r = jnp.tile(p["b3"], 16).reshape(1, 64)

    return (rg1, t1, b1r, re, ro, se, so, rg2, t2, b2r, rgt, tt, btr, rg3, t3, b3r)


# ---------------------------------------------------------------------------
# Forward pass (NCHW in / NCHW out, exactly like the PyTorch module).
# ---------------------------------------------------------------------------
def _const_map(ndim):
    return lambda b: (0,) * ndim


@jax.jit
def net2_forward(x_nchw, prep):
    B = x_nchw.shape[0]
    x = x_nchw[:, 0, :, :].astype(jnp.float32)                    # (B, 16, 16); Ci == 1

    in_specs = [pl.BlockSpec((None, 16, 16), lambda b: (b, 0, 0))]
    # Weight operands: full-array blocks with a constant index map, so Pallas
    # keeps them resident in VMEM across grid steps (no re-DMA per element).
    in_specs += [pl.BlockSpec(a.shape, _const_map(a.ndim)) for a in prep]

    out = pl.pallas_call(
        _net2_kernel,
        out_shape=jax.ShapeDtypeStruct((B, 16, 64), jnp.float32),
        grid=(B,),
        in_specs=in_specs,
        out_specs=pl.BlockSpec((None, 16, 64), lambda b: (b, 0, 0)),
        compiler_params=pltpu.CompilerParams(
            dimension_semantics=("parallel",)),
    )(x, *prep)

    return out.reshape(B, 16, 16, 4).transpose(0, 3, 1, 2)        # (B, 4, 16, 16)


# ---------------------------------------------------------------------------
# Deterministic parameter init (PyTorch weight layouts).
# ---------------------------------------------------------------------------
def init_params(key):
    def uni(k, shape, fan_in):
        bound = 1.0 / jnp.sqrt(jnp.float32(fan_in))
        return jax.random.uniform(k, shape, jnp.float32, -bound, bound)

    ks = jax.random.split(key, 8)
    return {
        "w1": uni(ks[0], (8, 1, 5, 5), 1 * 25),     # Conv2d(1, 8, 5)   (O, I, kh, kw)
        "b1": uni(ks[1], (8,), 1 * 25),
        "w2": uni(ks[2], (16, 8, 5, 5), 8 * 25),    # Conv2d(8, 16, 5)
        "b2": uni(ks[3], (16,), 8 * 25),
        "wt": uni(ks[4], (16, 8, 5, 5), 16 * 25),   # ConvTranspose2d(16, 8, 5) (I, O, kh, kw)
        "bt": uni(ks[5], (8,), 16 * 25),
        "w3": uni(ks[6], (4, 16, 5, 5), 16 * 25),   # Conv2d(16, 4, 5)
        "b3": uni(ks[7], (4,), 16 * 25),
    }


# ---------------------------------------------------------------------------
# Pure-JAX reference (mirrors the PyTorch forward) for the correctness check.
# ---------------------------------------------------------------------------
def net2_reference(x_nchw, p):
    dn = ("NCHW", "OIHW", "NCHW")

    def conv(x, w, b, pad):
        o = lax.conv_general_dilated(x, w, (1, 1), [(pad, pad), (pad, pad)],
                                     dimension_numbers=dn)
        return o + b[None, :, None, None]

    h = jax.nn.relu(conv(x_nchw, p["w1"], p["b1"], 2))
    y = h
    h = lax.reduce_window(h, -jnp.inf, lax.max, (1, 1, 2, 2), (1, 1, 2, 2), "VALID")
    h = jax.nn.relu(conv(h, p["w2"], p["b2"], 2))
    w_eq = jnp.transpose(p["wt"][:, :, ::-1, ::-1], (1, 0, 2, 3))   # (O, I, kh, kw)
    h = lax.conv_general_dilated(h, w_eq, (1, 1), [(2, 3), (2, 3)],
                                 lhs_dilation=(2, 2), dimension_numbers=dn)
    h = jax.nn.relu(h + p["bt"][None, :, None, None])
    h = jnp.concatenate([h, y], axis=1)
    return conv(h, p["w3"], p["b3"], 2)


if __name__ == "__main__":
    key = jax.random.PRNGKey(0)
    kx, kp = jax.random.split(key)
    x = jax.random.normal(kx, (2, 1, 16, 16), jnp.float32)   # NCHW, like the PyTorch module
    params = init_params(kp)

    prep = prepare_params(params)                 # one-time weight preprocessing
    out = jax.block_until_ready(net2_forward(x, prep))
    assert out.shape == (2, 4, 16, 16), out.shape

    ref = net2_reference(x, params)
    max_err = float(jnp.max(jnp.abs(out - ref)))
    assert jnp.allclose(out, ref, atol=2e-2, rtol=2e-2), f"max abs err {max_err}"

    print("KERNEL_OK")
</pallas_src>

<mosaic_0001>
module attributes {stable_mosaic.version = 11 : i64} {
  func.func @_net2_kernel(%arg0: i32, %arg1: memref<1x16x16xf32, #tpu.memory_space<vmem>>, %arg2: memref<80x16xf32, #tpu.memory_space<vmem>>, %arg3: memref<5x16x128xf32, #tpu.memory_space<vmem>>, %arg4: memref<1x128xf32, #tpu.memory_space<vmem>>, %arg5: memref<8x16xf32, #tpu.memory_space<vmem>>, %arg6: memref<8x16xf32, #tpu.memory_space<vmem>>, %arg7: memref<128x64xf32, #tpu.memory_space<vmem>>, %arg8: memref<128x64xf32, #tpu.memory_space<vmem>>, %arg9: memref<40x8xf32, #tpu.memory_space<vmem>>, %arg10: memref<5x64x128xf32, #tpu.memory_space<vmem>>, %arg11: memref<1x128xf32, #tpu.memory_space<vmem>>, %arg12: memref<80x8xf32, #tpu.memory_space<vmem>>, %arg13: memref<5x128x128xf32, #tpu.memory_space<vmem>>, %arg14: memref<1x128xf32, #tpu.memory_space<vmem>>, %arg15: memref<80x16xf32, #tpu.memory_space<vmem>>, %arg16: memref<5x256x64xf32, #tpu.memory_space<vmem>>, %arg17: memref<1x64xf32, #tpu.memory_space<vmem>>, %arg18: memref<1x16x64xf32, #tpu.memory_space<vmem>>) attributes {dimension_semantics = [#tpu.dimension_semantics<parallel>], iteration_bounds = array<i64: 2>, scalar_prefetch = 0 : i64, scratch_operands = 0 : i64, tpu.core_type = #tpu.core_type<tc>, window_params = [{transform_indices = @transform_0, window_bounds = array<i64: 1, 16, 16>}, {pipeline_mode = #tpu.pipeline_mode<synchronous>, transform_indices = @transform_1, window_bounds = array<i64: 80, 16>}, {pipeline_mode = #tpu.pipeline_mode<synchronous>, transform_indices = @transform_2, window_bounds = array<i64: 5, 16, 128>}, {pipeline_mode = #tpu.pipeline_mode<synchronous>, transform_indices = @transform_3, window_bounds = array<i64: 1, 128>}, {pipeline_mode = #tpu.pipeline_mode<synchronous>, transform_indices = @transform_4, window_bounds = array<i64: 8, 16>}, {pipeline_mode = #tpu.pipeline_mode<synchronous>, transform_indices = @transform_5, window_bounds = array<i64: 8, 16>}, {pipeline_mode = #tpu.pipeline_mode<synchronous>, transform_indices = @transform_6, window_bounds = array<i64: 128, 64>}, {pipeline_mode = #tpu.pipeline_mode<synchronous>, transform_indices = @transform_7, window_bounds = array<i64: 128, 64>}, {pipeline_mode = #tpu.pipeline_mode<synchronous>, transform_indices = @transform_8, window_bounds = array<i64: 40, 8>}, {pipeline_mode = #tpu.pipeline_mode<synchronous>, transform_indices = @transform_9, window_bounds = array<i64: 5, 64, 128>}, {pipeline_mode = #tpu.pipeline_mode<synchronous>, transform_indices = @transform_10, window_bounds = array<i64: 1, 128>}, {pipeline_mode = #tpu.pipeline_mode<synchronous>, transform_indices = @transform_11, window_bounds = array<i64: 80, 8>}, {pipeline_mode = #tpu.pipeline_mode<synchronous>, transform_indices = @transform_12, window_bounds = array<i64: 5, 128, 128>}, {pipeline_mode = #tpu.pipeline_mode<synchronous>, transform_indices = @transform_13, window_bounds = array<i64: 1, 128>}, {pipeline_mode = #tpu.pipeline_mode<synchronous>, transform_indices = @transform_14, window_bounds = array<i64: 80, 16>}, {pipeline_mode = #tpu.pipeline_mode<synchronous>, transform_indices = @transform_15, window_bounds = array<i64: 5, 256, 64>}, {pipeline_mode = #tpu.pipeline_mode<synchronous>, transform_indices = @transform_16, window_bounds = array<i64: 1, 64>}, {transform_indices = @transform_17, window_bounds = array<i64: 1, 16, 64>}]} {
    %c0 = arith.constant 0 : index
    %c0_0 = arith.constant 0 : index
    %c0_1 = arith.constant 0 : index
    %0 = vector.load %arg1[%c0, %c0_0, %c0_1] : memref<1x16x16xf32, #tpu.memory_space<vmem>>, vector<1x16x16xf32>
    %1 = vector.shape_cast %0 : vector<1x16x16xf32> to vector<16x16xf32>
    %c0_2 = arith.constant 0 : index
    %c0_3 = arith.constant 0 : index
    %2 = vector.load %arg2[%c0_2, %c0_3] : memref<80x16xf32, #tpu.memory_space<vmem>>, vector<80x16xf32>
    %cst = arith.constant dense<0.000000e+00> : vector<80x16xf32>
    %3 = tpu.matmul %2, %1, %cst {dimension_numbers = #tpu.dot_dimension_numbers<[1], [0], [0], [1], [0, 0, 1, 1], [], []>} : vector<80x16xf32>, vector<16x16xf32>, vector<80x16xf32> -> vector<80x16xf32>
    %4 = vector.extract_strided_slice %3 {offsets = [0, 0], sizes = [16, 16], strides = [1, 1]} : vector<80x16xf32> to vector<16x16xf32>
    %c0_4 = arith.constant 0 : index
    %c0_5 = arith.constant 0 : index
    %c0_6 = arith.constant 0 : index
    %5 = vector.load %arg3[%c0_4, %c0_5, %c0_6] : memref<5x16x128xf32, #tpu.memory_space<vmem>>, vector<1x16x128xf32>
    %6 = vector.shape_cast %5 : vector<1x16x128xf32> to vector<16x128xf32>
    %cst_7 = arith.constant dense<0.000000e+00> : vector<16x128xf32>
    %7 = tpu.matmul %4, %6, %cst_7 {dimension_numbers = #tpu.dot_dimension_numbers<[1], [0], [0], [1], [0, 0, 1, 1], [], []>} : vector<16x16xf32>, vector<16x128xf32>, vector<16x128xf32> -> vector<16x128xf32>
    %8 = vector.extract_strided_slice %3 {offsets = [16, 0], sizes = [16, 16], strides = [1, 1]} : vector<80x16xf32> to vector<16x16xf32>
    %c1 = arith.constant 1 : index
    %c0_8 = arith.constant 0 : index
    %c0_9 = arith.constant 0 : index
    %9 = vector.load %arg3[%c1, %c0_8, %c0_9] : memref<5x16x128xf32, #tpu.memory_space<vmem>>, vector<1x16x128xf32>
    %10 = vector.shape_cast %9 : vector<1x16x128xf32> to vector<16x128xf32>
    %cst_10 = arith.constant dense<0.000000e+00> : vector<16x128xf32>
    %11 = tpu.matmul %8, %10, %cst_10 {dimension_numbers = #tpu.dot_dimension_numbers<[1], [0], [0], [1], [0, 0, 1, 1], [], []>} : vector<16x16xf32>, vector<16x128xf32>, vector<16x128xf32> -> vector<16x128xf32>
    %12 = arith.addf %7, %11 : vector<16x128xf32>
    %13 = vector.extract_strided_slice %3 {offsets = [32, 0], sizes = [16, 16], strides = [1, 1]} : vector<80x16xf32> to vector<16x16xf32>
    %c2 = arith.constant 2 : index
    %c0_11 = arith.constant 0 : index
    %c0_12 = arith.constant 0 : index
    %14 = vector.load %arg3[%c2, %c0_11, %c0_12] : memref<5x16x128xf32, #tpu.memory_space<vmem>>, vector<1x16x128xf32>
    %15 = vector.shape_cast %14 : vector<1x16x128xf32> to vector<16x128xf32>
    %cst_13 = arith.constant dense<0.000000e+00> : vector<16x128xf32>
    %16 = tpu.matmul %13, %15, %cst_13 {dimension_numbers = #tpu.dot_dimension_numbers<[1], [0], [0], [1], [0, 0, 1, 1], [], []>} : vector<16x16xf32>, vector<16x128xf32>, vector<16x128xf32> -> vector<16x128xf32>
    %17 = arith.addf %12, %16 : vector<16x128xf32>
    %18 = vector.extract_strided_slice %3 {offsets = [48, 0], sizes = [16, 16], strides = [1, 1]} : vector<80x16xf32> to vector<16x16xf32>
    %c3 = arith.constant 3 : index
    %c0_14 = arith.constant 0 : index
    %c0_15 = arith.constant 0 : index
    %19 = vector.load %arg3[%c3, %c0_14, %c0_15] : memref<5x16x128xf32, #tpu.memory_space<vmem>>, vector<1x16x128xf32>
    %20 = vector.shape_cast %19 : vector<1x16x128xf32> to vector<16x128xf32>
    %cst_16 = arith.constant dense<0.000000e+00> : vector<16x128xf32>
    %21 = tpu.matmul %18, %20, %cst_16 {dimension_numbers = #tpu.dot_dimension_numbers<[1], [0], [0], [1], [0, 0, 1, 1], [], []>} : vector<16x16xf32>, vector<16x128xf32>, vector<16x128xf32> -> vector<16x128xf32>
    %22 = arith.addf %17, %21 : vector<16x128xf32>
    %23 = vector.extract_strided_slice %3 {offsets = [64, 0], sizes = [16, 16], strides = [1, 1]} : vector<80x16xf32> to vector<16x16xf32>
    %c4 = arith.constant 4 : index
    %c0_17 = arith.constant 0 : index
    %c0_18 = arith.constant 0 : index
    %24 = vector.load %arg3[%c4, %c0_17, %c0_18] : memref<5x16x128xf32, #tpu.memory_space<vmem>>, vector<1x16x128xf32>
    %25 = vector.shape_cast %24 : vector<1x16x128xf32> to vector<16x128xf32>
    %cst_19 = arith.constant dense<0.000000e+00> : vector<16x128xf32>
    %26 = tpu.matmul %23, %25, %cst_19 {dimension_numbers = #tpu.dot_dimension_numbers<[1], [0], [0], [1], [0, 0, 1, 1], [], []>} : vector<16x16xf32>, vector<16x128xf32>, vector<16x128xf32> -> vector<16x128xf32>
    %27 = arith.addf %22, %26 : vector<16x128xf32>
    %c0_20 = arith.constant 0 : index
    %c0_21 = arith.constant 0 : index
    %28 = vector.load %arg4[%c0_20, %c0_21] : memref<1x128xf32, #tpu.memory_space<vmem>>, vector<1x128xf32>
    %29 = vector.broadcast %28 : vector<1x128xf32> to vector<16x128xf32>
    %30 = arith.addf %27, %29 : vector<16x128xf32>
    %cst_22 = arith.constant 0.000000e+00 : f32
    %31 = vector.broadcast %cst_22 : f32 to vector<16x128xf32>
    %32 = arith.maximumf %30, %31 : vector<16x128xf32>
    %c0_23 = arith.constant 0 : index
    %c0_24 = arith.constant 0 : index
    %33 = vector.load %arg5[%c0_23, %c0_24] : memref<8x16xf32, #tpu.memory_space<vmem>>, vector<8x16xf32>
    %cst_25 = arith.constant dense<0.000000e+00> : vector<8x128xf32>
    %34 = tpu.matmul %33, %32, %cst_25 {dimension_numbers = #tpu.dot_dimension_numbers<[1], [0], [0], [1], [0, 0, 1, 1], [], []>} : vector<8x16xf32>, vector<16x128xf32>, vector<8x128xf32> -> vector<8x128xf32>
    %c0_26 = arith.constant 0 : index
    %c0_27 = arith.constant 0 : index
    %35 = vector.load %arg6[%c0_26, %c0_27] : memref<8x16xf32, #tpu.memory_space<vmem>>, vector<8x16xf32>
    %cst_28 = arith.constant dense<0.000000e+00> : vector<8x128xf32>
    %36 = tpu.matmul %35, %32, %cst_28 {dimension_numbers = #tpu.dot_dimension_numbers<[1], [0], [0], [1], [0, 0, 1, 1], [], []>} : vector<8x16xf32>, vector<16x128xf32>, vector<8x128xf32> -> vector<8x128xf32>
    %37 = arith.maximumf %34, %36 : vector<8x128xf32>
    %c0_29 = arith.constant 0 : index
    %c0_30 = arith.constant 0 : index
    %38 = vector.load %arg7[%c0_29, %c0_30] : memref<128x64xf32, #tpu.memory_space<vmem>>, vector<128x64xf32>
    %cst_31 = arith.constant dense<0.000000e+00> : vector<8x64xf32>
    %39 = tpu.matmul %37, %38, %cst_31 {dimension_numbers = #tpu.dot_dimension_numbers<[1], [0], [0], [1], [0, 0, 1, 1], [], []>} : vector<8x128xf32>, vector<128x64xf32>, vector<8x64xf32> -> vector<8x64xf32>
    %c0_32 = arith.constant 0 : index
    %c0_33 = arith.constant 0 : index
    %40 = vector.load %arg8[%c0_32, %c0_33] : memref<128x64xf32, #tpu.memory_space<vmem>>, vector<128x64xf32>
    %cst_34 = arith.constant dense<0.000000e+00> : vector<8x64xf32>
    %41 = tpu.matmul %37, %40, %cst_34 {dimension_numbers = #tpu.dot_dimension_numbers<[1], [0], [0], [1], [0, 0, 1, 1], [], []>} : vector<8x128xf32>, vector<128x64xf32>, vector<8x64xf32> -> vector<8x64xf32>
    %42 = arith.maximumf %39, %41 : vector<8x64xf32>
    %c0_35 = arith.constant 0 : index
    %c0_36 = arith.constant 0 : index
    %43 = vector.load %arg9[%c0_35, %c0_36] : memref<40x8xf32, #tpu.memory_space<vmem>>, vector<40x8xf32>
    %cst_37 = arith.constant dense<0.000000e+00> : vector<40x64xf32>
    %44 = tpu.matmul %43, %42, %cst_37 {dimension_numbers = #tpu.dot_dimension_numbers<[1], [0], [0], [1], [0, 0, 1, 1], [], []>} : vector<40x8xf32>, vector<8x64xf32>, vector<40x64xf32> -> vector<40x64xf32>
    %45 = vector.extract_strided_slice %44 {offsets = [0, 0], sizes = [8, 64], strides = [1, 1]} : vector<40x64xf32> to vector<8x64xf32>
    %c0_38 = arith.constant 0 : index
    %c0_39 = arith.constant 0 : index
    %c0_40 = arith.constant 0 : index
    %46 = vector.load %arg10[%c0_38, %c0_39, %c0_40] : memref<5x64x128xf32, #tpu.memory_space<vmem>>, vector<1x64x128xf32>
    %47 = vector.shape_cast %46 : vector<1x64x128xf32> to vector<64x128xf32>
    %cst_41 = arith.constant dense<0.000000e+00> : vector<8x128xf32>
    %48 = tpu.matmul %45, %47, %cst_41 {dimension_numbers = #tpu.dot_dimension_numbers<[1], [0], [0], [1], [0, 0, 1, 1], [], []>} : vector<8x64xf32>, vector<64x128xf32>, vector<8x128xf32> -> vector<8x128xf32>
    %49 = vector.extract_strided_slice %44 {offsets = [8, 0], sizes = [8, 64], strides = [1, 1]} : vector<40x64xf32> to vector<8x64xf32>
    %c1_42 = arith.constant 1 : index
    %c0_43 = arith.constant 0 : index
    %c0_44 = arith.constant 0 : index
    %50 = vector.load %arg10[%c1_42, %c0_43, %c0_44] : memref<5x64x128xf32, #tpu.memory_space<vmem>>, vector<1x64x128xf32>
    %51 = vector.shape_cast %50 : vector<1x64x128xf32> to vector<64x128xf32>
    %cst_45 = arith.constant dense<0.000000e+00> : vector<8x128xf32>
    %52 = tpu.matmul %49, %51, %cst_45 {dimension_numbers = #tpu.dot_dimension_numbers<[1], [0], [0], [1], [0, 0, 1, 1], [], []>} : vector<8x64xf32>, vector<64x128xf32>, vector<8x128xf32> -> vector<8x128xf32>
    %53 = arith.addf %48, %52 : vector<8x128xf32>
    %54 = vector.extract_strided_slice %44 {offsets = [16, 0], sizes = [8, 64], strides = [1, 1]} : vector<40x64xf32> to vector<8x64xf32>
    %c2_46 = arith.constant 2 : index
    %c0_47 = arith.constant 0 : index
    %c0_48 = arith.constant 0 : index
    %55 = vector.load %arg10[%c2_46, %c0_47, %c0_48] : memref<5x64x128xf32, #tpu.memory_space<vmem>>, vector<1x64x128xf32>
    %56 = vector.shape_cast %55 : vector<1x64x128xf32> to vector<64x128xf32>
    %cst_49 = arith.constant dense<0.000000e+00> : vector<8x128xf32>
    %57 = tpu.matmul %54, %56, %cst_49 {dimension_numbers = #tpu.dot_dimension_numbers<[1], [0], [0], [1], [0, 0, 1, 1], [], []>} : vector<8x64xf32>, vector<64x128xf32>, vector<8x128xf32> -> vector<8x128xf32>
    %58 = arith.addf %53, %57 : vector<8x128xf32>
    %59 = vector.extract_strided_slice %44 {offsets = [24, 0], sizes = [8, 64], strides = [1, 1]} : vector<40x64xf32> to vector<8x64xf32>
    %c3_50 = arith.constant 3 : index
    %c0_51 = arith.constant 0 : index
    %c0_52 = arith.constant 0 : index
    %60 = vector.load %arg10[%c3_50, %c0_51, %c0_52] : memref<5x64x128xf32, #tpu.memory_space<vmem>>, vector<1x64x128xf32>
    %61 = vector.shape_cast %60 : vector<1x64x128xf32> to vector<64x128xf32>
    %cst_53 = arith.constant dense<0.000000e+00> : vector<8x128xf32>
    %62 = tpu.matmul %59, %61, %cst_53 {dimension_numbers = #tpu.dot_dimension_numbers<[1], [0], [0], [1], [0, 0, 1, 1], [], []>} : vector<8x64xf32>, vector<64x128xf32>, vector<8x128xf32> -> vector<8x128xf32>
    %63 = arith.addf %58, %62 : vector<8x128xf32>
    %64 = vector.extract_strided_slice %44 {offsets = [32, 0], sizes = [8, 64], strides = [1, 1]} : vector<40x64xf32> to vector<8x64xf32>
    %c4_54 = arith.constant 4 : index
    %c0_55 = arith.constant 0 : index
    %c0_56 = arith.constant 0 : index
    %65 = vector.load %arg10[%c4_54, %c0_55, %c0_56] : memref<5x64x128xf32, #tpu.memory_space<vmem>>, vector<1x64x128xf32>
    %66 = vector.shape_cast %65 : vector<1x64x128xf32> to vector<64x128xf32>
    %cst_57 = arith.constant dense<0.000000e+00> : vector<8x128xf32>
    %67 = tpu.matmul %64, %66, %cst_57 {dimension_numbers = #tpu.dot_dimension_numbers<[1], [0], [0], [1], [0, 0, 1, 1], [], []>} : vector<8x64xf32>, vector<64x128xf32>, vector<8x128xf32> -> vector<8x128xf32>
    %68 = arith.addf %63, %67 : vector<8x128xf32>
    %c0_58 = arith.constant 0 : index
    %c0_59 = arith.constant 0 : index
    %69 = vector.load %arg11[%c0_58, %c0_59] : memref<1x128xf32, #tpu.memory_space<vmem>>, vector<1x128xf32>
    %70 = vector.broadcast %69 : vector<1x128xf32> to vector<8x128xf32>
    %71 = arith.addf %68, %70 : vector<8x128xf32>
    %cst_60 = arith.constant 0.000000e+00 : f32
    %72 = vector.broadcast %cst_60 : f32 to vector<8x128xf32>
    %73 = arith.maximumf %71, %72 : vector<8x128xf32>
    %c0_61 = arith.constant 0 : index
    %c0_62 = arith.constant 0 : index
    %74 = vector.load %arg12[%c0_61, %c0_62] : memref<80x8xf32, #tpu.memory_space<vmem>>, vector<80x8xf32>
    %cst_63 = arith.constant dense<0.000000e+00> : vector<80x128xf32>
    %75 = tpu.matmul %74, %73, %cst_63 {dimension_numbers = #tpu.dot_dimension_numbers<[1], [0], [0], [1], [0, 0, 1, 1], [], []>} : vector<80x8xf32>, vector<8x128xf32>, vector<80x128xf32> -> vector<80x128xf32>
    %76 = vector.extract_strided_slice %75 {offsets = [0, 0], sizes = [16, 128], strides = [1, 1]} : vector<80x128xf32> to vector<16x128xf32>
    %c0_64 = arith.constant 0 : index
    %c0_65 = arith.constant 0 : index
    %c0_66 = arith.constant 0 : index
    %77 = vector.load %arg13[%c0_64, %c0_65, %c0_66] : memref<5x128x128xf32, #tpu.memory_space<vmem>>, vector<1x128x128xf32>
    %78 = vector.shape_cast %77 : vector<1x128x128xf32> to vector<128x128xf32>
    %cst_67 = arith.constant dense<0.000000e+00> : vector<16x128xf32>
    %79 = tpu.matmul %76, %78, %cst_67 {dimension_numbers = #tpu.dot_dimension_numbers<[1], [0], [0], [1], [0, 0, 1, 1], [], []>} : vector<16x128xf32>, vector<128x128xf32>, vector<16x128xf32> -> vector<16x128xf32>
    %80 = vector.extract_strided_slice %75 {offsets = [16, 0], sizes = [16, 128], strides = [1, 1]} : vector<80x128xf32> to vector<16x128xf32>
    %c1_68 = arith.constant 1 : index
    %c0_69 = arith.constant 0 : index
    %c0_70 = arith.constant 0 : index
    %81 = vector.load %arg13[%c1_68, %c0_69, %c0_70] : memref<5x128x128xf32, #tpu.memory_space<vmem>>, vector<1x128x128xf32>
    %82 = vector.shape_cast %81 : vector<1x128x128xf32> to vector<128x128xf32>
    %cst_71 = arith.constant dense<0.000000e+00> : vector<16x128xf32>
    %83 = tpu.matmul %80, %82, %cst_71 {dimension_numbers = #tpu.dot_dimension_numbers<[1], [0], [0], [1], [0, 0, 1, 1], [], []>} : vector<16x128xf32>, vector<128x128xf32>, vector<16x128xf32> -> vector<16x128xf32>
    %84 = arith.addf %79, %83 : vector<16x128xf32>
    %85 = vector.extract_strided_slice %75 {offsets = [32, 0], sizes = [16, 128], strides = [1, 1]} : vector<80x128xf32> to vector<16x128xf32>
    %c2_72 = arith.constant 2 : index
    %c0_73 = arith.constant 0 : index
    %c0_74 = arith.constant 0 : index
    %86 = vector.load %arg13[%c2_72, %c0_73, %c0_74] : memref<5x128x128xf32, #tpu.memory_space<vmem>>, vector<1x128x128xf32>
    %87 = vector.shape_cast %86 : vector<1x128x128xf32> to vector<128x128xf32>
    %cst_75 = arith.constant dense<0.000000e+00> : vector<16x128xf32>
    %88 = tpu.matmul %85, %87, %cst_75 {dimension_numbers = #tpu.dot_dimension_numbers<[1], [0], [0], [1], [0, 0, 1, 1], [], []>} : vector<16x128xf32>, vector<128x128xf32>, vector<16x128xf32> -> vector<16x128xf32>
    %89 = arith.addf %84, %88 : vector<16x128xf32>
    %90 = vector.extract_strided_slice %75 {offsets = [48, 0], sizes = [16, 128], strides = [1, 1]} : vector<80x128xf32> to vector<16x128xf32>
    %c3_76 = arith.constant 3 : index
    %c0_77 = arith.constant 0 : index
    %c0_78 = arith.constant 0 : index
    %91 = vector.load %arg13[%c3_76, %c0_77, %c0_78] : memref<5x128x128xf32, #tpu.memory_space<vmem>>, vector<1x128x128xf32>
    %92 = vector.shape_cast %91 : vector<1x128x128xf32> to vector<128x128xf32>
    %cst_79 = arith.constant dense<0.000000e+00> : vector<16x128xf32>
    %93 = tpu.matmul %90, %92, %cst_79 {dimension_numbers = #tpu.dot_dimension_numbers<[1], [0], [0], [1], [0, 0, 1, 1], [], []>} : vector<16x128xf32>, vector<128x128xf32>, vector<16x128xf32> -> vector<16x128xf32>
    %94 = arith.addf %89, %93 : vector<16x128xf32>
    %95 = vector.extract_strided_slice %75 {offsets = [64, 0], sizes = [16, 128], strides = [1, 1]} : vector<80x128xf32> to vector<16x128xf32>
    %c4_80 = arith.constant 4 : index
    %c0_81 = arith.constant 0 : index
    %c0_82 = arith.constant 0 : index
    %96 = vector.load %arg13[%c4_80, %c0_81, %c0_82] : memref<5x128x128xf32, #tpu.memory_space<vmem>>, vector<1x128x128xf32>
    %97 = vector.shape_cast %96 : vector<1x128x128xf32> to vector<128x128xf32>
    %cst_83 = arith.constant dense<0.000000e+00> : vector<16x128xf32>
    %98 = tpu.matmul %95, %97, %cst_83 {dimension_numbers = #tpu.dot_dimension_numbers<[1], [0], [0], [1], [0, 0, 1, 1], [], []>} : vector<16x128xf32>, vector<128x128xf32>, vector<16x128xf32> -> vector<16x128xf32>
    %99 = arith.addf %94, %98 : vector<16x128xf32>
    %c0_84 = arith.constant 0 : index
    %c0_85 = arith.constant 0 : index
    %100 = vector.load %arg14[%c0_84, %c0_85] : memref<1x128xf32, #tpu.memory_space<vmem>>, vector<1x128xf32>
    %101 = vector.broadcast %100 : vector<1x128xf32> to vector<16x128xf32>
    %102 = arith.addf %99, %101 : vector<16x128xf32>
    %cst_86 = arith.constant 0.000000e+00 : f32
    %103 = vector.broadcast %cst_86 : f32 to vector<16x128xf32>
    %104 = arith.maximumf %102, %103 : vector<16x128xf32>
    %105 = tpu.concatenate %104, %32 in 1 : vector<16x128xf32>, vector<16x128xf32> -> vector<16x256xf32>
    %c0_87 = arith.constant 0 : index
    %c0_88 = arith.constant 0 : index
    %106 = vector.load %arg15[%c0_87, %c0_88] : memref<80x16xf32, #tpu.memory_space<vmem>>, vector<80x16xf32>
    %cst_89 = arith.constant dense<0.000000e+00> : vector<80x256xf32>
    %107 = tpu.matmul %106, %105, %cst_89 {dimension_numbers = #tpu.dot_dimension_numbers<[1], [0], [0], [1], [0, 0, 1, 1], [], []>} : vector<80x16xf32>, vector<16x256xf32>, vector<80x256xf32> -> vector<80x256xf32>
    %108 = vector.extract_strided_slice %107 {offsets = [0, 0], sizes = [16, 256], strides = [1, 1]} : vector<80x256xf32> to vector<16x256xf32>
    %c0_90 = arith.constant 0 : index
    %c0_91 = arith.constant 0 : index
    %c0_92 = arith.constant 0 : index
    %109 = vector.load %arg16[%c0_90, %c0_91, %c0_92] : memref<5x256x64xf32, #tpu.memory_space<vmem>>, vector<1x256x64xf32>
    %110 = vector.shape_cast %109 : vector<1x256x64xf32> to vector<256x64xf32>
    %cst_93 = arith.constant dense<0.000000e+00> : vector<16x64xf32>
    %111 = tpu.matmul %108, %110, %cst_93 {dimension_numbers = #tpu.dot_dimension_numbers<[1], [0], [0], [1], [0, 0, 1, 1], [], []>} : vector<16x256xf32>, vector<256x64xf32>, vector<16x64xf32> -> vector<16x64xf32>
    %112 = vector.extract_strided_slice %107 {offsets = [16, 0], sizes = [16, 256], strides = [1, 1]} : vector<80x256xf32> to vector<16x256xf32>
    %c1_94 = arith.constant 1 : index
    %c0_95 = arith.constant 0 : index
    %c0_96 = arith.constant 0 : index
    %113 = vector.load %arg16[%c1_94, %c0_95, %c0_96] : memref<5x256x64xf32, #tpu.memory_space<vmem>>, vector<1x256x64xf32>
    %114 = vector.shape_cast %113 : vector<1x256x64xf32> to vector<256x64xf32>
    %cst_97 = arith.constant dense<0.000000e+00> : vector<16x64xf32>
    %115 = tpu.matmul %112, %114, %cst_97 {dimension_numbers = #tpu.dot_dimension_numbers<[1], [0], [0], [1], [0, 0, 1, 1], [], []>} : vector<16x256xf32>, vector<256x64xf32>, vector<16x64xf32> -> vector<16x64xf32>
    %116 = arith.addf %111, %115 : vector<16x64xf32>
    %117 = vector.extract_strided_slice %107 {offsets = [32, 0], sizes = [16, 256], strides = [1, 1]} : vector<80x256xf32> to vector<16x256xf32>
    %c2_98 = arith.constant 2 : index
    %c0_99 = arith.constant 0 : index
    %c0_100 = arith.constant 0 : index
    %118 = vector.load %arg16[%c2_98, %c0_99, %c0_100] : memref<5x256x64xf32, #tpu.memory_space<vmem>>, vector<1x256x64xf32>
    %119 = vector.shape_cast %118 : vector<1x256x64xf32> to vector<256x64xf32>
    %cst_101 = arith.constant dense<0.000000e+00> : vector<16x64xf32>
    %120 = tpu.matmul %117, %119, %cst_101 {dimension_numbers = #tpu.dot_dimension_numbers<[1], [0], [0], [1], [0, 0, 1, 1], [], []>} : vector<16x256xf32>, vector<256x64xf32>, vector<16x64xf32> -> vector<16x64xf32>
    %121 = arith.addf %116, %120 : vector<16x64xf32>
    %122 = vector.extract_strided_slice %107 {offsets = [48, 0], sizes = [16, 256], strides = [1, 1]} : vector<80x256xf32> to vector<16x256xf32>
    %c3_102 = arith.constant 3 : index
    %c0_103 = arith.constant 0 : index
    %c0_104 = arith.constant 0 : index
    %123 = vector.load %arg16[%c3_102, %c0_103, %c0_104] : memref<5x256x64xf32, #tpu.memory_space<vmem>>, vector<1x256x64xf32>
    %124 = vector.shape_cast %123 : vector<1x256x64xf32> to vector<256x64xf32>
    %cst_105 = arith.constant dense<0.000000e+00> : vector<16x64xf32>
    %125 = tpu.matmul %122, %124, %cst_105 {dimension_numbers = #tpu.dot_dimension_numbers<[1], [0], [0], [1], [0, 0, 1, 1], [], []>} : vector<16x256xf32>, vector<256x64xf32>, vector<16x64xf32> -> vector<16x64xf32>
    %126 = arith.addf %121, %125 : vector<16x64xf32>
    %127 = vector.extract_strided_slice %107 {offsets = [64, 0], sizes = [16, 256], strides = [1, 1]} : vector<80x256xf32> to vector<16x256xf32>
    %c4_106 = arith.constant 4 : index
    %c0_107 = arith.constant 0 : index
    %c0_108 = arith.constant 0 : index
    %128 = vector.load %arg16[%c4_106, %c0_107, %c0_108] : memref<5x256x64xf32, #tpu.memory_space<vmem>>, vector<1x256x64xf32>
    %129 = vector.shape_cast %128 : vector<1x256x64xf32> to vector<256x64xf32>
    %cst_109 = arith.constant dense<0.000000e+00> : vector<16x64xf32>
    %130 = tpu.matmul %127, %129, %cst_109 {dimension_numbers = #tpu.dot_dimension_numbers<[1], [0], [0], [1], [0, 0, 1, 1], [], []>} : vector<16x256xf32>, vector<256x64xf32>, vector<16x64xf32> -> vector<16x64xf32>
    %131 = arith.addf %126, %130 : vector<16x64xf32>
    %c0_110 = arith.constant 0 : index
    %c0_111 = arith.constant 0 : index
    %132 = vector.load %arg17[%c0_110, %c0_111] : memref<1x64xf32, #tpu.memory_space<vmem>>, vector<1x64xf32>
    %133 = vector.broadcast %132 : vector<1x64xf32> to vector<16x64xf32>
    %134 = arith.addf %131, %133 : vector<16x64xf32>
    %c0_112 = arith.constant 0 : index
    %c0_113 = arith.constant 0 : index
    %c0_114 = arith.constant 0 : index
    %135 = vector.load %arg18[%c0_112, %c0_113, %c0_114] : memref<1x16x64xf32, #tpu.memory_space<vmem>>, vector<1x16x64xf32>
    %136 = vector.shape_cast %135 : vector<1x16x64xf32> to vector<16x64xf32>
    %137 = vector.shape_cast %134 : vector<16x64xf32> to vector<1x16x64xf32>
    tpu.vector_store %arg18[%c0_112, %c0_113, %c0_114], %137 {strides = array<i32>} : memref<1x16x64xf32, #tpu.memory_space<vmem>>, vector<1x16x64xf32>,
    return
  }
  func.func @transform_0(%arg0: i32) -> (i32, i32, i32) {
    %c0_i32 = arith.constant 0 : i32
    %c0_i32_0 = arith.constant 0 : i32
    %c0_i32_1 = arith.constant 0 : i32
    return %arg0, %c0_i32, %c0_i32_0 : i32, i32, i32
  }
  func.func @transform_1(%arg0: i32) -> (i32, i32) {
    %c0_i32 = arith.constant 0 : i32
    %c0_i32_0 = arith.constant 0 : i32
    %c0_i32_1 = arith.constant 0 : i32
    return %c0_i32, %c0_i32_0 : i32, i32
  }
  func.func @transform_2(%arg0: i32) -> (i32, i32, i32) {
    %c0_i32 = arith.constant 0 : i32
    %c0_i32_0 = arith.constant 0 : i32
    %c0_i32_1 = arith.constant 0 : i32
    %c0_i32_2 = arith.constant 0 : i32
    return %c0_i32, %c0_i32_0, %c0_i32_1 : i32, i32, i32
  }
  func.func @transform_3(%arg0: i32) -> (i32, i32) {
    %c0_i32 = arith.constant 0 : i32
    %c0_i32_0 = arith.constant 0 : i32
    %c0_i32_1 = arith.constant 0 : i32
    return %c0_i32, %c0_i32_0 : i32, i32
  }
  func.func @transform_4(%arg0: i32) -> (i32, i32) {
    %c0_i32 = arith.constant 0 : i32
    %c0_i32_0 = arith.constant 0 : i32
    %c0_i32_1 = arith.constant 0 : i32
    return %c0_i32, %c0_i32_0 : i32, i32
  }
  func.func @transform_5(%arg0: i32) -> (i32, i32) {
    %c0_i32 = arith.constant 0 : i32
    %c0_i32_0 = arith.constant 0 : i32
    %c0_i32_1 = arith.constant 0 : i32
    return %c0_i32, %c0_i32_0 : i32, i32
  }
  func.func @transform_6(%arg0: i32) -> (i32, i32) {
    %c0_i32 = arith.constant 0 : i32
    %c0_i32_0 = arith.constant 0 : i32
    %c0_i32_1 = arith.constant 0 : i32
    return %c0_i32, %c0_i32_0 : i32, i32
  }
  func.func @transform_7(%arg0: i32) -> (i32, i32) {
    %c0_i32 = arith.constant 0 : i32
    %c0_i32_0 = arith.constant 0 : i32
    %c0_i32_1 = arith.constant 0 : i32
    return %c0_i32, %c0_i32_0 : i32, i32
  }
  func.func @transform_8(%arg0: i32) -> (i32, i32) {
    %c0_i32 = arith.constant 0 : i32
    %c0_i32_0 = arith.constant 0 : i32
    %c0_i32_1 = arith.constant 0 : i32
    return %c0_i32, %c0_i32_0 : i32, i32
  }
  func.func @transform_9(%arg0: i32) -> (i32, i32, i32) {
    %c0_i32 = arith.constant 0 : i32
    %c0_i32_0 = arith.constant 0 : i32
    %c0_i32_1 = arith.constant 0 : i32
    %c0_i32_2 = arith.constant 0 : i32
    return %c0_i32, %c0_i32_0, %c0_i32_1 : i32, i32, i32
  }
  func.func @transform_10(%arg0: i32) -> (i32, i32) {
    %c0_i32 = arith.constant 0 : i32
    %c0_i32_0 = arith.constant 0 : i32
    %c0_i32_1 = arith.constant 0 : i32
    return %c0_i32, %c0_i32_0 : i32, i32
  }
  func.func @transform_11(%arg0: i32) -> (i32, i32) {
    %c0_i32 = arith.constant 0 : i32
    %c0_i32_0 = arith.constant 0 : i32
    %c0_i32_1 = arith.constant 0 : i32
    return %c0_i32, %c0_i32_0 : i32, i32
  }
  func.func @transform_12(%arg0: i32) -> (i32, i32, i32) {
    %c0_i32 = arith.constant 0 : i32
    %c0_i32_0 = arith.constant 0 : i32
    %c0_i32_1 = arith.constant 0 : i32
    %c0_i32_2 = arith.constant 0 : i32
    return %c0_i32, %c0_i32_0, %c0_i32_1 : i32, i32, i32
  }
  func.func @transform_13(%arg0: i32) -> (i32, i32) {
    %c0_i32 = arith.constant 0 : i32
    %c0_i32_0 = arith.constant 0 : i32
    %c0_i32_1 = arith.constant 0 : i32
    return %c0_i32, %c0_i32_0 : i32, i32
  }
  func.func @transform_14(%arg0: i32) -> (i32, i32) {
    %c0_i32 = arith.constant 0 : i32
    %c0_i32_0 = arith.constant 0 : i32
    %c0_i32_1 = arith.constant 0 : i32
    return %c0_i32, %c0_i32_0 : i32, i32
  }
  func.func @transform_15(%arg0: i32) -> (i32, i32, i32) {
    %c0_i32 = arith.constant 0 : i32
    %c0_i32_0 = arith.constant 0 : i32
    %c0_i32_1 = arith.constant 0 : i32
    %c0_i32_2 = arith.constant 0 : i32
    return %c0_i32, %c0_i32_0, %c0_i32_1 : i32, i32, i32
  }
  func.func @transform_16(%arg0: i32) -> (i32, i32) {
    %c0_i32 = arith.constant 0 : i32
    %c0_i32_0 = arith.constant 0 : i32
    %c0_i32_1 = arith.constant 0 : i32
    return %c0_i32, %c0_i32_0 : i32, i32
  }
  func.func @transform_17(%arg0: i32) -> (i32, i32, i32) {
    %c0_i32 = arith.constant 0 : i32
    %c0_i32_0 = arith.constant 0 : i32
    %c0_i32_1 = arith.constant 0 : i32
    return %arg0, %c0_i32, %c0_i32_0 : i32, i32, i32
  }
}

</mosaic_0001>

<llo_original>
// kernel: net2_forward.1
$region0: #{net2_forward.1}
  #allocation0 [shape = 'u32[]', space=smem, size = 0x4, offset = 0x4, fixed_abs, tag = 'smem constant byte address 0x4 - core index']
  #allocation1 [shape = 'u32[144,128]{1,0:T(1,128)}', space=vmem, size = 0x12000, scoped, tag = 'internal scratch']
  %s0 = inlined_call_operand.vmem [shape: f32[2,16,16], index: 0, kind: input, shape index: {}]
  %s1 = inlined_call_operand.vmem [shape: f32[80,16], index: 1, kind: input, shape index: {}]
  %s2 = inlined_call_operand.vmem [shape: f32[5,16,128], index: 2, kind: input, shape index: {}]
  %s3 = inlined_call_operand.vmem [shape: f32[1,128], index: 3, kind: input, shape index: {}]
  %s4 = inlined_call_operand.vmem [shape: f32[8,16], index: 4, kind: input, shape index: {}]
  %s5 = inlined_call_operand.vmem [shape: f32[8,16], index: 5, kind: input, shape index: {}]
  %s6 = inlined_call_operand.vmem [shape: f32[128,64], index: 6, kind: input, shape index: {}]
  %s7 = inlined_call_operand.vmem [shape: f32[128,64], index: 7, kind: input, shape index: {}]
  %s8 = inlined_call_operand.vmem [shape: f32[40,8], index: 8, kind: input, shape index: {}]
  %s9 = inlined_call_operand.vmem [shape: f32[5,64,128], index: 9, kind: input, shape index: {}]
  %s10 = inlined_call_operand.vmem [shape: f32[1,128], index: 10, kind: input, shape index: {}]
  %s11 = inlined_call_operand.vmem [shape: f32[80,8], index: 11, kind: input, shape index: {}]
  %s12 = inlined_call_operand.vmem [shape: f32[5,128,128], index: 12, kind: input, shape index: {}]
  %s13 = inlined_call_operand.vmem [shape: f32[1,128], index: 13, kind: input, shape index: {}]
  %s14 = inlined_call_operand.vmem [shape: f32[80,16], index: 14, kind: input, shape index: {}]
  %s15 = inlined_call_operand.vmem [shape: f32[5,256,64], index: 15, kind: input, shape index: {}]
  %s16 = inlined_call_operand.vmem [shape: f32[1,64], index: 16, kind: input, shape index: {}]
  %s17 = inlined_call_operand.vmem [shape: f32[2,16,64], index: 17, kind: output, shape index: {}]
  %s18 = sld [smem:[#allocation0]]
  $region101: #{net2_forward.1} parent=0
    _
  %s20 = ssub.s32 1, %s18
  %s21 = scalar_select 0, %s20, %s18
  loop: start=0, step=1, limit=4
  $region2: #{net2_forward.1} parent=0 // loop_pre_header
    _
  $region3: #{net2_forward.1} parent=0 // loop_header
    %s23 = sphi 0, %s27
    %p24 = scmp.ge.s32.totalorder %s23, 4
    %s33 = sphi 0, %s35
    %s36 = sphi 0, %s33
    %s37 = sphi 0, %s36
    %s53 = sphi 0, %s37
    %s57 = sphi 0, %s57
    %s59 = sphi 0, %s57
    %s60 = sphi 0, %s59
    %s74 = sphi 0, %s60
    %s78 = sphi 0, %s78
    %s80 = sphi 0, %s78
    %s81 = sphi 0, %s80
    %s95 = sphi 0, %s81
    %s99 = sphi 0, %s99
    %s101 = sphi 0, %s99
    %s102 = sphi 0, %s101
    %s116 = sphi 0, %s102
    %s120 = sphi 0, %s120
    %s122 = sphi 0, %s120
    %s123 = sphi 0, %s122
    %s137 = sphi 0, %s123
    %s141 = sphi 0, %s141
    %s143 = sphi 0, %s141
    %s144 = sphi 0, %s143
    %s158 = sphi 0, %s144
    %s162 = sphi 0, %s162
    %s164 = sphi 0, %s162
    %s165 = sphi 0, %s164
    %s179 = sphi 0, %s165
    %s183 = sphi 0, %s183
    %s185 = sphi 0, %s183
    %s186 = sphi 0, %s185
    %s200 = sphi 0, %s186
    %s204 = sphi 0, %s204
    %s206 = sphi 0, %s204
    %s207 = sphi 0, %s206
    %s221 = sphi 0, %s207
    %s225 = sphi 0, %s225
    %s227 = sphi 0, %s225
    %s228 = sphi 0, %s227
    %s242 = sphi 0, %s228
    %s246 = sphi 0, %s246
    %s248 = sphi 0, %s246
    %s249 = sphi 0, %s248
    %s263 = sphi 0, %s249
    %s267 = sphi 0, %s267
    %s269 = sphi 0, %s267
    %s270 = sphi 0, %s269
    %s284 = sphi 0, %s270
    %s288 = sphi 0, %s288
    %s290 = sphi 0, %s288
    %s291 = sphi 0, %s290
    %s305 = sphi 0, %s291
    %s309 = sphi 0, %s309
    %s311 = sphi 0, %s309
    %s312 = sphi 0, %s311
    %s326 = sphi 0, %s312
    %s330 = sphi 0, %s330
    %s332 = sphi 0, %s330
    %s333 = sphi 0, %s332
    %s347 = sphi 0, %s333
    %s351 = sphi 0, %s351
    %s353 = sphi 0, %s351
    %s354 = sphi 0, %s353
    %s368 = sphi 0, %s354
    %s372 = sphi 0, %s372
    %s374 = sphi 0, %s372
    %s375 = sphi 0, %s374
    %s389 = sphi 0, %s375
    %s395 = sphi 0, %s397
    %s398 = sphi 0, %s395
    %s399 = sphi 0, %s398
    %s415 = sphi 0, %s399
  $region4: #{net2_forward.1} parent=0 // loop_header_branch
    %26 = sbr.rel (%p24) target = $region8
  $region5: #{net2_forward.1} parent=0 // loop_body
    %s28 = ssub.s32 %s23, 1
    %s29 = ssub.s32 %s23, 2
    %s30 = sadd.s32 %s23, 1
    %s31 = ssub.s32 %s23, %s30
    %p32 = scmp.eq.s32.totalorder %s31, 0
    %s34 = sadd.s32 %s33, 1
    %s35 = scalar_select %p32, %s33, %s34
    %p38 = pneg %p32
    %p39 = scmp.eq.s32.totalorder %s23, 1
    %p40 = por %p38, %p39
    %p41 = scmp.ne.s32.totalorder %s33, %s36
    %p42 = scmp.eq.s32.totalorder %s23, 0
    %p43 = por %p41, %p42
    %p44 = scmp.ne.s32.totalorder %s33, %s36
    %p45 = scmp.eq.s32.totalorder %s28, 1
    %p46 = por %p44, %p45
    %p47 = scmp.ne.s32.totalorder %s36, %s37
    %p48 = scmp.eq.s32.totalorder %s28, 0
    %p49 = por %p47, %p48
    %p50 = scmp.ne.s32.totalorder %s36, %s37
    %p51 = scmp.eq.s32.totalorder %s29, 1
    %p52 = por %p50, %p51
    %p54 = scmp.ne.s32.totalorder %s37, %s53
    %p55 = scmp.eq.s32.totalorder %s29, 0
    %p56 = por %p54, %p55
    %s58 = sadd.s32 %s57, 1
    %p61 = scmp.eq.s32.totalorder %s23, 1
    %p62 = scmp.ne.s32.totalorder %s57, %s59
    %p63 = scmp.eq.s32.totalorder %s23, 0
    %p64 = por %p62, %p63
    %p65 = scmp.ne.s32.totalorder %s57, %s59
    %p66 = scmp.eq.s32.totalorder %s28, 1
    %p67 = por %p65, %p66
    %p68 = scmp.ne.s32.totalorder %s59, %s60
    %p69 = scmp.eq.s32.totalorder %s28, 0
    %p70 = por %p68, %p69
    %p71 = scmp.ne.s32.totalorder %s59, %s60
    %p72 = scmp.eq.s32.totalorder %s29, 1
    %p73 = por %p71, %p72
    %p75 = scmp.ne.s32.totalorder %s60, %s74
    %p76 = scmp.eq.s32.totalorder %s29, 0
    %p77 = por %p75, %p76
    %s79 = sadd.s32 %s78, 1
    %p82 = scmp.eq.s32.totalorder %s23, 1
    %p83 = scmp.ne.s32.totalorder %s78, %s80
    %p84 = scmp.eq.s32.totalorder %s23, 0
    %p85 = por %p83, %p84
    %p86 = scmp.ne.s32.totalorder %s78, %s80
    %p87 = scmp.eq.s32.totalorder %s28, 1
    %p88 = por %p86, %p87
    %p89 = scmp.ne.s32.totalorder %s80, %s81
    %p90 = scmp.eq.s32.totalorder %s28, 0
    %p91 = por %p89, %p90
    %p92 = scmp.ne.s32.totalorder %s80, %s81
    %p93 = scmp.eq.s32.totalorder %s29, 1
    %p94 = por %p92, %p93
    %p96 = scmp.ne.s32.totalorder %s81, %s95
    %p97 = scmp.eq.s32.totalorder %s29, 0
    %p98 = por %p96, %p97
    %s100 = sadd.s32 %s99, 1
    %p103 = scmp.eq.s32.totalorder %s23, 1
    %p104 = scmp.ne.s32.totalorder %s99, %s101
    %p105 = scmp.eq.s32.totalorder %s23, 0
    %p106 = por %p104, %p105
    %p107 = scmp.ne.s32.totalorder %s99, %s101
    %p108 = scmp.eq.s32.totalorder %s28, 1
    %p109 = por %p107, %p108
    %p110 = scmp.ne.s32.totalorder %s101, %s102
    %p111 = scmp.eq.s32.totalorder %s28, 0
    %p112 = por %p110, %p111
    %p113 = scmp.ne.s32.totalorder %s101, %s102
    %p114 = scmp.eq.s32.totalorder %s29, 1
    %p115 = por %p113, %p114
    %p117 = scmp.ne.s32.totalorder %s102, %s116
    %p118 = scmp.eq.s32.totalorder %s29, 0
    %p119 = por %p117, %p118
    %s121 = sadd.s32 %s120, 1
    %p124 = scmp.eq.s32.totalorder %s23, 1
    %p125 = scmp.ne.s32.totalorder %s120, %s122
    %p126 = scmp.eq.s32.totalorder %s23, 0
    %p127 = por %p125, %p126
    %p128 = scmp.ne.s32.totalorder %s120, %s122
    %p129 = scmp.eq.s32.totalorder %s28, 1
    %p130 = por %p128, %p129
    %p131 = scmp.ne.s32.totalorder %s122, %s123
    %p132 = scmp.eq.s32.totalorder %s28, 0
    %p133 = por %p131, %p132
    %p134 = scmp.ne.s32.totalorder %s122, %s123
    %p135 = scmp.eq.s32.totalorder %s29, 1
    %p136 = por %p134, %p135
    %p138 = scmp.ne.s32.totalorder %s123, %s137
    %p139 = scmp.eq.s32.totalorder %s29, 0
    %p140 = por %p138, %p139
    %s142 = sadd.s32 %s141, 1
    %p145 = scmp.eq.s32.totalorder %s23, 1
    %p146 = scmp.ne.s32.totalorder %s141, %s143
    %p147 = scmp.eq.s32.totalorder %s23, 0
    %p148 = por %p146, %p147
    %p149 = scmp.ne.s32.totalorder %s141, %s143
    %p150 = scmp.eq.s32.totalorder %s28, 1
    %p151 = por %p149, %p150
    %p152 = scmp.ne.s32.totalorder %s143, %s144
    %p153 = scmp.eq.s32.totalorder %s28, 0
    %p154 = por %p152, %p153
    %p155 = scmp.ne.s32.totalorder %s143, %s144
    %p156 = scmp.eq.s32.totalorder %s29, 1
    %p157 = por %p155, %p156
    %p159 = scmp.ne.s32.totalorder %s144, %s158
    %p160 = scmp.eq.s32.totalorder %s29, 0
    %p161 = por %p159, %p160
    %s163 = sadd.s32 %s162, 1
    %p166 = scmp.eq.s32.totalorder %s23, 1
    %p167 = scmp.ne.s32.totalorder %s162, %s164
    %p168 = scmp.eq.s32.totalorder %s23, 0
    %p169 = por %p167, %p168
    %p170 = scmp.ne.s32.totalorder %s162, %s164
    %p171 = scmp.eq.s32.totalorder %s28, 1
    %p172 = por %p170, %p171
    %p173 = scmp.ne.s32.totalorder %s164, %s165
    %p174 = scmp.eq.s32.totalorder %s28, 0
    %p175 = por %p173, %p174
    %p176 = scmp.ne.s32.totalorder %s164, %s165
    %p177 = scmp.eq.s32.totalorder %s29, 1
    %p178 = por %p176, %p177
    %p180 = scmp.ne.s32.totalorder %s165, %s179
    %p181 = scmp.eq.s32.totalorder %s29, 0
    %p182 = por %p180, %p181
    %s184 = sadd.s32 %s183, 1
    %p187 = scmp.eq.s32.totalorder %s23, 1
    %p188 = scmp.ne.s32.totalorder %s183, %s185
    %p189 = scmp.eq.s32.totalorder %s23, 0
    %p190 = por %p188, %p189
    %p191 = scmp.ne.s32.totalorder %s183, %s185
    %p192 = scmp.eq.s32.totalorder %s28, 1
    %p193 = por %p191, %p192
    %p194 = scmp.ne.s32.totalorder %s185, %s186
    %p195 = scmp.eq.s32.totalorder %s28, 0
    %p196 = por %p194, %p195
    %p197 = scmp.ne.s32.totalorder %s185, %s186
    %p198 = scmp.eq.s32.totalorder %s29, 1
    %p199 = por %p197, %p198
    %p201 = scmp.ne.s32.totalorder %s186, %s200
    %p202 = scmp.eq.s32.totalorder %s29, 0
    %p203 = por %p201, %p202
    %s205 = sadd.s32 %s204, 1
    %p208 = scmp.eq.s32.totalorder %s23, 1
    %p209 = scmp.ne.s32.totalorder %s204, %s206
    %p210 = scmp.eq.s32.totalorder %s23, 0
    %p211 = por %p209, %p210
    %p212 = scmp.ne.s32.totalorder %s204, %s206
    %p213 = scmp.eq.s32.totalorder %s28, 1
    %p214 = por %p212, %p213
    %p215 = scmp.ne.s32.totalorder %s206, %s207
    %p216 = scmp.eq.s32.totalorder %s28, 0
    %p217 = por %p215, %p216
    %p218 = scmp.ne.s32.totalorder %s206, %s207
    %p219 = scmp.eq.s32.totalorder %s29, 1
    %p220 = por %p218, %p219
    %p222 = scmp.ne.s32.totalorder %s207, %s221
    %p223 = scmp.eq.s32.totalorder %s29, 0
    %p224 = por %p222, %p223
    %s226 = sadd.s32 %s225, 1
    %p229 = scmp.eq.s32.totalorder %s23, 1
    %p230 = scmp.ne.s32.totalorder %s225, %s227
    %p231 = scmp.eq.s32.totalorder %s23, 0
    %p232 = por %p230, %p231
    %p233 = scmp.ne.s32.totalorder %s225, %s227
    %p234 = scmp.eq.s32.totalorder %s28, 1
    %p235 = por %p233, %p234
    %p236 = scmp.ne.s32.totalorder %s227, %s228
    %p237 = scmp.eq.s32.totalorder %s28, 0
    %p238 = por %p236, %p237
    %p239 = scmp.ne.s32.totalorder %s227, %s228
    %p240 = scmp.eq.s32.totalorder %s29, 1
    %p241 = por %p239, %p240
    %p243 = scmp.ne.s32.totalorder %s228, %s242
    %p244 = scmp.eq.s32.totalorder %s29, 0
    %p245 = por %p243, %p244
    %s247 = sadd.s32 %s246, 1
    %p250 = scmp.eq.s32.totalorder %s23, 1
    %p251 = scmp.ne.s32.totalorder %s246, %s248
    %p252 = scmp.eq.s32.totalorder %s23, 0
    %p253 = por %p251, %p252
    %p254 = scmp.ne.s32.totalorder %s246, %s248
    %p255 = scmp.eq.s32.totalorder %s28, 1
    %p256 = por %p254, %p255
    %p257 = scmp.ne.s32.totalorder %s248, %s249
    %p258 = scmp.eq.s32.totalorder %s28, 0
    %p259 = por %p257, %p258
    %p260 = scmp.ne.s32.totalorder %s248, %s249
    %p261 = scmp.eq.s32.totalorder %s29, 1
    %p262 = por %p260, %p261
    %p264 = scmp.ne.s32.totalorder %s249, %s263
    %p265 = scmp.eq.s32.totalorder %s29, 0
    %p266 = por %p264, %p265
    %s268 = sadd.s32 %s267, 1
    %p271 = scmp.eq.s32.totalorder %s23, 1
    %p272 = scmp.ne.s32.totalorder %s267, %s269
    %p273 = scmp.eq.s32.totalorder %s23, 0
    %p274 = por %p272, %p273
    %p275 = scmp.ne.s32.totalorder %s267, %s269
    %p276 = scmp.eq.s32.totalorder %s28, 1
    %p277 = por %p275, %p276
    %p278 = scmp.ne.s32.totalorder %s269, %s270
    %p279 = scmp.eq.s32.totalorder %s28, 0
    %p280 = por %p278, %p279
    %p281 = scmp.ne.s32.totalorder %s269, %s270
    %p282 = scmp.eq.s32.totalorder %s29, 1
    %p283 = por %p281, %p282
    %p285 = scmp.ne.s32.totalorder %s270, %s284
    %p286 = scmp.eq.s32.totalorder %s29, 0
    %p287 = por %p285, %p286
    %s289 = sadd.s32 %s288, 1
    %p292 = scmp.eq.s32.totalorder %s23, 1
    %p293 = scmp.ne.s32.totalorder %s288, %s290
    %p294 = scmp.eq.s32.totalorder %s23, 0
    %p295 = por %p293, %p294
    %p296 = scmp.ne.s32.totalorder %s288, %s290
    %p297 = scmp.eq.s32.totalorder %s28, 1
    %p298 = por %p296, %p297
    %p299 = scmp.ne.s32.totalorder %s290, %s291
    %p300 = scmp.eq.s32.totalorder %s28, 0
    %p301 = por %p299, %p300
    %p302 = scmp.ne.s32.totalorder %s290, %s291
    %p303 = scmp.eq.s32.totalorder %s29, 1
    %p304 = por %p302, %p303
    %p306 = scmp.ne.s32.totalorder %s291, %s305
    %p307 = scmp.eq.s32.totalorder %s29, 0
    %p308 = por %p306, %p307
    %s310 = sadd.s32 %s309, 1
    %p313 = scmp.eq.s32.totalorder %s23, 1
    %p314 = scmp.ne.s32.totalorder %s309, %s311
    %p315 = scmp.eq.s32.totalorder %s23, 0
    %p316 = por %p314, %p315
    %p317 = scmp.ne.s32.totalorder %s309, %s311
    %p318 = scmp.eq.s32.totalorder %s28, 1
    %p319 = por %p317, %p318
    %p320 = scmp.ne.s32.totalorder %s311, %s312
    %p321 = scmp.eq.s32.totalorder %s28, 0
    %p322 = por %p320, %p321
    %p323 = scmp.ne.s32.totalorder %s311, %s312
    %p324 = scmp.eq.s32.totalorder %s29, 1
    %p325 = por %p323, %p324
    %p327 = scmp.ne.s32.totalorder %s312, %s326
    %p328 = scmp.eq.s32.totalorder %s29, 0
    %p329 = por %p327, %p328
    %s331 = sadd.s32 %s330, 1
    %p334 = scmp.eq.s32.totalorder %s23, 1
    %p335 = scmp.ne.s32.totalorder %s330, %s332
    %p336 = scmp.eq.s32.totalorder %s23, 0
    %p337 = por %p335, %p336
    %p338 = scmp.ne.s32.totalorder %s330, %s332
    %p339 = scmp.eq.s32.totalorder %s28, 1
    %p340 = por %p338, %p339
    %p341 = scmp.ne.s32.totalorder %s332, %s333
    %p342 = scmp.eq.s32.totalorder %s28, 0
    %p343 = por %p341, %p342
    %p344 = scmp.ne.s32.totalorder %s332, %s333
    %p345 = scmp.eq.s32.totalorder %s29, 1
    %p346 = por %p344, %p345
    %p348 = scmp.ne.s32.totalorder %s333, %s347
    %p349 = scmp.eq.s32.totalorder %s29, 0
    %p350 = por %p348, %p349
    %s352 = sadd.s32 %s351, 1
    %p355 = scmp.eq.s32.totalorder %s23, 1
    %p356 = scmp.ne.s32.totalorder %s351, %s353
    %p357 = scmp.eq.s32.totalorder %s23, 0
    %p358 = por %p356, %p357
    %p359 = scmp.ne.s32.totalorder %s351, %s353
    %p360 = scmp.eq.s32.totalorder %s28, 1
    %p361 = por %p359, %p360
    %p362 = scmp.ne.s32.totalorder %s353, %s354
    %p363 = scmp.eq.s32.totalorder %s28, 0
    %p364 = por %p362, %p363
    %p365 = scmp.ne.s32.totalorder %s353, %s354
    %p366 = scmp.eq.s32.totalorder %s29, 1
    %p367 = por %p365, %p366
    %p369 = scmp.ne.s32.totalorder %s354, %s368
    %p370 = scmp.eq.s32.totalorder %s29, 0
    %p371 = por %p369, %p370
    %s373 = sadd.s32 %s372, 1
    %p376 = scmp.eq.s32.totalorder %s23, 1
    %p377 = scmp.ne.s32.totalorder %s372, %s374
    %p378 = scmp.eq.s32.totalorder %s23, 0
    %p379 = por %p377, %p378
    %p380 = scmp.ne.s32.totalorder %s372, %s374
    %p381 = scmp.eq.s32.totalorder %s28, 1
    %p382 = por %p380, %p381
    %p383 = scmp.ne.s32.totalorder %s374, %s375
    %p384 = scmp.eq.s32.totalorder %s28, 0
    %p385 = por %p383, %p384
    %p386 = scmp.ne.s32.totalorder %s374, %s375
    %p387 = scmp.eq.s32.totalorder %s29, 1
    %p388 = por %p386, %p387
    %p390 = scmp.ne.s32.totalorder %s375, %s389
    %p391 = scmp.eq.s32.totalorder %s29, 0
    %p392 = por %p390, %p391
    %s393 = ssub.s32 %s23, %s30
    %p394 = scmp.eq.s32.totalorder %s393, 0
    %s396 = sadd.s32 %s395, 1
    %s397 = scalar_select %p394, %s395, %s396
    %p400 = pneg %p394
    %p401 = scmp.eq.s32.totalorder %s23, 1
    %p402 = por %p400, %p401
    %p403 = scmp.ne.s32.totalorder %s395, %s398
    %p404 = scmp.eq.s32.totalorder %s23, 0
    %p405 = por %p403, %p404
    %p406 = scmp.ne.s32.totalorder %s395, %s398
    %p407 = scmp.eq.s32.totalorder %s28, 1
    %p408 = por %p406, %p407
    %p409 = scmp.ne.s32.totalorder %s398, %s399
    %p410 = scmp.eq.s32.totalorder %s28, 0
    %p411 = por %p409, %p410
    %p412 = scmp.ne.s32.totalorder %s398, %s399
    %p413 = scmp.eq.s32.totalorder %s29, 1
    %p414 = por %p412, %p413
    %p416 = scmp.ne.s32.totalorder %s399, %s415
    %p417 = scmp.eq.s32.totalorder %s29, 0
    %p418 = por %p416, %p417
    %p419 = scmp.le.s32.totalorder 1, %s23
    %p420 = scmp.lt.s32.totalorder %s23, 3
    %p421 = pnand %p419, %p420
    %p422 = pneg %p421
    // Predicated region
    $region9: #{net2_forward.1} parent=5 // pred_check
      _
    $region10: #{net2_forward.1} parent=5 // pred_check_branch
      %424 = sbr.rel (%p421) target = $region12
    $region11: #{net2_forward.1} parent=5 // pred_region
      %s425 = ssub.s32 %s23, 1
      // Predicated region
      $region13: #{net2_forward.1} parent=11 // pred_check
        %p426 = pneg %p70
      $region14: #{net2_forward.1} parent=11 // pred_check_branch
        %428 = sbr.rel (%p426) target = $region16
      $region15: #{net2_forward.1} parent=11 // pred_region
        _
      $region16: #{net2_forward.1} parent=11 // pred_fallthru
        _
      // Predicated region
      $region17: #{net2_forward.1} parent=11 // pred_check
        %p429 = pneg %p91
      $region18: #{net2_forward.1} parent=11 // pred_check_branch
        %431 = sbr.rel (%p429) target = $region20
      $region19: #{net2_forward.1} parent=11 // pred_region
        _
      $region20: #{net2_forward.1} parent=11 // pred_fallthru
        _
      // Predicated region
      $region21: #{net2_forward.1} parent=11 // pred_check
        %p432 = pneg %p112
      $region22: #{net2_forward.1} parent=11 // pred_check_branch
        %434 = sbr.rel (%p432) target = $region24
      $region23: #{net2_forward.1} parent=11 // pred_region
        _
      $region24: #{net2_forward.1} parent=11 // pred_fallthru
        _
      // Predicated region
      $region25: #{net2_forward.1} parent=11 // pred_check
        %p435 = pneg %p133
      $region26: #{net2_forward.1} parent=11 // pred_check_branch
        %437 = sbr.rel (%p435) target = $region28
      $region27: #{net2_forward.1} parent=11 // pred_region
        _
      $region28: #{net2_forward.1} parent=11 // pred_fallthru
        _
      // Predicated region
      $region29: #{net2_forward.1} parent=11 // pred_check
        %p438 = pneg %p154
      $region30: #{net2_forward.1} parent=11 // pred_check_branch
        %440 = sbr.rel (%p438) target = $region32
      $region31: #{net2_forward.1} parent=11 // pred_region
        _
      $region32: #{net2_forward.1} parent=11 // pred_fallthru
        _
      // Predicated region
      $region33: #{net2_forward.1} parent=11 // pred_check
        %p441 = pneg %p175
      $region34: #{net2_forward.1} parent=11 // pred_check_branch
        %443 = sbr.rel (%p441) target = $region36
      $region35: #{net2_forward.1} parent=11 // pred_region
        _
      $region36: #{net2_forward.1} parent=11 // pred_fallthru
        _
      // Predicated region
      $region37: #{net2_forward.1} parent=11 // pred_check
        %p444 = pneg %p196
      $region38: #{net2_forward.1} parent=11 // pred_check_branch
        %446 = sbr.rel (%p444) target = $region40
      $region39: #{net2_forward.1} parent=11 // pred_region
        _
      $region40: #{net2_forward.1} parent=11 // pred_fallthru
        _
      // Predicated region
      $region41: #{net2_forward.1} parent=11 // pred_check
        %p447 = pneg %p217
      $region42: #{net2_forward.1} parent=11 // pred_check_branch
        %449 = sbr.rel (%p447) target = $region44
      $region43: #{net2_forward.1} parent=11 // pred_region
        _
      $region44: #{net2_forward.1} parent=11 // pred_fallthru
        _
      // Predicated region
      $region45: #{net2_forward.1} parent=11 // pred_check
        %p450 = pneg %p238
      $region46: #{net2_forward.1} parent=11 // pred_check_branch
        %452 = sbr.rel (%p450) target = $region48
      $region47: #{net2_forward.1} parent=11 // pred_region
        _
      $region48: #{net2_forward.1} parent=11 // pred_fallthru
        _
      // Predicated region
      $region49: #{net2_forward.1} parent=11 // pred_check
        %p453 = pneg %p259
      $region50: #{net2_forward.1} parent=11 // pred_check_branch
        %455 = sbr.rel (%p453) target = $region52
      $region51: #{net2_forward.1} parent=11 // pred_region
        _
      $region52: #{net2_forward.1} parent=11 // pred_fallthru
        _
      // Predicated region
      $region53: #{net2_forward.1} parent=11 // pred_check
        %p456 = pneg %p280
      $region54: #{net2_forward.1} parent=11 // pred_check_branch
        %458 = sbr.rel (%p456) target = $region56
      $region55: #{net2_forward.1} parent=11 // pred_region
        _
      $region56: #{net2_forward.1} parent=11 // pred_fallthru
        _
      // Predicated region
      $region57: #{net2_forward.1} parent=11 // pred_check
        %p459 = pneg %p301
      $region58: #{net2_forward.1} parent=11 // pred_check_branch
        %461 = sbr.rel (%p459) target = $region60
      $region59: #{net2_forward.1} parent=11 // pred_region
        _
      $region60: #{net2_forward.1} parent=11 // pred_fallthru
        _
      // Predicated region
      $region61: #{net2_forward.1} parent=11 // pred_check
        %p462 = pneg %p322
      $region62: #{net2_forward.1} parent=11 // pred_check_branch
        %464 = sbr.rel (%p462) target = $region64
      $region63: #{net2_forward.1} parent=11 // pred_region
        _
      $region64: #{net2_forward.1} parent=11 // pred_fallthru
        _
      // Predicated region
      $region65: #{net2_forward.1} parent=11 // pred_check
        %p465 = pneg %p343
      $region66: #{net2_forward.1} parent=11 // pred_check_branch
        %467 = sbr.rel (%p465) target = $region68
      $region67: #{net2_forward.1} parent=11 // pred_region
        _
      $region68: #{net2_forward.1} parent=11 // pred_fallthru
        _
      // Predicated region
      $region69: #{net2_forward.1} parent=11 // pred_check
        %p468 = pneg %p364
      $region70: #{net2_forward.1} parent=11 // pred_check_branch
        %470 = sbr.rel (%p468) target = $region72
      $region71: #{net2_forward.1} parent=11 // pred_region
        _
      $region72: #{net2_forward.1} parent=11 // pred_fallthru
        _
      // Predicated region
      $region73: #{net2_forward.1} parent=11 // pred_check
        %p471 = pneg %p385
      $region74: #{net2_forward.1} parent=11 // pred_check_branch
        %473 = sbr.rel (%p471) target = $region76
      $region75: #{net2_forward.1} parent=11 // pred_region
        _
      $region76: #{net2_forward.1} parent=11 // pred_fallthru
        _
    $region12: #{net2_forward.1} parent=5 // pred_fallthru
      _
    %p474 = scmp.lt.s32.totalorder %s23, 2
    // Predicated region
    $region77: #{net2_forward.1} parent=5 // pred_check
      %p475 = pneg %p474
    $region78: #{net2_forward.1} parent=5 // pred_check_branch
      %477 = sbr.rel (%p475) target = $region80
    $region79: #{net2_forward.1} parent=5 // pred_region
      // Predicated region
      $region81: #{net2_forward.1} parent=79 // pred_check
        %p478 = pneg %p43
      $region82: #{net2_forward.1} parent=79 // pred_check_branch
        %480 = sbr.rel (%p478) target = $region84
      $region83: #{net2_forward.1} parent=79 // pred_region
        %p481 = scmp.lt.s32.totalorder %s23, 1
        %s482 = scalar_select %p481, %s23, 1
        %s483 = smul.addr %s482, 2
        %s484 = smul.addr %s483, 8
        %s485 = scalar_lea.vmem %s0, %s484
      $region84: #{net2_forward.1} parent=79 // pred_fallthru
        _
    $region80: #{net2_forward.1} parent=5 // pred_fallthru
      _
    %p486 = scmp.le.s32.totalorder 1, %s23
    %p487 = scmp.lt.s32.totalorder %s23, 3
    %p488 = pnand %p486, %p487
    %p489 = pneg %p488
    // Predicated region
    $region85: #{net2_forward.1} parent=5 // pred_check
      _
    $region86: #{net2_forward.1} parent=5 // pred_check_branch
      %491 = sbr.rel (%p488) target = $region88
    $region87: #{net2_forward.1} parent=5 // pred_region
      %s492 = ssub.s32 %s23, 1
      %p493 = scmp.lt.s32.totalorder %s28, 1
      %s494 = scalar_select %p493, %s28, 1
      %s495 = smul.addr %s494, 2
      %s496 = smul.addr %s495, 8
      %s497 = scalar_lea.vmem %s0, %s496
      %p498 = pneg %p49
      %p499 = pneg %p46
      %p500 = pneg %p70
      %p501 = pneg %p67
      %p502 = pneg %p91
      %p503 = pneg %p88
      %p504 = pneg %p112
      %p505 = pneg %p109
      %p506 = pneg %p133
      %p507 = pneg %p130
      %p508 = pneg %p154
      %p509 = pneg %p151
      %p510 = pneg %p175
      %p511 = pneg %p172
      %p512 = pneg %p196
      %p513 = pneg %p193
      %p514 = pneg %p217
      %p515 = pneg %p214
      %p516 = pneg %p238
      %p517 = pneg %p235
      %p518 = pneg %p259
      %p519 = pneg %p256
      %p520 = pneg %p280
      %p521 = pneg %p277
      %p522 = pneg %p301
      %p523 = pneg %p298
      %p524 = pneg %p322
      %p525 = pneg %p319
      %p526 = pneg %p343
      %p527 = pneg %p340
      %p528 = pneg %p364
      %p529 = pneg %p361
      %p530 = pneg %p385
      %p531 = pneg %p382
      %p532 = pneg %p411
      %p533 = pneg %p408
      %p534 = scmp.lt.s32.totalorder %s28, 1
      %s535 = scalar_select %p534, %s28, 1
      %s536 = smul.addr %s535, 2
      %s537 = smul.addr %s536, 8
      %s538 = scalar_lea.vmem %s17, %s537
      %p539 = scmp.lt.s32.totalorder %s28, 1
      %s540 = scalar_select %p539, %s28, 1
      %s541 = smul.addr %s540, 2
      %s542 = smul.addr %s541, 8
      %s543 = scalar_lea.vmem %s0, %s542
      %p544 = scmp.lt.s32.totalorder %s28, 1
      %s545 = scalar_select %p544, %s28, 1
      %s546 = smul.addr %s545, 2
      %s547 = smul.addr %s546, 8
      %s548 = scalar_lea.vmem %s17, %s547
      %v549 = vld [vmem:[%s543] sm:$0xff]
      %v550 = vld [vmem:[%s543 + $0x8] sm:$0xff]
      %v551 = vld [vmem:[%s1] sm:$0xff]
      %v552 = vld [vmem:[%s1 + $0x8] sm:$0xff]
      %v553 = vld [vmem:[%s1 + $0x10] sm:$0xff]
      %v554 = vld [vmem:[%s1 + $0x18] sm:$0xff]
      %v555 = vld [vmem:[%s1 + $0x20] sm:$0xff]
      %v556 = vld [vmem:[%s1 + $0x28] sm:$0xff]
      %v557 = vld [vmem:[%s1 + $0x30] sm:$0xff]
      %v558 = vld [vmem:[%s1 + $0x38] sm:$0xff]
      %v559 = vld [vmem:[%s1 + $0x40] sm:$0xff]
      %v560 = vld [vmem:[%s1 + $0x48] sm:$0xff]
      %vm561 = vcmask 130048
      %v563 = vsel %vm561, %v551, 0
      %v566 = vsel %vm561, %v552, 0
      %v569 = vsel %vm561, %v553, 0
      %v572 = vsel %vm561, %v554, 0
      %v575 = vsel %vm561, %v555, 0
      %v578 = vsel %vm561, %v556, 0
      %v581 = vsel %vm561, %v557, 0
      %v584 = vsel %vm561, %v558, 0
      %v587 = vsel %vm561, %v559, 0
      %v590 = vsel %vm561, %v560, 0
      %592 = vmatprep.subr.mxu0 0.0
      %593 = vmatpush1.msra.mxu0 0.0
      %594 = vmatprep.subr.mxu0 0.0
      %595 = vmatpush1.msra.mxu0 0.0
      %596 = vmatprep.subr.mxu0 0.0
      %597 = vmatpush1.msra.mxu0 0.0
      %598 = vmatprep.subr.mxu0 0.0
      %599 = vmatpush1.msra.mxu0 0.0
      %600 = vmatprep.subr.mxu0 0.0
      %601 = vmatpush1.msra.mxu0 0.0
      %602 = vmatprep.subr.mxu0 0.0
      %603 = vmatpush1.msra.mxu0 0.0
      %604 = vmatprep.subr.mxu0 0.0
      %605 = vmatpush1.msra.mxu0 0.0
      %606 = vmatprep.subr.mxu0 0.0
      %607 = vmatpush1.msra.mxu0 0.0
      %608 = vmatprep.subr.mxu0 0.0
      %609 = vmatpush1.msra.mxu0 0.0
      %610 = vmatprep.subr.mxu0 0.0
      %611 = vmatpush1.msra.mxu0 0.0
      %612 = vmatprep.subr.mxu0 0.0
      %613 = vmatpush1.msra.mxu0 0.0
      %614 = vmatprep.subr.mxu0 0.0
      %615 = vmatpush1.msra.mxu0 0.0
      %616 = vmatprep.subr.mxu0 0.0
      %617 = vmatpush1.msra.mxu0 0.0
      %618 = vmatprep.subr.mxu0 0.0
      %619 = vmatpush1.msra.mxu0 0.0
      %620 = vmatprep.subr.mxu0 0.0
      %621 = vmatpush1.msra.mxu0 %v550
      %622 = vmatprep.subr.mxu0 0.0
      %623 = vmatpush1.msra.mxu0 %v549
      %624 = vmatprep.subr.mxu0 0.0
      %625 = vmatpush2.msra.mxu0 0.0
      %626 = vmatprep.subr.mxu0 0.0
      %627 = vmatpush2.msra.mxu0 0.0
      %628 = vmatprep.subr.mxu0 0.0
      %629 = vmatpush2.msra.mxu0 0.0
      %630 = vmatprep.subr.mxu0 0.0
      %631 = vmatpush2.msra.mxu0 0.0
      %632 = vmatprep.subr.mxu0 0.0
      %633 = vmatpush2.msra.mxu0 0.0
      %634 = vmatprep.subr.mxu0 0.0
      %635 = vmatpush2.msra.mxu0 0.0
      %636 = vmatprep.subr.mxu0 0.0
      %637 = vmatpush2.msra.mxu0 0.0
      %638 = vmatprep.subr.mxu0 0.0
      %639 = vmatpush2.msra.mxu0 0.0
      %640 = vmatprep.subr.mxu0 0.0
      %641 = vmatpush2.msra.mxu0 0.0
      %642 = vmatprep.subr.mxu0 0.0
      %643 = vmatpush2.msra.mxu0 0.0
      %644 = vmatprep.subr.mxu0 0.0
      %645 = vmatpush2.msra.mxu0 0.0
      %646 = vmatprep.subr.mxu0 0.0
      %647 = vmatpush2.msra.mxu0 0.0
      %648 = vmatprep.subr.mxu0 0.0
      %649 = vmatpush2.msra.mxu0 0.0
      %650 = vmatprep.subr.mxu0 0.0
      %651 = vmatpush2.msra.mxu0 0.0
      %652 = vmatprep.subr.mxu0 0.0
      %653 = vmatpush2.msra.mxu0 0.0
      %654 = vmatprep.subr.mxu0 0.0
      %655 = vmatpush2.msra.mxu0 0.0
      %656 = vmatprep.mubr.f32.mxu0 0.0
      %657 = vmatmul.mubr.f32.gmra.mxu0 %v563
      %v658 = vpop.f32.mrf.mxu0
      %v659 = vadd.f32 0.0, %v658
      %v660 = vpop.f32.mrf.mxu0
      %661 = vmatprep.mubr.f32.mxu0 0.0
      %662 = vmatmul.mubr.f32.gmra.mxu0 %v566
      %v663 = vpop.f32.mrf.mxu0
      %v664 = vadd.f32 0.0, %v663
      %v665 = vpop.f32.mrf.mxu0
      %666 = vmatprep.mubr.f32.mxu0 0.0
      %667 = vmatmul.mubr.f32.gmra.mxu0 %v569
      %v668 = vpop.f32.mrf.mxu0
      %v669 = vadd.f32 0.0, %v668
      %v670 = vpop.f32.mrf.mxu0
      %671 = vmatprep.mubr.f32.mxu0 0.0
      %672 = vmatmul.mubr.f32.gmra.mxu0 %v572
      %v673 = vpop.f32.mrf.mxu0
      %v674 = vadd.f32 0.0, %v673
      %v675 = vpop.f32.mrf.mxu0
      %676 = vmatprep.mubr.f32.mxu0 0.0
      %677 = vmatmul.mubr.f32.gmra.mxu0 %v575
      %v678 = vpop.f32.mrf.mxu0
      %v679 = vadd.f32 0.0, %v678
      %v680 = vpop.f32.mrf.mxu0
      %681 = vmatprep.mubr.f32.mxu0 0.0
      %682 = vmatmul.mubr.f32.gmra.mxu0 %v578
      %v683 = vpop.f32.mrf.mxu0
      %v684 = vadd.f32 0.0, %v683
      %v685 = vpop.f32.mrf.mxu0
      %686 = vmatprep.mubr.f32.mxu0 0.0
      %687 = vmatmul.mubr.f32.gmra.mxu0 %v581
      %v688 = vpop.f32.mrf.mxu0
      %v689 = vadd.f32 0.0, %v688
      %v690 = vpop.f32.mrf.mxu0
      %691 = vmatprep.mubr.f32.mxu0 0.0
      %692 = vmatmul.mubr.f32.gmra.mxu0 %v584
      %v693 = vpop.f32.mrf.mxu0
      %v694 = vadd.f32 0.0, %v693
      %v695 = vpop.f32.mrf.mxu0
      %696 = vmatprep.mubr.f32.mxu0 0.0
      %697 = vmatmul.mubr.f32.gmra.mxu0 %v587
      %v698 = vpop.f32.mrf.mxu0
      %v699 = vadd.f32 0.0, %v698
      %v700 = vpop.f32.mrf.mxu0
      %701 = vmatprep.mubr.f32.mxu0 0.0
      %702 = vmatmul.mubr.f32.gmra.mxu0 %v590
      %v703 = vpop.f32.mrf.mxu0
      %v704 = vadd.f32 0.0, %v703
      %v705 = vpop.f32.mrf.mxu0
      %706 = vdwg.mxu0
      %v707 = vld [vmem:[%s2] sm:$0xff]
      %v708 = vld [vmem:[%s2 + $0x8] sm:$0xff]
      %s709 = scalar_lea.vmem %s2, 16
      %v710 = vld [vmem:[%s709] sm:$0xff]
      %v711 = vld [vmem:[%s709 + $0x8] sm:$0xff]
      %v713 = vsel %vm561, %v669, 0
      %v716 = vsel %vm561, %v674, 0
      %718 = vmatprep.subr.mxu0 0.0
      %719 = vmatpush1.msra.mxu0 0.0
      %720 = vmatprep.subr.mxu0 0.0
      %721 = vmatpush1.msra.mxu0 0.0
      %722 = vmatprep.subr.mxu0 0.0
      %723 = vmatpush1.msra.mxu0 0.0
      %724 = vmatprep.subr.mxu0 0.0
      %725 = vmatpush1.msra.mxu0 0.0
      %726 = vmatprep.subr.mxu0 0.0
      %727 = vmatpush1.msra.mxu0 0.0
      %728 = vmatprep.subr.mxu0 0.0
      %729 = vmatpush1.msra.mxu0 0.0
      %730 = vmatprep.subr.mxu0 0.0
      %731 = vmatpush1.msra.mxu0 0.0
      %732 = vmatprep.subr.mxu0 0.0
      %733 = vmatpush1.msra.mxu0 0.0
      %734 = vmatprep.subr.mxu0 0.0
      %735 = vmatpush1.msra.mxu0 0.0
      %736 = vmatprep.subr.mxu0 0.0
      %737 = vmatpush1.msra.mxu0 0.0
      %738 = vmatprep.subr.mxu0 0.0
      %739 = vmatpush1.msra.mxu0 0.0
      %740 = vmatprep.subr.mxu0 0.0
      %741 = vmatpush1.msra.mxu0 0.0
      %742 = vmatprep.subr.mxu0 0.0
      %743 = vmatpush1.msra.mxu0 0.0
      %744 = vmatprep.subr.mxu0 0.0
      %745 = vmatpush1.msra.mxu0 0.0
      %746 = vmatprep.subr.mxu0 0.0
      %747 = vmatpush1.msra.mxu0 %v711
      %748 = vmatprep.subr.mxu0 0.0
      %749 = vmatpush1.msra.mxu0 %v710
      %750 = vmatprep.subr.mxu0 0.0
      %751 = vmatpush2.msra.mxu0 0.0
      %752 = vmatprep.subr.mxu0 0.0
      %753 = vmatpush2.msra.mxu0 0.0
      %754 = vmatprep.subr.mxu0 0.0
      %755 = vmatpush2.msra.mxu0 0.0
      %756 = vmatprep.subr.mxu0 0.0
      %757 = vmatpush2.msra.mxu0 0.0
      %758 = vmatprep.subr.mxu0 0.0
      %759 = vmatpush2.msra.mxu0 0.0
      %760 = vmatprep.subr.mxu0 0.0
      %761 = vmatpush2.msra.mxu0 0.0
      %762 = vmatprep.subr.mxu0 0.0
      %763 = vmatpush2.msra.mxu0 0.0
      %764 = vmatprep.subr.mxu0 0.0
      %765 = vmatpush2.msra.mxu0 0.0
      %766 = vmatprep.subr.mxu0 0.0
      %767 = vmatpush2.msra.mxu0 0.0
      %768 = vmatprep.subr.mxu0 0.0
      %769 = vmatpush2.msra.mxu0 0.0
      %770 = vmatprep.subr.mxu0 0.0
      %771 = vmatpush2.msra.mxu0 0.0
      %772 = vmatprep.subr.mxu0 0.0
      %773 = vmatpush2.msra.mxu0 0.0
      %774 = vmatprep.subr.mxu0 0.0
      %775 = vmatpush2.msra.mxu0 0.0
      %776 = vmatprep.subr.mxu0 0.0
      %777 = vmatpush2.msra.mxu0 0.0
      %778 = vmatprep.subr.mxu0 0.0
      %779 = vmatpush2.msra.mxu0 0.0
      %780 = vmatprep.subr.mxu0 0.0
      %781 = vmatpush2.msra.mxu0 0.0
      %782 = vmatprep.mubr.f32.mxu0 0.0
      %783 = vmatmul.mubr.f32.gmra.mxu0 %v713
      %v784 = vpop.f32.mrf.mxu0
      %v785 = vadd.f32 0.0, %v784
      %v786 = vpop.f32.mrf.mxu0
      %787 = vmatprep.mubr.f32.mxu0 0.0
      %788 = vmatmul.mubr.f32.gmra.mxu0 %v716
      %v789 = vpop.f32.mrf.mxu0
      %v790 = vadd.f32 0.0, %v789
      %v791 = vpop.f32.mrf.mxu0
      %792 = vdwg.mxu0
      %v794 = vsel %vm561, %v659, 0
      %v797 = vsel %vm561, %v664, 0
      %799 = vmatprep.subr.mxu0 0.0
      %800 = vmatpush1.msra.mxu0 0.0
      %801 = vmatprep.subr.mxu0 0.0
      %802 = vmatpush1.msra.mxu0 0.0
      %803 = vmatprep.subr.mxu0 0.0
      %804 = vmatpush1.msra.mxu0 0.0
      %805 = vmatprep.subr.mxu0 0.0
      %806 = vmatpush1.msra.mxu0 0.0
      %807 = vmatprep.subr.mxu0 0.0
      %808 = vmatpush1.msra.mxu0 0.0
      %809 = vmatprep.subr.mxu0 0.0
      %810 = vmatpush1.msra.mxu0 0.0
      %811 = vmatprep.subr.mxu0 0.0
      %812 = vmatpush1.msra.mxu0 0.0
      %813 = vmatprep.subr.mxu0 0.0
      %814 = vmatpush1.msra.mxu0 0.0
      %815 = vmatprep.subr.mxu0 0.0
      %816 = vmatpush1.msra.mxu0 0.0
      %817 = vmatprep.subr.mxu0 0.0
      %818 = vmatpush1.msra.mxu0 0.0
      %819 = vmatprep.subr.mxu0 0.0
      %820 = vmatpush1.msra.mxu0 0.0
      %821 = vmatprep.subr.mxu0 0.0
      %822 = vmatpush1.msra.mxu0 0.0
      %823 = vmatprep.subr.mxu0 0.0
      %824 = vmatpush1.msra.mxu0 0.0
      %825 = vmatprep.subr.mxu0 0.0
      %826 = vmatpush1.msra.mxu0 0.0
      %827 = vmatprep.subr.mxu0 0.0
      %828 = vmatpush1.msra.mxu0 %v708
      %829 = vmatprep.subr.mxu0 0.0
      %830 = vmatpush1.msra.mxu0 %v707
      %831 = vmatprep.subr.mxu0 0.0
      %832 = vmatpush2.msra.mxu0 0.0
      %833 = vmatprep.subr.mxu0 0.0
      %834 = vmatpush2.msra.mxu0 0.0
      %835 = vmatprep.subr.mxu0 0.0
      %836 = vmatpush2.msra.mxu0 0.0
      %837 = vmatprep.subr.mxu0 0.0
      %838 = vmatpush2.msra.mxu0 0.0
      %839 = vmatprep.subr.mxu0 0.0
      %840 = vmatpush2.msra.mxu0 0.0
      %841 = vmatprep.subr.mxu0 0.0
      %842 = vmatpush2.msra.mxu0 0.0
      %843 = vmatprep.subr.mxu0 0.0
      %844 = vmatpush2.msra.mxu0 0.0
      %845 = vmatprep.subr.mxu0 0.0
      %846 = vmatpush2.msra.mxu0 0.0
      %847 = vmatprep.subr.mxu0 0.0
      %848 = vmatpush2.msra.mxu0 0.0
      %849 = vmatprep.subr.mxu0 0.0
      %850 = vmatpush2.msra.mxu0 0.0
      %851 = vmatprep.subr.mxu0 0.0
      %852 = vmatpush2.msra.mxu0 0.0
      %853 = vmatprep.subr.mxu0 0.0
      %854 = vmatpush2.msra.mxu0 0.0
      %855 = vmatprep.subr.mxu0 0.0
      %856 = vmatpush2.msra.mxu0 0.0
      %857 = vmatprep.subr.mxu0 0.0
      %858 = vmatpush2.msra.mxu0 0.0
      %859 = vmatprep.subr.mxu0 0.0
      %860 = vmatpush2.msra.mxu0 0.0
      %861 = vmatprep.subr.mxu0 0.0
      %862 = vmatpush2.msra.mxu0 0.0
      %863 = vmatprep.mubr.f32.mxu0 0.0
      %864 = vmatmul.mubr.f32.gmra.mxu0 %v794
      %v865 = vpop.f32.mrf.mxu0
      %v866 = vadd.f32 %v785, %v865
      %v867 = vpop.f32.mrf.mxu0
      %868 = vmatprep.mubr.f32.mxu0 0.0
      %869 = vmatmul.mubr.f32.gmra.mxu0 %v797
      %v870 = vpop.f32.mrf.mxu0
      %v871 = vadd.f32 %v790, %v870
      %v872 = vpop.f32.mrf.mxu0
      %873 = vdwg.mxu0
      %s874 = scalar_lea.vmem %s2, 32
      %v875 = vld [vmem:[%s874] sm:$0xff]
      %v876 = vld [vmem:[%s874 + $0x8] sm:$0xff]
      %v878 = vsel %vm561, %v679, 0
      %v881 = vsel %vm561, %v684, 0
      %883 = vmatprep.subr.mxu0 0.0
      %884 = vmatpush1.msra.mxu0 0.0
      %885 = vmatprep.subr.mxu0 0.0
      %886 = vmatpush1.msra.mxu0 0.0
      %887 = vmatprep.subr.mxu0 0.0
      %888 = vmatpush1.msra.mxu0 0.0
      %889 = vmatprep.subr.mxu0 0.0
      %890 = vmatpush1.msra.mxu0 0.0
      %891 = vmatprep.subr.mxu0 0.0
      %892 = vmatpush1.msra.mxu0 0.0
      %893 = vmatprep.subr.mxu0 0.0
      %894 = vmatpush1.msra.mxu0 0.0
      %895 = vmatprep.subr.mxu0 0.0
      %896 = vmatpush1.msra.mxu0 0.0
      %897 = vmatprep.subr.mxu0 0.0
      %898 = vmatpush1.msra.mxu0 0.0
      %899 = vmatprep.subr.mxu0 0.0
      %900 = vmatpush1.msra.mxu0 0.0
      %901 = vmatprep.subr.mxu0 0.0
      %902 = vmatpush1.msra.mxu0 0.0
      %903 = vmatprep.subr.mxu0 0.0
      %904 = vmatpush1.msra.mxu0 0.0
      %905 = vmatprep.subr.mxu0 0.0
      %906 = vmatpush1.msra.mxu0 0.0
      %907 = vmatprep.subr.mxu0 0.0
      %908 = vmatpush1.msra.mxu0 0.0
      %909 = vmatprep.subr.mxu0 0.0
      %910 = vmatpush1.msra.mxu0 0.0
      %911 = vmatprep.subr.mxu0 0.0
      %912 = vmatpush1.msra.mxu0 %v876
      %913 = vmatprep.subr.mxu0 0.0
      %914 = vmatpush1.msra.mxu0 %v875
      %915 = vmatprep.subr.mxu0 0.0
      %916 = vmatpush2.msra.mxu0 0.0
      %917 = vmatprep.subr.mxu0 0.0
      %918 = vmatpush2.msra.mxu0 0.0
      %919 = vmatprep.subr.mxu0 0.0
      %920 = vmatpush2.msra.mxu0 0.0
      %921 = vmatprep.subr.mxu0 0.0
      %922 = vmatpush2.msra.mxu0 0.0
      %923 = vmatprep.subr.mxu0 0.0
      %924 = vmatpush2.msra.mxu0 0.0
      %925 = vmatprep.subr.mxu0 0.0
      %926 = vmatpush2.msra.mxu0 0.0
      %927 = vmatprep.subr.mxu0 0.0
      %928 = vmatpush2.msra.mxu0 0.0
      %929 = vmatprep.subr.mxu0 0.0
      %930 = vmatpush2.msra.mxu0 0.0
      %931 = vmatprep.subr.mxu0 0.0
      %932 = vmatpush2.msra.mxu0 0.0
      %933 = vmatprep.subr.mxu0 0.0
      %934 = vmatpush2.msra.mxu0 0.0
      %935 = vmatprep.subr.mxu0 0.0
      %936 = vmatpush2.msra.mxu0 0.0
      %937 = vmatprep.subr.mxu0 0.0
      %938 = vmatpush2.msra.mxu0 0.0
      %939 = vmatprep.subr.mxu0 0.0
      %940 = vmatpush2.msra.mxu0 0.0
      %941 = vmatprep.subr.mxu0 0.0
      %942 = vmatpush2.msra.mxu0 0.0
      %943 = vmatprep.subr.mxu0 0.0
      %944 = vmatpush2.msra.mxu0 0.0
      %945 = vmatprep.subr.mxu0 0.0
      %946 = vmatpush2.msra.mxu0 0.0
      %947 = vmatprep.mubr.f32.mxu0 0.0
      %948 = vmatmul.mubr.f32.gmra.mxu0 %v878
      %v949 = vpop.f32.mrf.mxu0
      %v950 = vadd.f32 0.0, %v949
      %v951 = vpop.f32.mrf.mxu0
      %952 = vmatprep.mubr.f32.mxu0 0.0
      %953 = vmatmul.mubr.f32.gmra.mxu0 %v881
      %v954 = vpop.f32.mrf.mxu0
      %v955 = vadd.f32 0.0, %v954
      %v956 = vpop.f32.mrf.mxu0
      %957 = vdwg.mxu0
      %v958 = vadd.f32 %v866, %v950
      %v959 = vadd.f32 %v871, %v955
      %s960 = scalar_lea.vmem %s2, 48
      %v961 = vld [vmem:[%s960] sm:$0xff]
      %v962 = vld [vmem:[%s960 + $0x8] sm:$0xff]
      %v964 = vsel %vm561, %v689, 0
      %v967 = vsel %vm561, %v694, 0
      %969 = vmatprep.subr.mxu0 0.0
      %970 = vmatpush1.msra.mxu0 0.0
      %971 = vmatprep.subr.mxu0 0.0
      %972 = vmatpush1.msra.mxu0 0.0
      %973 = vmatprep.subr.mxu0 0.0
      %974 = vmatpush1.msra.mxu0 0.0
      %975 = vmatprep.subr.mxu0 0.0
      %976 = vmatpush1.msra.mxu0 0.0
      %977 = vmatprep.subr.mxu0 0.0
      %978 = vmatpush1.msra.mxu0 0.0
      %979 = vmatprep.subr.mxu0 0.0
      %980 = vmatpush1.msra.mxu0 0.0
      %981 = vmatprep.subr.mxu0 0.0
      %982 = vmatpush1.msra.mxu0 0.0
      %983 = vmatprep.subr.mxu0 0.0
      %984 = vmatpush1.msra.mxu0 0.0
      %985 = vmatprep.subr.mxu0 0.0
      %986 = vmatpush1.msra.mxu0 0.0
      %987 = vmatprep.subr.mxu0 0.0
      %988 = vmatpush1.msra.mxu0 0.0
      %989 = vmatprep.subr.mxu0 0.0
      %990 = vmatpush1.msra.mxu0 0.0
      %991 = vmatprep.subr.mxu0 0.0
      %992 = vmatpush1.msra.mxu0 0.0
      %993 = vmatprep.subr.mxu0 0.0
      %994 = vmatpush1.msra.mxu0 0.0
      %995 = vmatprep.subr.mxu0 0.0
      %996 = vmatpush1.msra.mxu0 0.0
      %997 = vmatprep.subr.mxu0 0.0
      %998 = vmatpush1.msra.mxu0 %v962
      %999 = vmatprep.subr.mxu0 0.0
      %1000 = vmatpush1.msra.mxu0 %v961
      %1001 = vmatprep.subr.mxu0 0.0
      %1002 = vmatpush2.msra.mxu0 0.0
      %1003 = vmatprep.subr.mxu0 0.0
      %1004 = vmatpush2.msra.mxu0 0.0
      %1005 = vmatprep.subr.mxu0 0.0
      %1006 = vmatpush2.msra.mxu0 0.0
      %1007 = vmatprep.subr.mxu0 0.0
      %1008 = vmatpush2.msra.mxu0 0.0
      %1009 = vmatprep.subr.mxu0 0.0
      %1010 = vmatpush2.msra.mxu0 0.0
      %1011 = vmatprep.subr.mxu0 0.0
      %1012 = vmatpush2.msra.mxu0 0.0
      %1013 = vmatprep.subr.mxu0 0.0
      %1014 = vmatpush2.msra.mxu0 0.0
      %1015 = vmatprep.subr.mxu0 0.0
      %1016 = vmatpush2.msra.mxu0 0.0
      %1017 = vmatprep.subr.mxu0 0.0
      %1018 = vmatpush2.msra.mxu0 0.0
      %1019 = vmatprep.subr.mxu0 0.0
      %1020 = vmatpush2.msra.mxu0 0.0
      %1021 = vmatprep.subr.mxu0 0.0
      %1022 = vmatpush2.msra.mxu0 0.0
      %1023 = vmatprep.subr.mxu0 0.0
      %1024 = vmatpush2.msra.mxu0 0.0
      %1025 = vmatprep.subr.mxu0 0.0
      %1026 = vmatpush2.msra.mxu0 0.0
      %1027 = vmatprep.subr.mxu0 0.0
      %1028 = vmatpush2.msra.mxu0 0.0
      %1029 = vmatprep.subr.mxu0 0.0
      %1030 = vmatpush2.msra.mxu0 0.0
      %1031 = vmatprep.subr.mxu0 0.0
      %1032 = vmatpush2.msra.mxu0 0.0
      %1033 = vmatprep.mubr.f32.mxu0 0.0
      %1034 = vmatmul.mubr.f32.gmra.mxu0 %v964
      %v1035 = vpop.f32.mrf.mxu0
      %v1036 = vadd.f32 0.0, %v1035
      %v1037 = vpop.f32.mrf.mxu0
      %1038 = vmatprep.mubr.f32.mxu0 0.0
      %1039 = vmatmul.mubr.f32.gmra.mxu0 %v967
      %v1040 = vpop.f32.mrf.mxu0
      %v1041 = vadd.f32 0.0, %v1040
      %v1042 = vpop.f32.mrf.mxu0
      %1043 = vdwg.mxu0
      %v1044 = vadd.f32 %v958, %v1036
      %v1045 = vadd.f32 %v959, %v1041
      %s1046 = scalar_lea.vmem %s2, 64
      %v1047 = vld [vmem:[%s1046] sm:$0xff]
      %v1048 = vld [vmem:[%s1046 + $0x8] sm:$0xff]
      %v1050 = vsel %vm561, %v699, 0
      %v1053 = vsel %vm561, %v704, 0
      %1055 = vmatprep.subr.mxu0 0.0
      %1056 = vmatpush1.msra.mxu0 0.0
      %1057 = vmatprep.subr.mxu0 0.0
      %1058 = vmatpush1.msra.mxu0 0.0
      %1059 = vmatprep.subr.mxu0 0.0
      %1060 = vmatpush1.msra.mxu0 0.0
      %1061 = vmatprep.subr.mxu0 0.0
      %1062 = vmatpush1.msra.mxu0 0.0
      %1063 = vmatprep.subr.mxu0 0.0
      %1064 = vmatpush1.msra.mxu0 0.0
      %1065 = vmatprep.subr.mxu0 0.0
      %1066 = vmatpush1.msra.mxu0 0.0
      %1067 = vmatprep.subr.mxu0 0.0
      %1068 = vmatpush1.msra.mxu0 0.0
      %1069 = vmatprep.subr.mxu0 0.0
      %1070 = vmatpush1.msra.mxu0 0.0
      %1071 = vmatprep.subr.mxu0 0.0
      %1072 = vmatpush1.msra.mxu0 0.0
      %1073 = vmatprep.subr.mxu0 0.0
      %1074 = vmatpush1.msra.mxu0 0.0
      %1075 = vmatprep.subr.mxu0 0.0
      %1076 = vmatpush1.msra.mxu0 0.0
      %1077 = vmatprep.subr.mxu0 0.0
      %1078 = vmatpush1.msra.mxu0 0.0
      %1079 = vmatprep.subr.mxu0 0.0
      %1080 = vmatpush1.msra.mxu0 0.0
      %1081 = vmatprep.subr.mxu0 0.0
      %1082 = vmatpush1.msra.mxu0 0.0
      %1083 = vmatprep.subr.mxu0 0.0
      %1084 = vmatpush1.msra.mxu0 %v1048
      %1085 = vmatprep.subr.mxu0 0.0
      %1086 = vmatpush1.msra.mxu0 %v1047
      %1087 = vmatprep.subr.mxu0 0.0
      %1088 = vmatpush2.msra.mxu0 0.0
      %1089 = vmatprep.subr.mxu0 0.0
      %1090 = vmatpush2.msra.mxu0 0.0
      %1091 = vmatprep.subr.mxu0 0.0
      %1092 = vmatpush2.msra.mxu0 0.0
      %1093 = vmatprep.subr.mxu0 0.0
      %1094 = vmatpush2.msra.mxu0 0.0
      %1095 = vmatprep.subr.mxu0 0.0
      %1096 = vmatpush2.msra.mxu0 0.0
      %1097 = vmatprep.subr.mxu0 0.0
      %1098 = vmatpush2.msra.mxu0 0.0
      %1099 = vmatprep.subr.mxu0 0.0
      %1100 = vmatpush2.msra.mxu0 0.0
      %1101 = vmatprep.subr.mxu0 0.0
      %1102 = vmatpush2.msra.mxu0 0.0
      %1103 = vmatprep.subr.mxu0 0.0
      %1104 = vmatpush2.msra.mxu0 0.0
      %1105 = vmatprep.subr.mxu0 0.0
      %1106 = vmatpush2.msra.mxu0 0.0
      %1107 = vmatprep.subr.mxu0 0.0
      %1108 = vmatpush2.msra.mxu0 0.0
      %1109 = vmatprep.subr.mxu0 0.0
      %1110 = vmatpush2.msra.mxu0 0.0
      %1111 = vmatprep.subr.mxu0 0.0
      %1112 = vmatpush2.msra.mxu0 0.0
      %1113 = vmatprep.subr.mxu0 0.0
      %1114 = vmatpush2.msra.mxu0 0.0
      %1115 = vmatprep.subr.mxu0 0.0
      %1116 = vmatpush2.msra.mxu0 0.0
      %1117 = vmatprep.subr.mxu0 0.0
      %1118 = vmatpush2.msra.mxu0 0.0
      %1119 = vmatprep.mubr.f32.mxu0 0.0
      %1120 = vmatmul.mubr.f32.gmra.mxu0 %v1050
      %v1121 = vpop.f32.mrf.mxu0
      %v1122 = vadd.f32 0.0, %v1121
      %v1123 = vpop.f32.mrf.mxu0
      %1124 = vmatprep.mubr.f32.mxu0 0.0
      %1125 = vmatmul.mubr.f32.gmra.mxu0 %v1053
      %v1126 = vpop.f32.mrf.mxu0
      %v1127 = vadd.f32 0.0, %v1126
      %v1128 = vpop.f32.mrf.mxu0
      %1129 = vdwg.mxu0
      %v1130 = vadd.f32 %v1044, %v1122
      %v1131 = vadd.f32 %v1045, %v1127
      %v1132 = vld [vmem:[%s3] sm:$0x1]
      %v1134 = vlaneseq
      %v1135 = vshrl.u32 %v1134, 7
      %v1136 = vsub.s32 0, %v1135
      %v1137 = vrot.slane %v1132, %v1136
      %v1139 = vadd.f32 %v1130, %v1137
      %v1140 = vadd.f32 %v1131, %v1137
      %v1141 = vmax.f32 %v1139, 0.0
      %v1142 = vmax.f32 %v1140, 0.0
      %v1143 = vld [vmem:[%s4] sm:$0xff]
      %v1145 = vsel %vm561, %v1143, 0
      %1147 = vmatprep.subr.mxu0 0.0
      %1148 = vmatpush1.msra.mxu0 0.0
      %1149 = vmatprep.subr.mxu0 0.0
      %1150 = vmatpush1.msra.mxu0 0.0
      %1151 = vmatprep.subr.mxu0 0.0
      %1152 = vmatpush1.msra.mxu0 0.0
      %1153 = vmatprep.subr.mxu0 0.0
      %1154 = vmatpush1.msra.mxu0 0.0
      %1155 = vmatprep.subr.mxu0 0.0
      %1156 = vmatpush1.msra.mxu0 0.0
      %1157 = vmatprep.subr.mxu0 0.0
      %1158 = vmatpush1.msra.mxu0 0.0
      %1159 = vmatprep.subr.mxu0 0.0
      %1160 = vmatpush1.msra.mxu0 0.0
      %1161 = vmatprep.subr.mxu0 0.0
      %1162 = vmatpush1.msra.mxu0 0.0
      %1163 = vmatprep.subr.mxu0 0.0
      %1164 = vmatpush1.msra.mxu0 0.0
      %1165 = vmatprep.subr.mxu0 0.0
      %1166 = vmatpush1.msra.mxu0 0.0
      %1167 = vmatprep.subr.mxu0 0.0
      %1168 = vmatpush1.msra.mxu0 0.0
      %1169 = vmatprep.subr.mxu0 0.0
      %1170 = vmatpush1.msra.mxu0 0.0
      %1171 = vmatprep.subr.mxu0 0.0
      %1172 = vmatpush1.msra.mxu0 0.0
      %1173 = vmatprep.subr.mxu0 0.0
      %1174 = vmatpush1.msra.mxu0 0.0
      %1175 = vmatprep.subr.mxu0 0.0
      %1176 = vmatpush1.msra.mxu0 %v1142
      %1177 = vmatprep.subr.mxu0 0.0
      %1178 = vmatpush1.msra.mxu0 %v1141
      %1179 = vmatprep.subr.mxu0 0.0
      %1180 = vmatpush2.msra.mxu0 0.0
      %1181 = vmatprep.subr.mxu0 0.0
      %1182 = vmatpush2.msra.mxu0 0.0
      %1183 = vmatprep.subr.mxu0 0.0
      %1184 = vmatpush2.msra.mxu0 0.0
      %1185 = vmatprep.subr.mxu0 0.0
      %1186 = vmatpush2.msra.mxu0 0.0
      %1187 = vmatprep.subr.mxu0 0.0
      %1188 = vmatpush2.msra.mxu0 0.0
      %1189 = vmatprep.subr.mxu0 0.0
      %1190 = vmatpush2.msra.mxu0 0.0
      %1191 = vmatprep.subr.mxu0 0.0
      %1192 = vmatpush2.msra.mxu0 0.0
      %1193 = vmatprep.subr.mxu0 0.0
      %1194 = vmatpush2.msra.mxu0 0.0
      %1195 = vmatprep.subr.mxu0 0.0
      %1196 = vmatpush2.msra.mxu0 0.0
      %1197 = vmatprep.subr.mxu0 0.0
      %1198 = vmatpush2.msra.mxu0 0.0
      %1199 = vmatprep.subr.mxu0 0.0
      %1200 = vmatpush2.msra.mxu0 0.0
      %1201 = vmatprep.subr.mxu0 0.0
      %1202 = vmatpush2.msra.mxu0 0.0
      %1203 = vmatprep.subr.mxu0 0.0
      %1204 = vmatpush2.msra.mxu0 0.0
      %1205 = vmatprep.subr.mxu0 0.0
      %1206 = vmatpush2.msra.mxu0 0.0
      %1207 = vmatprep.subr.mxu0 0.0
      %1208 = vmatpush2.msra.mxu0 0.0
      %1209 = vmatprep.subr.mxu0 0.0
      %1210 = vmatpush2.msra.mxu0 0.0
      %1211 = vmatprep.mubr.f32.mxu0 0.0
      %1212 = vmatmul.mubr.f32.gmra.mxu0 %v1145
      %v1213 = vpop.f32.mrf.mxu0
      %v1214 = vadd.f32 0.0, %v1213
      %v1215 = vpop.f32.mrf.mxu0
      %1216 = vdwg.mxu0
      %v1217 = vld [vmem:[%s5] sm:$0xff]
      %v1219 = vsel %vm561, %v1217, 0
      %1221 = vmatprep.subr.mxu0 0.0
      %1222 = vmatpush1.msra.mxu0 0.0
      %1223 = vmatprep.subr.mxu0 0.0
      %1224 = vmatpush1.msra.mxu0 0.0
      %1225 = vmatprep.subr.mxu0 0.0
      %1226 = vmatpush1.msra.mxu0 0.0
      %1227 = vmatprep.subr.mxu0 0.0
      %1228 = vmatpush1.msra.mxu0 0.0
      %1229 = vmatprep.subr.mxu0 0.0
      %1230 = vmatpush1.msra.mxu0 0.0
      %1231 = vmatprep.subr.mxu0 0.0
      %1232 = vmatpush1.msra.mxu0 0.0
      %1233 = vmatprep.subr.mxu0 0.0
      %1234 = vmatpush1.msra.mxu0 0.0
      %1235 = vmatprep.subr.mxu0 0.0
      %1236 = vmatpush1.msra.mxu0 0.0
      %1237 = vmatprep.subr.mxu0 0.0
      %1238 = vmatpush1.msra.mxu0 0.0
      %1239 = vmatprep.subr.mxu0 0.0
      %1240 = vmatpush1.msra.mxu0 0.0
      %1241 = vmatprep.subr.mxu0 0.0
      %1242 = vmatpush1.msra.mxu0 0.0
      %1243 = vmatprep.subr.mxu0 0.0
      %1244 = vmatpush1.msra.mxu0 0.0
      %1245 = vmatprep.subr.mxu0 0.0
      %1246 = vmatpush1.msra.mxu0 0.0
      %1247 = vmatprep.subr.mxu0 0.0
      %1248 = vmatpush1.msra.mxu0 0.0
      %1249 = vmatprep.subr.mxu0 0.0
      %1250 = vmatpush1.msra.mxu0 %v1142
      %1251 = vmatprep.subr.mxu0 0.0
      %1252 = vmatpush1.msra.mxu0 %v1141
      %1253 = vmatprep.subr.mxu0 0.0
      %1254 = vmatpush2.msra.mxu0 0.0
      %1255 = vmatprep.subr.mxu0 0.0
      %1256 = vmatpush2.msra.mxu0 0.0
      %1257 = vmatprep.subr.mxu0 0.0
      %1258 = vmatpush2.msra.mxu0 0.0
      %1259 = vmatprep.subr.mxu0 0.0
      %1260 = vmatpush2.msra.mxu0 0.0
      %1261 = vmatprep.subr.mxu0 0.0
      %1262 = vmatpush2.msra.mxu0 0.0
      %1263 = vmatprep.subr.mxu0 0.0
      %1264 = vmatpush2.msra.mxu0 0.0
      %1265 = vmatprep.subr.mxu0 0.0
      %1266 = vmatpush2.msra.mxu0 0.0
      %1267 = vmatprep.subr.mxu0 0.0
      %1268 = vmatpush2.msra.mxu0 0.0
      %1269 = vmatprep.subr.mxu0 0.0
      %1270 = vmatpush2.msra.mxu0 0.0
      %1271 = vmatprep.subr.mxu0 0.0
      %1272 = vmatpush2.msra.mxu0 0.0
      %1273 = vmatprep.subr.mxu0 0.0
      %1274 = vmatpush2.msra.mxu0 0.0
      %1275 = vmatprep.subr.mxu0 0.0
      %1276 = vmatpush2.msra.mxu0 0.0
      %1277 = vmatprep.subr.mxu0 0.0
      %1278 = vmatpush2.msra.mxu0 0.0
      %1279 = vmatprep.subr.mxu0 0.0
      %1280 = vmatpush2.msra.mxu0 0.0
      %1281 = vmatprep.subr.mxu0 0.0
      %1282 = vmatpush2.msra.mxu0 0.0
      %1283 = vmatprep.subr.mxu0 0.0
      %1284 = vmatpush2.msra.mxu0 0.0
      %1285 = vmatprep.mubr.f32.mxu0 0.0
      %1286 = vmatmul.mubr.f32.gmra.mxu0 %v1219
      %v1287 = vpop.f32.mrf.mxu0
      %v1288 = vadd.f32 0.0, %v1287
      %v1289 = vpop.f32.mrf.mxu0
      %1290 = vdwg.mxu0
      %v1291 = vmax.f32 %v1214, %v1288
      %v1292 = vld [vmem:[%s6] sm:$0xff]
      %v1293 = vld [vmem:[%s6 + $0x8] sm:$0xff]
      %v1294 = vld [vmem:[%s6 + $0x10] sm:$0xff]
      %v1295 = vld [vmem:[%s6 + $0x18] sm:$0xff]
      %v1296 = vld [vmem:[%s6 + $0x20] sm:$0xff]
      %v1297 = vld [vmem:[%s6 + $0x28] sm:$0xff]
      %v1298 = vld [vmem:[%s6 + $0x30] sm:$0xff]
      %v1299 = vld [vmem:[%s6 + $0x38] sm:$0xff]
      %v1300 = vld [vmem:[%s6 + $0x40] sm:$0xff]
      %v1301 = vld [vmem:[%s6 + $0x48] sm:$0xff]
      %v1302 = vld [vmem:[%s6 + $0x50] sm:$0xff]
      %v1303 = vld [vmem:[%s6 + $0x58] sm:$0xff]
      %v1304 = vld [vmem:[%s6 + $0x60] sm:$0xff]
      %v1305 = vld [vmem:[%s6 + $0x68] sm:$0xff]
      %v1306 = vld [vmem:[%s6 + $0x70] sm:$0xff]
      %v1307 = vld [vmem:[%s6 + $0x78] sm:$0xff]
      %1308 = vmatprep.subr.mxu0 0.0
      %1309 = vmatpush1.msra.mxu0 %v1307
      %1310 = vmatprep.subr.mxu0 0.0
      %1311 = vmatpush1.msra.mxu0 %v1306
      %1312 = vmatprep.subr.mxu0 0.0
      %1313 = vmatpush1.msra.mxu0 %v1305
      %1314 = vmatprep.subr.mxu0 0.0
      %1315 = vmatpush1.msra.mxu0 %v1304
      %1316 = vmatprep.subr.mxu0 0.0
      %1317 = vmatpush1.msra.mxu0 %v1303
      %1318 = vmatprep.subr.mxu0 0.0
      %1319 = vmatpush1.msra.mxu0 %v1302
      %1320 = vmatprep.subr.mxu0 0.0
      %1321 = vmatpush1.msra.mxu0 %v1301
      %1322 = vmatprep.subr.mxu0 0.0
      %1323 = vmatpush1.msra.mxu0 %v1300
      %1324 = vmatprep.subr.mxu0 0.0
      %1325 = vmatpush1.msra.mxu0 %v1299
      %1326 = vmatprep.subr.mxu0 0.0
      %1327 = vmatpush1.msra.mxu0 %v1298
      %1328 = vmatprep.subr.mxu0 0.0
      %1329 = vmatpush1.msra.mxu0 %v1297
      %1330 = vmatprep.subr.mxu0 0.0
      %1331 = vmatpush1.msra.mxu0 %v1296
      %1332 = vmatprep.subr.mxu0 0.0
      %1333 = vmatpush1.msra.mxu0 %v1295
      %1334 = vmatprep.subr.mxu0 0.0
      %1335 = vmatpush1.msra.mxu0 %v1294
      %1336 = vmatprep.subr.mxu0 0.0
      %1337 = vmatpush1.msra.mxu0 %v1293
      %1338 = vmatprep.subr.mxu0 0.0
      %1339 = vmatpush1.msra.mxu0 %v1292
      %1340 = vmatprep.subr.mxu0 0.0
      %1341 = vmatpush2.msra.mxu0 0.0
      %1342 = vmatprep.subr.mxu0 0.0
      %1343 = vmatpush2.msra.mxu0 0.0
      %1344 = vmatprep.subr.mxu0 0.0
      %1345 = vmatpush2.msra.mxu0 0.0
      %1346 = vmatprep.subr.mxu0 0.0
      %1347 = vmatpush2.msra.mxu0 0.0
      %1348 = vmatprep.subr.mxu0 0.0
      %1349 = vmatpush2.msra.mxu0 0.0
      %1350 = vmatprep.subr.mxu0 0.0
      %1351 = vmatpush2.msra.mxu0 0.0
      %1352 = vmatprep.subr.mxu0 0.0
      %1353 = vmatpush2.msra.mxu0 0.0
      %1354 = vmatprep.subr.mxu0 0.0
      %1355 = vmatpush2.msra.mxu0 0.0
      %1356 = vmatprep.subr.mxu0 0.0
      %1357 = vmatpush2.msra.mxu0 0.0
      %1358 = vmatprep.subr.mxu0 0.0
      %1359 = vmatpush2.msra.mxu0 0.0
      %1360 = vmatprep.subr.mxu0 0.0
      %1361 = vmatpush2.msra.mxu0 0.0
      %1362 = vmatprep.subr.mxu0 0.0
      %1363 = vmatpush2.msra.mxu0 0.0
      %1364 = vmatprep.subr.mxu0 0.0
      %1365 = vmatpush2.msra.mxu0 0.0
      %1366 = vmatprep.subr.mxu0 0.0
      %1367 = vmatpush2.msra.mxu0 0.0
      %1368 = vmatprep.subr.mxu0 0.0
      %1369 = vmatpush2.msra.mxu0 0.0
      %1370 = vmatprep.subr.mxu0 0.0
      %1371 = vmatpush2.msra.mxu0 0.0
      %1372 = vmatprep.mubr.f32.mxu0 0.0
      %1373 = vmatmul.mubr.f32.gmra.mxu0 %v1291
      %v1374 = vpop.f32.mrf.mxu0
      %v1375 = vadd.f32 0.0, %v1374
      %v1376 = vpop.f32.mrf.mxu0
      %1377 = vdwg.mxu0
      %v1378 = vld [vmem:[%s7] sm:$0xff]
      %v1379 = vld [vmem:[%s7 + $0x8] sm:$0xff]
      %v1380 = vld [vmem:[%s7 + $0x10] sm:$0xff]
      %v1381 = vld [vmem:[%s7 + $0x18] sm:$0xff]
      %v1382 = vld [vmem:[%s7 + $0x20] sm:$0xff]
      %v1383 = vld [vmem:[%s7 + $0x28] sm:$0xff]
      %v1384 = vld [vmem:[%s7 + $0x30] sm:$0xff]
      %v1385 = vld [vmem:[%s7 + $0x38] sm:$0xff]
      %v1386 = vld [vmem:[%s7 + $0x40] sm:$0xff]
      %v1387 = vld [vmem:[%s7 + $0x48] sm:$0xff]
      %v1388 = vld [vmem:[%s7 + $0x50] sm:$0xff]
      %v1389 = vld [vmem:[%s7 + $0x58] sm:$0xff]
      %v1390 = vld [vmem:[%s7 + $0x60] sm:$0xff]
      %v1391 = vld [vmem:[%s7 + $0x68] sm:$0xff]
      %v1392 = vld [vmem:[%s7 + $0x70] sm:$0xff]
      %v1393 = vld [vmem:[%s7 + $0x78] sm:$0xff]
      %1394 = vmatprep.subr.mxu0 0.0
      %1395 = vmatpush1.msra.mxu0 %v1393
      %1396 = vmatprep.subr.mxu0 0.0
      %1397 = vmatpush1.msra.mxu0 %v1392
      %1398 = vmatprep.subr.mxu0 0.0
      %1399 = vmatpush1.msra.mxu0 %v1391
      %1400 = vmatprep.subr.mxu0 0.0
      %1401 = vmatpush1.msra.mxu0 %v1390
      %1402 = vmatprep.subr.mxu0 0.0
      %1403 = vmatpush1.msra.mxu0 %v1389
      %1404 = vmatprep.subr.mxu0 0.0
      %1405 = vmatpush1.msra.mxu0 %v1388
      %1406 = vmatprep.subr.mxu0 0.0
      %1407 = vmatpush1.msra.mxu0 %v1387
      %1408 = vmatprep.subr.mxu0 0.0
      %1409 = vmatpush1.msra.mxu0 %v1386
      %1410 = vmatprep.subr.mxu0 0.0
      %1411 = vmatpush1.msra.mxu0 %v1385
      %1412 = vmatprep.subr.mxu0 0.0
      %1413 = vmatpush1.msra.mxu0 %v1384
      %1414 = vmatprep.subr.mxu0 0.0
      %1415 = vmatpush1.msra.mxu0 %v1383
      %1416 = vmatprep.subr.mxu0 0.0
      %1417 = vmatpush1.msra.mxu0 %v1382
      %1418 = vmatprep.subr.mxu0 0.0
      %1419 = vmatpush1.msra.mxu0 %v1381
      %1420 = vmatprep.subr.mxu0 0.0
      %1421 = vmatpush1.msra.mxu0 %v1380
      %1422 = vmatprep.subr.mxu0 0.0
      %1423 = vmatpush1.msra.mxu0 %v1379
      %1424 = vmatprep.subr.mxu0 0.0
      %1425 = vmatpush1.msra.mxu0 %v1378
      %1426 = vmatprep.subr.mxu0 0.0
      %1427 = vmatpush2.msra.mxu0 0.0
      %1428 = vmatprep.subr.mxu0 0.0
      %1429 = vmatpush2.msra.mxu0 0.0
      %1430 = vmatprep.subr.mxu0 0.0
      %1431 = vmatpush2.msra.mxu0 0.0
      %1432 = vmatprep.subr.mxu0 0.0
      %1433 = vmatpush2.msra.mxu0 0.0
      %1434 = vmatprep.subr.mxu0 0.0
      %1435 = vmatpush2.msra.mxu0 0.0
      %1436 = vmatprep.subr.mxu0 0.0
      %1437 = vmatpush2.msra.mxu0 0.0
      %1438 = vmatprep.subr.mxu0 0.0
      %1439 = vmatpush2.msra.mxu0 0.0
      %1440 = vmatprep.subr.mxu0 0.0
      %1441 = vmatpush2.msra.mxu0 0.0
      %1442 = vmatprep.subr.mxu0 0.0
      %1443 = vmatpush2.msra.mxu0 0.0
      %1444 = vmatprep.subr.mxu0 0.0
      %1445 = vmatpush2.msra.mxu0 0.0
      %1446 = vmatprep.subr.mxu0 0.0
      %1447 = vmatpush2.msra.mxu0 0.0
      %1448 = vmatprep.subr.mxu0 0.0
      %1449 = vmatpush2.msra.mxu0 0.0
      %1450 = vmatprep.subr.mxu0 0.0
      %1451 = vmatpush2.msra.mxu0 0.0
      %1452 = vmatprep.subr.mxu0 0.0
      %1453 = vmatpush2.msra.mxu0 0.0
      %1454 = vmatprep.subr.mxu0 0.0
      %1455 = vmatpush2.msra.mxu0 0.0
      %1456 = vmatprep.subr.mxu0 0.0
      %1457 = vmatpush2.msra.mxu0 0.0
      %1458 = vmatprep.mubr.f32.mxu0 0.0
      %1459 = vmatmul.mubr.f32.gmra.mxu0 %v1291
      %v1460 = vpop.f32.mrf.mxu0
      %v1461 = vadd.f32 0.0, %v1460
      %v1462 = vpop.f32.mrf.mxu0
      %1463 = vdwg.mxu0
      %v1464 = vmax.f32 %v1375, %v1461
      %v1465 = vld [vmem:[%s8] sm:$0xff]
      %v1466 = vld [vmem:[%s8 + $0x8] sm:$0xff]
      %v1467 = vld [vmem:[%s8 + $0x10] sm:$0xff]
      %v1468 = vld [vmem:[%s8 + $0x18] sm:$0xff]
      %v1469 = vld [vmem:[%s8 + $0x20] sm:$0xff]
      %vm1470 = vcmask 64512
      %v1472 = vsel %vm1470, %v1465, 0
      %v1475 = vsel %vm1470, %v1466, 0
      %v1478 = vsel %vm1470, %v1467, 0
      %v1481 = vsel %vm1470, %v1468, 0
      %v1484 = vsel %vm1470, %v1469, 0
      %1486 = vmatprep.subr.mxu0 0.0
      %1487 = vmatpush1.msra.mxu0 0.0
      %1488 = vmatprep.subr.mxu0 0.0
      %1489 = vmatpush1.msra.mxu0 0.0
      %1490 = vmatprep.subr.mxu0 0.0
      %1491 = vmatpush1.msra.mxu0 0.0
      %1492 = vmatprep.subr.mxu0 0.0
      %1493 = vmatpush1.msra.mxu0 0.0
      %1494 = vmatprep.subr.mxu0 0.0
      %1495 = vmatpush1.msra.mxu0 0.0
      %1496 = vmatprep.subr.mxu0 0.0
      %1497 = vmatpush1.msra.mxu0 0.0
      %1498 = vmatprep.subr.mxu0 0.0
      %1499 = vmatpush1.msra.mxu0 0.0
      %1500 = vmatprep.subr.mxu0 0.0
      %1501 = vmatpush1.msra.mxu0 0.0
      %1502 = vmatprep.subr.mxu0 0.0
      %1503 = vmatpush1.msra.mxu0 0.0
      %1504 = vmatprep.subr.mxu0 0.0
      %1505 = vmatpush1.msra.mxu0 0.0
      %1506 = vmatprep.subr.mxu0 0.0
      %1507 = vmatpush1.msra.mxu0 0.0
      %1508 = vmatprep.subr.mxu0 0.0
      %1509 = vmatpush1.msra.mxu0 0.0
      %1510 = vmatprep.subr.mxu0 0.0
      %1511 = vmatpush1.msra.mxu0 0.0
      %1512 = vmatprep.subr.mxu0 0.0
      %1513 = vmatpush1.msra.mxu0 0.0
      %1514 = vmatprep.subr.mxu0 0.0
      %1515 = vmatpush1.msra.mxu0 0.0
      %1516 = vmatprep.subr.mxu0 0.0
      %1517 = vmatpush1.msra.mxu0 %v1464
      %1518 = vmatprep.subr.mxu0 0.0
      %1519 = vmatpush2.msra.mxu0 0.0
      %1520 = vmatprep.subr.mxu0 0.0
      %1521 = vmatpush2.msra.mxu0 0.0
      %1522 = vmatprep.subr.mxu0 0.0
      %1523 = vmatpush2.msra.mxu0 0.0
      %1524 = vmatprep.subr.mxu0 0.0
      %1525 = vmatpush2.msra.mxu0 0.0
      %1526 = vmatprep.subr.mxu0 0.0
      %1527 = vmatpush2.msra.mxu0 0.0
      %1528 = vmatprep.subr.mxu0 0.0
      %1529 = vmatpush2.msra.mxu0 0.0
      %1530 = vmatprep.subr.mxu0 0.0
      %1531 = vmatpush2.msra.mxu0 0.0
      %1532 = vmatprep.subr.mxu0 0.0
      %1533 = vmatpush2.msra.mxu0 0.0
      %1534 = vmatprep.subr.mxu0 0.0
      %1535 = vmatpush2.msra.mxu0 0.0
      %1536 = vmatprep.subr.mxu0 0.0
      %1537 = vmatpush2.msra.mxu0 0.0
      %1538 = vmatprep.subr.mxu0 0.0
      %1539 = vmatpush2.msra.mxu0 0.0
      %1540 = vmatprep.subr.mxu0 0.0
      %1541 = vmatpush2.msra.mxu0 0.0
      %1542 = vmatprep.subr.mxu0 0.0
      %1543 = vmatpush2.msra.mxu0 0.0
      %1544 = vmatprep.subr.mxu0 0.0
      %1545 = vmatpush2.msra.mxu0 0.0
      %1546 = vmatprep.subr.mxu0 0.0
      %1547 = vmatpush2.msra.mxu0 0.0
      %1548 = vmatprep.subr.mxu0 0.0
      %1549 = vmatpush2.msra.mxu0 0.0
      %1550 = vmatprep.mubr.f32.mxu0 0.0
      %1551 = vmatmul.mubr.f32.gmra.mxu0 %v1472
      %v1552 = vpop.f32.mrf.mxu0
      %v1553 = vadd.f32 0.0, %v1552
      %v1554 = vpop.f32.mrf.mxu0
      %1555 = vmatprep.mubr.f32.mxu0 0.0
      %1556 = vmatmul.mubr.f32.gmra.mxu0 %v1475
      %v1557 = vpop.f32.mrf.mxu0
      %v1558 = vadd.f32 0.0, %v1557
      %v1559 = vpop.f32.mrf.mxu0
      %1560 = vmatprep.mubr.f32.mxu0 0.0
      %1561 = vmatmul.mubr.f32.gmra.mxu0 %v1478
      %v1562 = vpop.f32.mrf.mxu0
      %v1563 = vadd.f32 0.0, %v1562
      %v1564 = vpop.f32.mrf.mxu0
      %1565 = vmatprep.mubr.f32.mxu0 0.0
      %1566 = vmatmul.mubr.f32.gmra.mxu0 %v1481
      %v1567 = vpop.f32.mrf.mxu0
      %v1568 = vadd.f32 0.0, %v1567
      %v1569 = vpop.f32.mrf.mxu0
      %1570 = vmatprep.mubr.f32.mxu0 0.0
      %1571 = vmatmul.mubr.f32.gmra.mxu0 %v1484
      %v1572 = vpop.f32.mrf.mxu0
      %v1573 = vadd.f32 0.0, %v1572
      %v1574 = vpop.f32.mrf.mxu0
      %1575 = vdwg.mxu0
      %v1576 = vld [vmem:[%s9] sm:$0xff]
      %v1577 = vld [vmem:[%s9 + $0x8] sm:$0xff]
      %v1578 = vld [vmem:[%s9 + $0x10] sm:$0xff]
      %v1579 = vld [vmem:[%s9 + $0x18] sm:$0xff]
      %v1580 = vld [vmem:[%s9 + $0x20] sm:$0xff]
      %v1581 = vld [vmem:[%s9 + $0x28] sm:$0xff]
      %v1582 = vld [vmem:[%s9 + $0x30] sm:$0xff]
      %v1583 = vld [vmem:[%s9 + $0x38] sm:$0xff]
      %s1584 = scalar_lea.vmem %s9, 64
      %v1585 = vld [vmem:[%s1584] sm:$0xff]
      %v1586 = vld [vmem:[%s1584 + $0x8] sm:$0xff]
      %v1587 = vld [vmem:[%s1584 + $0x10] sm:$0xff]
      %v1588 = vld [vmem:[%s1584 + $0x18] sm:$0xff]
      %v1589 = vld [vmem:[%s1584 + $0x20] sm:$0xff]
      %v1590 = vld [vmem:[%s1584 + $0x28] sm:$0xff]
      %v1591 = vld [vmem:[%s1584 + $0x30] sm:$0xff]
      %v1592 = vld [vmem:[%s1584 + $0x38] sm:$0xff]
      %vm1593 = vcmask 523264
      %v1595 = vsel %vm1593, %v1558, 0
      %1597 = vmatprep.subr.mxu0 0.0
      %1598 = vmatpush1.msra.mxu0 0.0
      %1599 = vmatprep.subr.mxu0 0.0
      %1600 = vmatpush1.msra.mxu0 0.0
      %1601 = vmatprep.subr.mxu0 0.0
      %1602 = vmatpush1.msra.mxu0 0.0
      %1603 = vmatprep.subr.mxu0 0.0
      %1604 = vmatpush1.msra.mxu0 0.0
      %1605 = vmatprep.subr.mxu0 0.0
      %1606 = vmatpush1.msra.mxu0 0.0
      %1607 = vmatprep.subr.mxu0 0.0
      %1608 = vmatpush1.msra.mxu0 0.0
      %1609 = vmatprep.subr.mxu0 0.0
      %1610 = vmatpush1.msra.mxu0 0.0
      %1611 = vmatprep.subr.mxu0 0.0
      %1612 = vmatpush1.msra.mxu0 0.0
      %1613 = vmatprep.subr.mxu0 0.0
      %1614 = vmatpush1.msra.mxu0 %v1592
      %1615 = vmatprep.subr.mxu0 0.0
      %1616 = vmatpush1.msra.mxu0 %v1591
      %1617 = vmatprep.subr.mxu0 0.0
      %1618 = vmatpush1.msra.mxu0 %v1590
      %1619 = vmatprep.subr.mxu0 0.0
      %1620 = vmatpush1.msra.mxu0 %v1589
      %1621 = vmatprep.subr.mxu0 0.0
      %1622 = vmatpush1.msra.mxu0 %v1588
      %1623 = vmatprep.subr.mxu0 0.0
      %1624 = vmatpush1.msra.mxu0 %v1587
      %1625 = vmatprep.subr.mxu0 0.0
      %1626 = vmatpush1.msra.mxu0 %v1586
      %1627 = vmatprep.subr.mxu0 0.0
      %1628 = vmatpush1.msra.mxu0 %v1585
      %1629 = vmatprep.subr.mxu0 0.0
      %1630 = vmatpush2.msra.mxu0 0.0
      %1631 = vmatprep.subr.mxu0 0.0
      %1632 = vmatpush2.msra.mxu0 0.0
      %1633 = vmatprep.subr.mxu0 0.0
      %1634 = vmatpush2.msra.mxu0 0.0
      %1635 = vmatprep.subr.mxu0 0.0
      %1636 = vmatpush2.msra.mxu0 0.0
      %1637 = vmatprep.subr.mxu0 0.0
      %1638 = vmatpush2.msra.mxu0 0.0
      %1639 = vmatprep.subr.mxu0 0.0
      %1640 = vmatpush2.msra.mxu0 0.0
      %1641 = vmatprep.subr.mxu0 0.0
      %1642 = vmatpush2.msra.mxu0 0.0
      %1643 = vmatprep.subr.mxu0 0.0
      %1644 = vmatpush2.msra.mxu0 0.0
      %1645 = vmatprep.subr.mxu0 0.0
      %1646 = vmatpush2.msra.mxu0 0.0
      %1647 = vmatprep.subr.mxu0 0.0
      %1648 = vmatpush2.msra.mxu0 0.0
      %1649 = vmatprep.subr.mxu0 0.0
      %1650 = vmatpush2.msra.mxu0 0.0
      %1651 = vmatprep.subr.mxu0 0.0
      %1652 = vmatpush2.msra.mxu0 0.0
      %1653 = vmatprep.subr.mxu0 0.0
      %1654 = vmatpush2.msra.mxu0 0.0
      %1655 = vmatprep.subr.mxu0 0.0
      %1656 = vmatpush2.msra.mxu0 0.0
      %1657 = vmatprep.subr.mxu0 0.0
      %1658 = vmatpush2.msra.mxu0 0.0
      %1659 = vmatprep.subr.mxu0 0.0
      %1660 = vmatpush2.msra.mxu0 0.0
      %1661 = vmatprep.mubr.f32.mxu0 0.0
      %1662 = vmatmul.mubr.f32.gmra.mxu0 %v1595
      %v1663 = vpop.f32.mrf.mxu0
      %v1664 = vadd.f32 0.0, %v1663
      %v1665 = vpop.f32.mrf.mxu0
      %1666 = vdwg.mxu0
      %v1668 = vsel %vm1593, %v1553, 0
      %1670 = vmatprep.subr.mxu0 0.0
      %1671 = vmatpush1.msra.mxu0 0.0
      %1672 = vmatprep.subr.mxu0 0.0
      %1673 = vmatpush1.msra.mxu0 0.0
      %1674 = vmatprep.subr.mxu0 0.0
      %1675 = vmatpush1.msra.mxu0 0.0
      %1676 = vmatprep.subr.mxu0 0.0
      %1677 = vmatpush1.msra.mxu0 0.0
      %1678 = vmatprep.subr.mxu0 0.0
      %1679 = vmatpush1.msra.mxu0 0.0
      %1680 = vmatprep.subr.mxu0 0.0
      %1681 = vmatpush1.msra.mxu0 0.0
      %1682 = vmatprep.subr.mxu0 0.0
      %1683 = vmatpush1.msra.mxu0 0.0
      %1684 = vmatprep.subr.mxu0 0.0
      %1685 = vmatpush1.msra.mxu0 0.0
      %1686 = vmatprep.subr.mxu0 0.0
      %1687 = vmatpush1.msra.mxu0 %v1583
      %1688 = vmatprep.subr.mxu0 0.0
      %1689 = vmatpush1.msra.mxu0 %v1582
      %1690 = vmatprep.subr.mxu0 0.0
      %1691 = vmatpush1.msra.mxu0 %v1581
      %1692 = vmatprep.subr.mxu0 0.0
      %1693 = vmatpush1.msra.mxu0 %v1580
      %1694 = vmatprep.subr.mxu0 0.0
      %1695 = vmatpush1.msra.mxu0 %v1579
      %1696 = vmatprep.subr.mxu0 0.0
      %1697 = vmatpush1.msra.mxu0 %v1578
      %1698 = vmatprep.subr.mxu0 0.0
      %1699 = vmatpush1.msra.mxu0 %v1577
      %1700 = vmatprep.subr.mxu0 0.0
      %1701 = vmatpush1.msra.mxu0 %v1576
      %1702 = vmatprep.subr.mxu0 0.0
      %1703 = vmatpush2.msra.mxu0 0.0
      %1704 = vmatprep.subr.mxu0 0.0
      %1705 = vmatpush2.msra.mxu0 0.0
      %1706 = vmatprep.subr.mxu0 0.0
      %1707 = vmatpush2.msra.mxu0 0.0
      %1708 = vmatprep.subr.mxu0 0.0
      %1709 = vmatpush2.msra.mxu0 0.0
      %1710 = vmatprep.subr.mxu0 0.0
      %1711 = vmatpush2.msra.mxu0 0.0
      %1712 = vmatprep.subr.mxu0 0.0
      %1713 = vmatpush2.msra.mxu0 0.0
      %1714 = vmatprep.subr.mxu0 0.0
      %1715 = vmatpush2.msra.mxu0 0.0
      %1716 = vmatprep.subr.mxu0 0.0
      %1717 = vmatpush2.msra.mxu0 0.0
      %1718 = vmatprep.subr.mxu0 0.0
      %1719 = vmatpush2.msra.mxu0 0.0
      %1720 = vmatprep.subr.mxu0 0.0
      %1721 = vmatpush2.msra.mxu0 0.0
      %1722 = vmatprep.subr.mxu0 0.0
      %1723 = vmatpush2.msra.mxu0 0.0
      %1724 = vmatprep.subr.mxu0 0.0
      %1725 = vmatpush2.msra.mxu0 0.0
      %1726 = vmatprep.subr.mxu0 0.0
      %1727 = vmatpush2.msra.mxu0 0.0
      %1728 = vmatprep.subr.mxu0 0.0
      %1729 = vmatpush2.msra.mxu0 0.0
      %1730 = vmatprep.subr.mxu0 0.0
      %1731 = vmatpush2.msra.mxu0 0.0
      %1732 = vmatprep.subr.mxu0 0.0
      %1733 = vmatpush2.msra.mxu0 0.0
      %1734 = vmatprep.mubr.f32.mxu0 0.0
      %1735 = vmatmul.mubr.f32.gmra.mxu0 %v1668
      %v1736 = vpop.f32.mrf.mxu0
      %v1737 = vadd.f32 %v1664, %v1736
      %v1738 = vpop.f32.mrf.mxu0
      %1739 = vdwg.mxu0
      %s1740 = scalar_lea.vmem %s9, 128
      %v1741 = vld [vmem:[%s1740] sm:$0xff]
      %v1742 = vld [vmem:[%s1740 + $0x8] sm:$0xff]
      %v1743 = vld [vmem:[%s1740 + $0x10] sm:$0xff]
      %v1744 = vld [vmem:[%s1740 + $0x18] sm:$0xff]
      %v1745 = vld [vmem:[%s1740 + $0x20] sm:$0xff]
      %v1746 = vld [vmem:[%s1740 + $0x28] sm:$0xff]
      %v1747 = vld [vmem:[%s1740 + $0x30] sm:$0xff]
      %v1748 = vld [vmem:[%s1740 + $0x38] sm:$0xff]
      %v1750 = vsel %vm1593, %v1563, 0
      %1752 = vmatprep.subr.mxu0 0.0
      %1753 = vmatpush1.msra.mxu0 0.0
      %1754 = vmatprep.subr.mxu0 0.0
      %1755 = vmatpush1.msra.mxu0 0.0
      %1756 = vmatprep.subr.mxu0 0.0
      %1757 = vmatpush1.msra.mxu0 0.0
      %1758 = vmatprep.subr.mxu0 0.0
      %1759 = vmatpush1.msra.mxu0 0.0
      %1760 = vmatprep.subr.mxu0 0.0
      %1761 = vmatpush1.msra.mxu0 0.0
      %1762 = vmatprep.subr.mxu0 0.0
      %1763 = vmatpush1.msra.mxu0 0.0
      %1764 = vmatprep.subr.mxu0 0.0
      %1765 = vmatpush1.msra.mxu0 0.0
      %1766 = vmatprep.subr.mxu0 0.0
      %1767 = vmatpush1.msra.mxu0 0.0
      %1768 = vmatprep.subr.mxu0 0.0
      %1769 = vmatpush1.msra.mxu0 %v1748
      %1770 = vmatprep.subr.mxu0 0.0
      %1771 = vmatpush1.msra.mxu0 %v1747
      %1772 = vmatprep.subr.mxu0 0.0
      %1773 = vmatpush1.msra.mxu0 %v1746
      %1774 = vmatprep.subr.mxu0 0.0
      %1775 = vmatpush1.msra.mxu0 %v1745
      %1776 = vmatprep.subr.mxu0 0.0
      %1777 = vmatpush1.msra.mxu0 %v1744
      %1778 = vmatprep.subr.mxu0 0.0
      %1779 = vmatpush1.msra.mxu0 %v1743
      %1780 = vmatprep.subr.mxu0 0.0
      %1781 = vmatpush1.msra.mxu0 %v1742
      %1782 = vmatprep.subr.mxu0 0.0
      %1783 = vmatpush1.msra.mxu0 %v1741
      %1784 = vmatprep.subr.mxu0 0.0
      %1785 = vmatpush2.msra.mxu0 0.0
      %1786 = vmatprep.subr.mxu0 0.0
      %1787 = vmatpush2.msra.mxu0 0.0
      %1788 = vmatprep.subr.mxu0 0.0
      %1789 = vmatpush2.msra.mxu0 0.0
      %1790 = vmatprep.subr.mxu0 0.0
      %1791 = vmatpush2.msra.mxu0 0.0
      %1792 = vmatprep.subr.mxu0 0.0
      %1793 = vmatpush2.msra.mxu0 0.0
      %1794 = vmatprep.subr.mxu0 0.0
      %1795 = vmatpush2.msra.mxu0 0.0
      %1796 = vmatprep.subr.mxu0 0.0
      %1797 = vmatpush2.msra.mxu0 0.0
      %1798 = vmatprep.subr.mxu0 0.0
      %1799 = vmatpush2.msra.mxu0 0.0
      %1800 = vmatprep.subr.mxu0 0.0
      %1801 = vmatpush2.msra.mxu0 0.0
      %1802 = vmatprep.subr.mxu0 0.0
      %1803 = vmatpush2.msra.mxu0 0.0
      %1804 = vmatprep.subr.mxu0 0.0
      %1805 = vmatpush2.msra.mxu0 0.0
      %1806 = vmatprep.subr.mxu0 0.0
      %1807 = vmatpush2.msra.mxu0 0.0
      %1808 = vmatprep.subr.mxu0 0.0
      %1809 = vmatpush2.msra.mxu0 0.0
      %1810 = vmatprep.subr.mxu0 0.0
      %1811 = vmatpush2.msra.mxu0 0.0
      %1812 = vmatprep.subr.mxu0 0.0
      %1813 = vmatpush2.msra.mxu0 0.0
      %1814 = vmatprep.subr.mxu0 0.0
      %1815 = vmatpush2.msra.mxu0 0.0
      %1816 = vmatprep.mubr.f32.mxu0 0.0
      %1817 = vmatmul.mubr.f32.gmra.mxu0 %v1750
      %v1818 = vpop.f32.mrf.mxu0
      %v1819 = vadd.f32 0.0, %v1818
      %v1820 = vpop.f32.mrf.mxu0
      %1821 = vdwg.mxu0
      %v1822 = vadd.f32 %v1737, %v1819
      %s1823 = scalar_lea.vmem %s9, 192
      %v1824 = vld [vmem:[%s1823] sm:$0xff]
      %v1825 = vld [vmem:[%s1823 + $0x8] sm:$0xff]
      %v1826 = vld [vmem:[%s1823 + $0x10] sm:$0xff]
      %v1827 = vld [vmem:[%s1823 + $0x18] sm:$0xff]
      %v1828 = vld [vmem:[%s1823 + $0x20] sm:$0xff]
      %v1829 = vld [vmem:[%s1823 + $0x28] sm:$0xff]
      %v1830 = vld [vmem:[%s1823 + $0x30] sm:$0xff]
      %v1831 = vld [vmem:[%s1823 + $0x38] sm:$0xff]
      %v1833 = vsel %vm1593, %v1568, 0
      %1835 = vmatprep.subr.mxu0 0.0
      %1836 = vmatpush1.msra.mxu0 0.0
      %1837 = vmatprep.subr.mxu0 0.0
      %1838 = vmatpush1.msra.mxu0 0.0
      %1839 = vmatprep.subr.mxu0 0.0
      %1840 = vmatpush1.msra.mxu0 0.0
      %1841 = vmatprep.subr.mxu0 0.0
      %1842 = vmatpush1.msra.mxu0 0.0
      %1843 = vmatprep.subr.mxu0 0.0
      %1844 = vmatpush1.msra.mxu0 0.0
      %1845 = vmatprep.subr.mxu0 0.0
      %1846 = vmatpush1.msra.mxu0 0.0
      %1847 = vmatprep.subr.mxu0 0.0
      %1848 = vmatpush1.msra.mxu0 0.0
      %1849 = vmatprep.subr.mxu0 0.0
      %1850 = vmatpush1.msra.mxu0 0.0
      %1851 = vmatprep.subr.mxu0 0.0
      %1852 = vmatpush1.msra.mxu0 %v1831
      %1853 = vmatprep.subr.mxu0 0.0
      %1854 = vmatpush1.msra.mxu0 %v1830
      %1855 = vmatprep.subr.mxu0 0.0
      %1856 = vmatpush1.msra.mxu0 %v1829
      %1857 = vmatprep.subr.mxu0 0.0
      %1858 = vmatpush1.msra.mxu0 %v1828
      %1859 = vmatprep.subr.mxu0 0.0
      %1860 = vmatpush1.msra.mxu0 %v1827
      %1861 = vmatprep.subr.mxu0 0.0
      %1862 = vmatpush1.msra.mxu0 %v1826
      %1863 = vmatprep.subr.mxu0 0.0
      %1864 = vmatpush1.msra.mxu0 %v1825
      %1865 = vmatprep.subr.mxu0 0.0
      %1866 = vmatpush1.msra.mxu0 %v1824
      %1867 = vmatprep.subr.mxu0 0.0
      %1868 = vmatpush2.msra.mxu0 0.0
      %1869 = vmatprep.subr.mxu0 0.0
      %1870 = vmatpush2.msra.mxu0 0.0
      %1871 = vmatprep.subr.mxu0 0.0
      %1872 = vmatpush2.msra.mxu0 0.0
      %1873 = vmatprep.subr.mxu0 0.0
      %1874 = vmatpush2.msra.mxu0 0.0
      %1875 = vmatprep.subr.mxu0 0.0
      %1876 = vmatpush2.msra.mxu0 0.0
      %1877 = vmatprep.subr.mxu0 0.0
      %1878 = vmatpush2.msra.mxu0 0.0
      %1879 = vmatprep.subr.mxu0 0.0
      %1880 = vmatpush2.msra.mxu0 0.0
      %1881 = vmatprep.subr.mxu0 0.0
      %1882 = vmatpush2.msra.mxu0 0.0
      %1883 = vmatprep.subr.mxu0 0.0
      %1884 = vmatpush2.msra.mxu0 0.0
      %1885 = vmatprep.subr.mxu0 0.0
      %1886 = vmatpush2.msra.mxu0 0.0
      %1887 = vmatprep.subr.mxu0 0.0
      %1888 = vmatpush2.msra.mxu0 0.0
      %1889 = vmatprep.subr.mxu0 0.0
      %1890 = vmatpush2.msra.mxu0 0.0
      %1891 = vmatprep.subr.mxu0 0.0
      %1892 = vmatpush2.msra.mxu0 0.0
      %1893 = vmatprep.subr.mxu0 0.0
      %1894 = vmatpush2.msra.mxu0 0.0
      %1895 = vmatprep.subr.mxu0 0.0
      %1896 = vmatpush2.msra.mxu0 0.0
      %1897 = vmatprep.subr.mxu0 0.0
      %1898 = vmatpush2.msra.mxu0 0.0
      %1899 = vmatprep.mubr.f32.mxu0 0.0
      %1900 = vmatmul.mubr.f32.gmra.mxu0 %v1833
      %v1901 = vpop.f32.mrf.mxu0
      %v1902 = vadd.f32 0.0, %v1901
      %v1903 = vpop.f32.mrf.mxu0
      %1904 = vdwg.mxu0
      %v1905 = vadd.f32 %v1822, %v1902
      %s1906 = scalar_lea.vmem %s9, 256
      %v1907 = vld [vmem:[%s1906] sm:$0xff]
      %v1908 = vld [vmem:[%s1906 + $0x8] sm:$0xff]
      %v1909 = vld [vmem:[%s1906 + $0x10] sm:$0xff]
      %v1910 = vld [vmem:[%s1906 + $0x18] sm:$0xff]
      %v1911 = vld [vmem:[%s1906 + $0x20] sm:$0xff]
      %v1912 = vld [vmem:[%s1906 + $0x28] sm:$0xff]
      %v1913 = vld [vmem:[%s1906 + $0x30] sm:$0xff]
      %v1914 = vld [vmem:[%s1906 + $0x38] sm:$0xff]
      %v1916 = vsel %vm1593, %v1573, 0
      %1918 = vmatprep.subr.mxu0 0.0
      %1919 = vmatpush1.msra.mxu0 0.0
      %1920 = vmatprep.subr.mxu0 0.0
      %1921 = vmatpush1.msra.mxu0 0.0
      %1922 = vmatprep.subr.mxu0 0.0
      %1923 = vmatpush1.msra.mxu0 0.0
      %1924 = vmatprep.subr.mxu0 0.0
      %1925 = vmatpush1.msra.mxu0 0.0
      %1926 = vmatprep.subr.mxu0 0.0
      %1927 = vmatpush1.msra.mxu0 0.0
      %1928 = vmatprep.subr.mxu0 0.0
      %1929 = vmatpush1.msra.mxu0 0.0
      %1930 = vmatprep.subr.mxu0 0.0
      %1931 = vmatpush1.msra.mxu0 0.0
      %1932 = vmatprep.subr.mxu0 0.0
      %1933 = vmatpush1.msra.mxu0 0.0
      %1934 = vmatprep.subr.mxu0 0.0
      %1935 = vmatpush1.msra.mxu0 %v1914
      %1936 = vmatprep.subr.mxu0 0.0
      %1937 = vmatpush1.msra.mxu0 %v1913
      %1938 = vmatprep.subr.mxu0 0.0
      %1939 = vmatpush1.msra.mxu0 %v1912
      %1940 = vmatprep.subr.mxu0 0.0
      %1941 = vmatpush1.msra.mxu0 %v1911
      %1942 = vmatprep.subr.mxu0 0.0
      %1943 = vmatpush1.msra.mxu0 %v1910
      %1944 = vmatprep.subr.mxu0 0.0
      %1945 = vmatpush1.msra.mxu0 %v1909
      %1946 = vmatprep.subr.mxu0 0.0
      %1947 = vmatpush1.msra.mxu0 %v1908
      %1948 = vmatprep.subr.mxu0 0.0
      %1949 = vmatpush1.msra.mxu0 %v1907
      %1950 = vmatprep.subr.mxu0 0.0
      %1951 = vmatpush2.msra.mxu0 0.0
      %1952 = vmatprep.subr.mxu0 0.0
      %1953 = vmatpush2.msra.mxu0 0.0
      %1954 = vmatprep.subr.mxu0 0.0
      %1955 = vmatpush2.msra.mxu0 0.0
      %1956 = vmatprep.subr.mxu0 0.0
      %1957 = vmatpush2.msra.mxu0 0.0
      %1958 = vmatprep.subr.mxu0 0.0
      %1959 = vmatpush2.msra.mxu0 0.0
      %1960 = vmatprep.subr.mxu0 0.0
      %1961 = vmatpush2.msra.mxu0 0.0
      %1962 = vmatprep.subr.mxu0 0.0
      %1963 = vmatpush2.msra.mxu0 0.0
      %1964 = vmatprep.subr.mxu0 0.0
      %1965 = vmatpush2.msra.mxu0 0.0
      %1966 = vmatprep.subr.mxu0 0.0
      %1967 = vmatpush2.msra.mxu0 0.0
      %1968 = vmatprep.subr.mxu0 0.0
      %1969 = vmatpush2.msra.mxu0 0.0
      %1970 = vmatprep.subr.mxu0 0.0
      %1971 = vmatpush2.msra.mxu0 0.0
      %1972 = vmatprep.subr.mxu0 0.0
      %1973 = vmatpush2.msra.mxu0 0.0
      %1974 = vmatprep.subr.mxu0 0.0
      %1975 = vmatpush2.msra.mxu0 0.0
      %1976 = vmatprep.subr.mxu0 0.0
      %1977 = vmatpush2.msra.mxu0 0.0
      %1978 = vmatprep.subr.mxu0 0.0
      %1979 = vmatpush2.msra.mxu0 0.0
      %1980 = vmatprep.subr.mxu0 0.0
      %1981 = vmatpush2.msra.mxu0 0.0
      %1982 = vmatprep.mubr.f32.mxu0 0.0
      %1983 = vmatmul.mubr.f32.gmra.mxu0 %v1916
      %v1984 = vpop.f32.mrf.mxu0
      %v1985 = vadd.f32 0.0, %v1984
      %v1986 = vpop.f32.mrf.mxu0
      %1987 = vdwg.mxu0
      %v1988 = vadd.f32 %v1905, %v1985
      %v1989 = vld [vmem:[%s10] sm:$0x1]
      %v1991 = vlaneseq
      %v1992 = vshrl.u32 %v1991, 7
      %v1993 = vsub.s32 0, %v1992
      %v1994 = vrot.slane %v1989, %v1993
      %v1996 = vadd.f32 %v1988, %v1994
      %v1997 = vmax.f32 %v1996, 0.0
      %v1998 = vld [vmem:[%s11] sm:$0xff]
      %v1999 = vld [vmem:[%s11 + $0x8] sm:$0xff]
      %v2000 = vld [vmem:[%s11 + $0x10] sm:$0xff]
      %v2001 = vld [vmem:[%s11 + $0x18] sm:$0xff]
      %v2002 = vld [vmem:[%s11 + $0x20] sm:$0xff]
      %v2003 = vld [vmem:[%s11 + $0x28] sm:$0xff]
      %v2004 = vld [vmem:[%s11 + $0x30] sm:$0xff]
      %v2005 = vld [vmem:[%s11 + $0x38] sm:$0xff]
      %v2006 = vld [vmem:[%s11 + $0x40] sm:$0xff]
      %v2007 = vld [vmem:[%s11 + $0x48] sm:$0xff]
      %v2009 = vsel %vm1470, %v1998, 0
      %v2012 = vsel %vm1470, %v1999, 0
      %v2015 = vsel %vm1470, %v2000, 0
      %v2018 = vsel %vm1470, %v2001, 0
      %v2021 = vsel %vm1470, %v2002, 0
      %v2024 = vsel %vm1470, %v2003, 0
      %v2027 = vsel %vm1470, %v2004, 0
      %v2030 = vsel %vm1470, %v2005, 0
      %v2033 = vsel %vm1470, %v2006, 0
      %v2036 = vsel %vm1470, %v2007, 0
      %2038 = vmatprep.subr.mxu0 0.0
      %2039 = vmatpush1.msra.mxu0 0.0
      %2040 = vmatprep.subr.mxu0 0.0
      %2041 = vmatpush1.msra.mxu0 0.0
      %2042 = vmatprep.subr.mxu0 0.0
      %2043 = vmatpush1.msra.mxu0 0.0
      %2044 = vmatprep.subr.mxu0 0.0
      %2045 = vmatpush1.msra.mxu0 0.0
      %2046 = vmatprep.subr.mxu0 0.0
      %2047 = vmatpush1.msra.mxu0 0.0
      %2048 = vmatprep.subr.mxu0 0.0
      %2049 = vmatpush1.msra.mxu0 0.0
      %2050 = vmatprep.subr.mxu0 0.0
      %2051 = vmatpush1.msra.mxu0 0.0
      %2052 = vmatprep.subr.mxu0 0.0
      %2053 = vmatpush1.msra.mxu0 0.0
      %2054 = vmatprep.subr.mxu0 0.0
      %2055 = vmatpush1.msra.mxu0 0.0
      %2056 = vmatprep.subr.mxu0 0.0
      %2057 = vmatpush1.msra.mxu0 0.0
      %2058 = vmatprep.subr.mxu0 0.0
      %2059 = vmatpush1.msra.mxu0 0.0
      %2060 = vmatprep.subr.mxu0 0.0
      %2061 = vmatpush1.msra.mxu0 0.0
      %2062 = vmatprep.subr.mxu0 0.0
      %2063 = vmatpush1.msra.mxu0 0.0
      %2064 = vmatprep.subr.mxu0 0.0
      %2065 = vmatpush1.msra.mxu0 0.0
      %2066 = vmatprep.subr.mxu0 0.0
      %2067 = vmatpush1.msra.mxu0 0.0
      %2068 = vmatprep.subr.mxu0 0.0
      %2069 = vmatpush1.msra.mxu0 %v1997
      %2070 = vmatprep.subr.mxu0 0.0
      %2071 = vmatpush2.msra.mxu0 0.0
      %2072 = vmatprep.subr.mxu0 0.0
      %2073 = vmatpush2.msra.mxu0 0.0
      %2074 = vmatprep.subr.mxu0 0.0
      %2075 = vmatpush2.msra.mxu0 0.0
      %2076 = vmatprep.subr.mxu0 0.0
      %2077 = vmatpush2.msra.mxu0 0.0
      %2078 = vmatprep.subr.mxu0 0.0
      %2079 = vmatpush2.msra.mxu0 0.0
      %2080 = vmatprep.subr.mxu0 0.0
      %2081 = vmatpush2.msra.mxu0 0.0
      %2082 = vmatprep.subr.mxu0 0.0
      %2083 = vmatpush2.msra.mxu0 0.0
      %2084 = vmatprep.subr.mxu0 0.0
      %2085 = vmatpush2.msra.mxu0 0.0
      %2086 = vmatprep.subr.mxu0 0.0
      %2087 = vmatpush2.msra.mxu0 0.0
      %2088 = vmatprep.subr.mxu0 0.0
      %2089 = vmatpush2.msra.mxu0 0.0
      %2090 = vmatprep.subr.mxu0 0.0
      %2091 = vmatpush2.msra.mxu0 0.0
      %2092 = vmatprep.subr.mxu0 0.0
      %2093 = vmatpush2.msra.mxu0 0.0
      %2094 = vmatprep.subr.mxu0 0.0
      %2095 = vmatpush2.msra.mxu0 0.0
      %2096 = vmatprep.subr.mxu0 0.0
      %2097 = vmatpush2.msra.mxu0 0.0
      %2098 = vmatprep.subr.mxu0 0.0
      %2099 = vmatpush2.msra.mxu0 0.0
      %2100 = vmatprep.subr.mxu0 0.0
      %2101 = vmatpush2.msra.mxu0 0.0
      %2102 = vmatprep.mubr.f32.mxu0 0.0
      %2103 = vmatmul.mubr.f32.gmra.mxu0 %v2009
      %v2104 = vpop.f32.mrf.mxu0
      %v2105 = vadd.f32 0.0, %v2104
      %v2106 = vpop.f32.mrf.mxu0
      %2107 = vmatprep.mubr.f32.mxu0 0.0
      %2108 = vmatmul.mubr.f32.gmra.mxu0 %v2012
      %v2109 = vpop.f32.mrf.mxu0
      %v2110 = vadd.f32 0.0, %v2109
      %v2111 = vpop.f32.mrf.mxu0
      %2112 = vmatprep.mubr.f32.mxu0 0.0
      %2113 = vmatmul.mubr.f32.gmra.mxu0 %v2015
      %v2114 = vpop.f32.mrf.mxu0
      %v2115 = vadd.f32 0.0, %v2114
      %v2116 = vpop.f32.mrf.mxu0
      %2117 = vmatprep.mubr.f32.mxu0 0.0
      %2118 = vmatmul.mubr.f32.gmra.mxu0 %v2018
      %v2119 = vpop.f32.mrf.mxu0
      %v2120 = vadd.f32 0.0, %v2119
      %v2121 = vpop.f32.mrf.mxu0
      %2122 = vmatprep.mubr.f32.mxu0 0.0
      %2123 = vmatmul.mubr.f32.gmra.mxu0 %v2021
      %v2124 = vpop.f32.mrf.mxu0
      %v2125 = vadd.f32 0.0, %v2124
      %v2126 = vpop.f32.mrf.mxu0
      %2127 = vmatprep.mubr.f32.mxu0 0.0
      %2128 = vmatmul.mubr.f32.gmra.mxu0 %v2024
      %v2129 = vpop.f32.mrf.mxu0
      %v2130 = vadd.f32 0.0, %v2129
      %v2131 = vpop.f32.mrf.mxu0
      %2132 = vmatprep.mubr.f32.mxu0 0.0
      %2133 = vmatmul.mubr.f32.gmra.mxu0 %v2027
      %v2134 = vpop.f32.mrf.mxu0
      %v2135 = vadd.f32 0.0, %v2134
      %v2136 = vpop.f32.mrf.mxu0
      %2137 = vmatprep.mubr.f32.mxu0 0.0
      %2138 = vmatmul.mubr.f32.gmra.mxu0 %v2030
      %v2139 = vpop.f32.mrf.mxu0
      %v2140 = vadd.f32 0.0, %v2139
      %v2141 = vpop.f32.mrf.mxu0
      %2142 = vmatprep.mubr.f32.mxu0 0.0
      %2143 = vmatmul.mubr.f32.gmra.mxu0 %v2033
      %v2144 = vpop.f32.mrf.mxu0
      %v2145 = vadd.f32 0.0, %v2144
      %v2146 = vpop.f32.mrf.mxu0
      %2147 = vmatprep.mubr.f32.mxu0 0.0
      %2148 = vmatmul.mubr.f32.gmra.mxu0 %v2036
      %v2149 = vpop.f32.mrf.mxu0
      %v2150 = vadd.f32 0.0, %v2149
      %v2151 = vpop.f32.mrf.mxu0
      %2152 = vdwg.mxu0
      %v2153 = vld [vmem:[%s12] sm:$0xff]
      %v2154 = vld [vmem:[%s12 + $0x8] sm:$0xff]
      %v2155 = vld [vmem:[%s12 + $0x10] sm:$0xff]
      %v2156 = vld [vmem:[%s12 + $0x18] sm:$0xff]
      %v2157 = vld [vmem:[%s12 + $0x20] sm:$0xff]
      %v2158 = vld [vmem:[%s12 + $0x28] sm:$0xff]
      %v2159 = vld [vmem:[%s12 + $0x30] sm:$0xff]
      %v2160 = vld [vmem:[%s12 + $0x38] sm:$0xff]
      %v2161 = vld [vmem:[%s12 + $0x40] sm:$0xff]
      %v2162 = vld [vmem:[%s12 + $0x48] sm:$0xff]
      %v2163 = vld [vmem:[%s12 + $0x50] sm:$0xff]
      %v2164 = vld [vmem:[%s12 + $0x58] sm:$0xff]
      %v2165 = vld [vmem:[%s12 + $0x60] sm:$0xff]
      %v2166 = vld [vmem:[%s12 + $0x68] sm:$0xff]
      %v2167 = vld [vmem:[%s12 + $0x70] sm:$0xff]
      %v2168 = vld [vmem:[%s12 + $0x78] sm:$0xff]
      %s2169 = scalar_lea.vmem %s12, 128
      %v2170 = vld [vmem:[%s2169] sm:$0xff]
      %v2171 = vld [vmem:[%s2169 + $0x8] sm:$0xff]
      %v2172 = vld [vmem:[%s2169 + $0x10] sm:$0xff]
      %v2173 = vld [vmem:[%s2169 + $0x18] sm:$0xff]
      %v2174 = vld [vmem:[%s2169 + $0x20] sm:$0xff]
      %v2175 = vld [vmem:[%s2169 + $0x28] sm:$0xff]
      %v2176 = vld [vmem:[%s2169 + $0x30] sm:$0xff]
      %v2177 = vld [vmem:[%s2169 + $0x38] sm:$0xff]
      %v2178 = vld [vmem:[%s2169 + $0x40] sm:$0xff]
      %v2179 = vld [vmem:[%s2169 + $0x48] sm:$0xff]
      %v2180 = vld [vmem:[%s2169 + $0x50] sm:$0xff]
      %v2181 = vld [vmem:[%s2169 + $0x58] sm:$0xff]
      %v2182 = vld [vmem:[%s2169 + $0x60] sm:$0xff]
      %v2183 = vld [vmem:[%s2169 + $0x68] sm:$0xff]
      %v2184 = vld [vmem:[%s2169 + $0x70] sm:$0xff]
      %v2185 = vld [vmem:[%s2169 + $0x78] sm:$0xff]
      %2186 = vmatprep.subr.mxu0 0.0
      %2187 = vmatpush1.msra.mxu0 %v2185
      %2188 = vmatprep.subr.mxu0 0.0
      %2189 = vmatpush1.msra.mxu0 %v2184
      %2190 = vmatprep.subr.mxu0 0.0
      %2191 = vmatpush1.msra.mxu0 %v2183
      %2192 = vmatprep.subr.mxu0 0.0
      %2193 = vmatpush1.msra.mxu0 %v2182
      %2194 = vmatprep.subr.mxu0 0.0
      %2195 = vmatpush1.msra.mxu0 %v2181
      %2196 = vmatprep.subr.mxu0 0.0
      %2197 = vmatpush1.msra.mxu0 %v2180
      %2198 = vmatprep.subr.mxu0 0.0
      %2199 = vmatpush1.msra.mxu0 %v2179
      %2200 = vmatprep.subr.mxu0 0.0
      %2201 = vmatpush1.msra.mxu0 %v2178
      %2202 = vmatprep.subr.mxu0 0.0
      %2203 = vmatpush1.msra.mxu0 %v2177
      %2204 = vmatprep.subr.mxu0 0.0
      %2205 = vmatpush1.msra.mxu0 %v2176
      %2206 = vmatprep.subr.mxu0 0.0
      %2207 = vmatpush1.msra.mxu0 %v2175
      %2208 = vmatprep.subr.mxu0 0.0
      %2209 = vmatpush1.msra.mxu0 %v2174
      %2210 = vmatprep.subr.mxu0 0.0
      %2211 = vmatpush1.msra.mxu0 %v2173
      %2212 = vmatprep.subr.mxu0 0.0
      %2213 = vmatpush1.msra.mxu0 %v2172
      %2214 = vmatprep.subr.mxu0 0.0
      %2215 = vmatpush1.msra.mxu0 %v2171
      %2216 = vmatprep.subr.mxu0 0.0
      %2217 = vmatpush1.msra.mxu0 %v2170
      %2218 = vmatprep.subr.mxu0 0.0
      %2219 = vmatpush2.msra.mxu0 0.0
      %2220 = vmatprep.subr.mxu0 0.0
      %2221 = vmatpush2.msra.mxu0 0.0
      %2222 = vmatprep.subr.mxu0 0.0
      %2223 = vmatpush2.msra.mxu0 0.0
      %2224 = vmatprep.subr.mxu0 0.0
      %2225 = vmatpush2.msra.mxu0 0.0
      %2226 = vmatprep.subr.mxu0 0.0
      %2227 = vmatpush2.msra.mxu0 0.0
      %2228 = vmatprep.subr.mxu0 0.0
      %2229 = vmatpush2.msra.mxu0 0.0
      %2230 = vmatprep.subr.mxu0 0.0
      %2231 = vmatpush2.msra.mxu0 0.0
      %2232 = vmatprep.subr.mxu0 0.0
      %2233 = vmatpush2.msra.mxu0 0.0
      %2234 = vmatprep.subr.mxu0 0.0
      %2235 = vmatpush2.msra.mxu0 0.0
      %2236 = vmatprep.subr.mxu0 0.0
      %2237 = vmatpush2.msra.mxu0 0.0
      %2238 = vmatprep.subr.mxu0 0.0
      %2239 = vmatpush2.msra.mxu0 0.0
      %2240 = vmatprep.subr.mxu0 0.0
      %2241 = vmatpush2.msra.mxu0 0.0
      %2242 = vmatprep.subr.mxu0 0.0
      %2243 = vmatpush2.msra.mxu0 0.0
      %2244 = vmatprep.subr.mxu0 0.0
      %2245 = vmatpush2.msra.mxu0 0.0
      %2246 = vmatprep.subr.mxu0 0.0
      %2247 = vmatpush2.msra.mxu0 0.0
      %2248 = vmatprep.subr.mxu0 0.0
      %2249 = vmatpush2.msra.mxu0 0.0
      %2250 = vmatprep.mubr.f32.mxu0 0.0
      %2251 = vmatmul.mubr.f32.gmra.mxu0 %v2115
      %v2252 = vpop.f32.mrf.mxu0
      %v2253 = vadd.f32 0.0, %v2252
      %v2254 = vpop.f32.mrf.mxu0
      %2255 = vmatprep.mubr.f32.mxu0 0.0
      %2256 = vmatmul.mubr.f32.gmra.mxu0 %v2120
      %v2257 = vpop.f32.mrf.mxu0
      %v2258 = vadd.f32 0.0, %v2257
      %v2259 = vpop.f32.mrf.mxu0
      %2260 = vdwg.mxu0
      %2261 = vmatprep.subr.mxu0 0.0
      %2262 = vmatpush1.msra.mxu0 %v2168
      %2263 = vmatprep.subr.mxu0 0.0
      %2264 = vmatpush1.msra.mxu0 %v2167
      %2265 = vmatprep.subr.mxu0 0.0
      %2266 = vmatpush1.msra.mxu0 %v2166
      %2267 = vmatprep.subr.mxu0 0.0
      %2268 = vmatpush1.msra.mxu0 %v2165
      %2269 = vmatprep.subr.mxu0 0.0
      %2270 = vmatpush1.msra.mxu0 %v2164
      %2271 = vmatprep.subr.mxu0 0.0
      %2272 = vmatpush1.msra.mxu0 %v2163
      %2273 = vmatprep.subr.mxu0 0.0
      %2274 = vmatpush1.msra.mxu0 %v2162
      %2275 = vmatprep.subr.mxu0 0.0
      %2276 = vmatpush1.msra.mxu0 %v2161
      %2277 = vmatprep.subr.mxu0 0.0
      %2278 = vmatpush1.msra.mxu0 %v2160
      %2279 = vmatprep.subr.mxu0 0.0
      %2280 = vmatpush1.msra.mxu0 %v2159
      %2281 = vmatprep.subr.mxu0 0.0
      %2282 = vmatpush1.msra.mxu0 %v2158
      %2283 = vmatprep.subr.mxu0 0.0
      %2284 = vmatpush1.msra.mxu0 %v2157
      %2285 = vmatprep.subr.mxu0 0.0
      %2286 = vmatpush1.msra.mxu0 %v2156
      %2287 = vmatprep.subr.mxu0 0.0
      %2288 = vmatpush1.msra.mxu0 %v2155
      %2289 = vmatprep.subr.mxu0 0.0
      %2290 = vmatpush1.msra.mxu0 %v2154
      %2291 = vmatprep.subr.mxu0 0.0
      %2292 = vmatpush1.msra.mxu0 %v2153
      %2293 = vmatprep.subr.mxu0 0.0
      %2294 = vmatpush2.msra.mxu0 0.0
      %2295 = vmatprep.subr.mxu0 0.0
      %2296 = vmatpush2.msra.mxu0 0.0
      %2297 = vmatprep.subr.mxu0 0.0
      %2298 = vmatpush2.msra.mxu0 0.0
      %2299 = vmatprep.subr.mxu0 0.0
      %2300 = vmatpush2.msra.mxu0 0.0
      %2301 = vmatprep.subr.mxu0 0.0
      %2302 = vmatpush2.msra.mxu0 0.0
      %2303 = vmatprep.subr.mxu0 0.0
      %2304 = vmatpush2.msra.mxu0 0.0
      %2305 = vmatprep.subr.mxu0 0.0
      %2306 = vmatpush2.msra.mxu0 0.0
      %2307 = vmatprep.subr.mxu0 0.0
      %2308 = vmatpush2.msra.mxu0 0.0
      %2309 = vmatprep.subr.mxu0 0.0
      %2310 = vmatpush2.msra.mxu0 0.0
      %2311 = vmatprep.subr.mxu0 0.0
      %2312 = vmatpush2.msra.mxu0 0.0
      %2313 = vmatprep.subr.mxu0 0.0
      %2314 = vmatpush2.msra.mxu0 0.0
      %2315 = vmatprep.subr.mxu0 0.0
      %2316 = vmatpush2.msra.mxu0 0.0
      %2317 = vmatprep.subr.mxu0 0.0
      %2318 = vmatpush2.msra.mxu0 0.0
      %2319 = vmatprep.subr.mxu0 0.0
      %2320 = vmatpush2.msra.mxu0 0.0
      %2321 = vmatprep.subr.mxu0 0.0
      %2322 = vmatpush2.msra.mxu0 0.0
      %2323 = vmatprep.subr.mxu0 0.0
      %2324 = vmatpush2.msra.mxu0 0.0
      %2325 = vmatprep.mubr.f32.mxu0 0.0
      %2326 = vmatmul.mubr.f32.gmra.mxu0 %v2105
      %v2327 = vpop.f32.mrf.mxu0
      %v2328 = vadd.f32 %v2253, %v2327
      %v2329 = vpop.f32.mrf.mxu0
      %2330 = vmatprep.mubr.f32.mxu0 0.0
      %2331 = vmatmul.mubr.f32.gmra.mxu0 %v2110
      %v2332 = vpop.f32.mrf.mxu0
      %v2333 = vadd.f32 %v2258, %v2332
      %v2334 = vpop.f32.mrf.mxu0
      %2335 = vdwg.mxu0
      %s2336 = scalar_lea.vmem %s12, 256
      %v2337 = vld [vmem:[%s2336] sm:$0xff]
      %v2338 = vld [vmem:[%s2336 + $0x8] sm:$0xff]
      %v2339 = vld [vmem:[%s2336 + $0x10] sm:$0xff]
      %v2340 = vld [vmem:[%s2336 + $0x18] sm:$0xff]
      %v2341 = vld [vmem:[%s2336 + $0x20] sm:$0xff]
      %v2342 = vld [vmem:[%s2336 + $0x28] sm:$0xff]
      %v2343 = vld [vmem:[%s2336 + $0x30] sm:$0xff]
      %v2344 = vld [vmem:[%s2336 + $0x38] sm:$0xff]
      %v2345 = vld [vmem:[%s2336 + $0x40] sm:$0xff]
      %v2346 = vld [vmem:[%s2336 + $0x48] sm:$0xff]
      %v2347 = vld [vmem:[%s2336 + $0x50] sm:$0xff]
      %v2348 = vld [vmem:[%s2336 + $0x58] sm:$0xff]
      %v2349 = vld [vmem:[%s2336 + $0x60] sm:$0xff]
      %v2350 = vld [vmem:[%s2336 + $0x68] sm:$0xff]
      %v2351 = vld [vmem:[%s2336 + $0x70] sm:$0xff]
      %v2352 = vld [vmem:[%s2336 + $0x78] sm:$0xff]
      %2353 = vmatprep.subr.mxu0 0.0
      %2354 = vmatpush1.msra.mxu0 %v2352
      %2355 = vmatprep.subr.mxu0 0.0
      %2356 = vmatpush1.msra.mxu0 %v2351
      %2357 = vmatprep.subr.mxu0 0.0
      %2358 = vmatpush1.msra.mxu0 %v2350
      %2359 = vmatprep.subr.mxu0 0.0
      %2360 = vmatpush1.msra.mxu0 %v2349
      %2361 = vmatprep.subr.mxu0 0.0
      %2362 = vmatpush1.msra.mxu0 %v2348
      %2363 = vmatprep.subr.mxu0 0.0
      %2364 = vmatpush1.msra.mxu0 %v2347
      %2365 = vmatprep.subr.mxu0 0.0
      %2366 = vmatpush1.msra.mxu0 %v2346
      %2367 = vmatprep.subr.mxu0 0.0
      %2368 = vmatpush1.msra.mxu0 %v2345
      %2369 = vmatprep.subr.mxu0 0.0
      %2370 = vmatpush1.msra.mxu0 %v2344
      %2371 = vmatprep.subr.mxu0 0.0
      %2372 = vmatpush1.msra.mxu0 %v2343
      %2373 = vmatprep.subr.mxu0 0.0
      %2374 = vmatpush1.msra.mxu0 %v2342
      %2375 = vmatprep.subr.mxu0 0.0
      %2376 = vmatpush1.msra.mxu0 %v2341
      %2377 = vmatprep.subr.mxu0 0.0
      %2378 = vmatpush1.msra.mxu0 %v2340
      %2379 = vmatprep.subr.mxu0 0.0
      %2380 = vmatpush1.msra.mxu0 %v2339
      %2381 = vmatprep.subr.mxu0 0.0
      %2382 = vmatpush1.msra.mxu0 %v2338
      %2383 = vmatprep.subr.mxu0 0.0
      %2384 = vmatpush1.msra.mxu0 %v2337
      %2385 = vmatprep.subr.mxu0 0.0
      %2386 = vmatpush2.msra.mxu0 0.0
      %2387 = vmatprep.subr.mxu0 0.0
      %2388 = vmatpush2.msra.mxu0 0.0
      %2389 = vmatprep.subr.mxu0 0.0
      %2390 = vmatpush2.msra.mxu0 0.0
      %2391 = vmatprep.subr.mxu0 0.0
      %2392 = vmatpush2.msra.mxu0 0.0
      %2393 = vmatprep.subr.mxu0 0.0
      %2394 = vmatpush2.msra.mxu0 0.0
      %2395 = vmatprep.subr.mxu0 0.0
      %2396 = vmatpush2.msra.mxu0 0.0
      %2397 = vmatprep.subr.mxu0 0.0
      %2398 = vmatpush2.msra.mxu0 0.0
      %2399 = vmatprep.subr.mxu0 0.0
      %2400 = vmatpush2.msra.mxu0 0.0
      %2401 = vmatprep.subr.mxu0 0.0
      %2402 = vmatpush2.msra.mxu0 0.0
      %2403 = vmatprep.subr.mxu0 0.0
      %2404 = vmatpush2.msra.mxu0 0.0
      %2405 = vmatprep.subr.mxu0 0.0
      %2406 = vmatpush2.msra.mxu0 0.0
      %2407 = vmatprep.subr.mxu0 0.0
      %2408 = vmatpush2.msra.mxu0 0.0
      %2409 = vmatprep.subr.mxu0 0.0
      %2410 = vmatpush2.msra.mxu0 0.0
      %2411 = vmatprep.subr.mxu0 0.0
      %2412 = vmatpush2.msra.mxu0 0.0
      %2413 = vmatprep.subr.mxu0 0.0
      %2414 = vmatpush2.msra.mxu0 0.0
      %2415 = vmatprep.subr.mxu0 0.0
      %2416 = vmatpush2.msra.mxu0 0.0
      %2417 = vmatprep.mubr.f32.mxu0 0.0
      %2418 = vmatmul.mubr.f32.gmra.mxu0 %v2125
      %v2419 = vpop.f32.mrf.mxu0
      %v2420 = vadd.f32 0.0, %v2419
      %v2421 = vpop.f32.mrf.mxu0
      %2422 = vmatprep.mubr.f32.mxu0 0.0
      %2423 = vmatmul.mubr.f32.gmra.mxu0 %v2130
      %v2424 = vpop.f32.mrf.mxu0
      %v2425 = vadd.f32 0.0, %v2424
      %v2426 = vpop.f32.mrf.mxu0
      %2427 = vdwg.mxu0
      %v2428 = vadd.f32 %v2328, %v2420
      %v2429 = vadd.f32 %v2333, %v2425
      %s2430 = scalar_lea.vmem %s12, 384
      %v2431 = vld [vmem:[%s2430] sm:$0xff]
      %v2432 = vld [vmem:[%s2430 + $0x8] sm:$0xff]
      %v2433 = vld [vmem:[%s2430 + $0x10] sm:$0xff]
      %v2434 = vld [vmem:[%s2430 + $0x18] sm:$0xff]
      %v2435 = vld [vmem:[%s2430 + $0x20] sm:$0xff]
      %v2436 = vld [vmem:[%s2430 + $0x28] sm:$0xff]
      %v2437 = vld [vmem:[%s2430 + $0x30] sm:$0xff]
      %v2438 = vld [vmem:[%s2430 + $0x38] sm:$0xff]
      %v2439 = vld [vmem:[%s2430 + $0x40] sm:$0xff]
      %v2440 = vld [vmem:[%s2430 + $0x48] sm:$0xff]
      %v2441 = vld [vmem:[%s2430 + $0x50] sm:$0xff]
      %v2442 = vld [vmem:[%s2430 + $0x58] sm:$0xff]
      %v2443 = vld [vmem:[%s2430 + $0x60] sm:$0xff]
      %v2444 = vld [vmem:[%s2430 + $0x68] sm:$0xff]
      %v2445 = vld [vmem:[%s2430 + $0x70] sm:$0xff]
      %v2446 = vld [vmem:[%s2430 + $0x78] sm:$0xff]
      %2447 = vmatprep.subr.mxu0 0.0
      %2448 = vmatpush1.msra.mxu0 %v2446
      %2449 = vmatprep.subr.mxu0 0.0
      %2450 = vmatpush1.msra.mxu0 %v2445
      %2451 = vmatprep.subr.mxu0 0.0
      %2452 = vmatpush1.msra.mxu0 %v2444
      %2453 = vmatprep.subr.mxu0 0.0
      %2454 = vmatpush1.msra.mxu0 %v2443
      %2455 = vmatprep.subr.mxu0 0.0
      %2456 = vmatpush1.msra.mxu0 %v2442
      %2457 = vmatprep.subr.mxu0 0.0
      %2458 = vmatpush1.msra.mxu0 %v2441
      %2459 = vmatprep.subr.mxu0 0.0
      %2460 = vmatpush1.msra.mxu0 %v2440
      %2461 = vmatprep.subr.mxu0 0.0
      %2462 = vmatpush1.msra.mxu0 %v2439
      %2463 = vmatprep.subr.mxu0 0.0
      %2464 = vmatpush1.msra.mxu0 %v2438
      %2465 = vmatprep.subr.mxu0 0.0
      %2466 = vmatpush1.msra.mxu0 %v2437
      %2467 = vmatprep.subr.mxu0 0.0
      %2468 = vmatpush1.msra.mxu0 %v2436
      %2469 = vmatprep.subr.mxu0 0.0
      %2470 = vmatpush1.msra.mxu0 %v2435
      %2471 = vmatprep.subr.mxu0 0.0
      %2472 = vmatpush1.msra.mxu0 %v2434
      %2473 = vmatprep.subr.mxu0 0.0
      %2474 = vmatpush1.msra.mxu0 %v2433
      %2475 = vmatprep.subr.mxu0 0.0
      %2476 = vmatpush1.msra.mxu0 %v2432
      %2477 = vmatprep.subr.mxu0 0.0
      %2478 = vmatpush1.msra.mxu0 %v2431
      %2479 = vmatprep.subr.mxu0 0.0
      %2480 = vmatpush2.msra.mxu0 0.0
      %2481 = vmatprep.subr.mxu0 0.0
      %2482 = vmatpush2.msra.mxu0 0.0
      %2483 = vmatprep.subr.mxu0 0.0
      %2484 = vmatpush2.msra.mxu0 0.0
      %2485 = vmatprep.subr.mxu0 0.0
      %2486 = vmatpush2.msra.mxu0 0.0
      %2487 = vmatprep.subr.mxu0 0.0
      %2488 = vmatpush2.msra.mxu0 0.0
      %2489 = vmatprep.subr.mxu0 0.0
      %2490 = vmatpush2.msra.mxu0 0.0
      %2491 = vmatprep.subr.mxu0 0.0
      %2492 = vmatpush2.msra.mxu0 0.0
      %2493 = vmatprep.subr.mxu0 0.0
      %2494 = vmatpush2.msra.mxu0 0.0
      %2495 = vmatprep.subr.mxu0 0.0
      %2496 = vmatpush2.msra.mxu0 0.0
      %2497 = vmatprep.subr.mxu0 0.0
      %2498 = vmatpush2.msra.mxu0 0.0
      %2499 = vmatprep.subr.mxu0 0.0
      %2500 = vmatpush2.msra.mxu0 0.0
      %2501 = vmatprep.subr.mxu0 0.0
      %2502 = vmatpush2.msra.mxu0 0.0
      %2503 = vmatprep.subr.mxu0 0.0
      %2504 = vmatpush2.msra.mxu0 0.0
      %2505 = vmatprep.subr.mxu0 0.0
      %2506 = vmatpush2.msra.mxu0 0.0
      %2507 = vmatprep.subr.mxu0 0.0
      %2508 = vmatpush2.msra.mxu0 0.0
      %2509 = vmatprep.subr.mxu0 0.0
      %2510 = vmatpush2.msra.mxu0 0.0
      %2511 = vmatprep.mubr.f32.mxu0 0.0
      %2512 = vmatmul.mubr.f32.gmra.mxu0 %v2135
      %v2513 = vpop.f32.mrf.mxu0
      %v2514 = vadd.f32 0.0, %v2513
      %v2515 = vpop.f32.mrf.mxu0
      %2516 = vmatprep.mubr.f32.mxu0 0.0
      %2517 = vmatmul.mubr.f32.gmra.mxu0 %v2140
      %v2518 = vpop.f32.mrf.mxu0
      %v2519 = vadd.f32 0.0, %v2518
      %v2520 = vpop.f32.mrf.mxu0
      %2521 = vdwg.mxu0
      %v2522 = vadd.f32 %v2428, %v2514
      %v2523 = vadd.f32 %v2429, %v2519
      %s2524 = scalar_lea.vmem %s12, 512
      %v2525 = vld [vmem:[%s2524] sm:$0xff]
      %v2526 = vld [vmem:[%s2524 + $0x8] sm:$0xff]
      %v2527 = vld [vmem:[%s2524 + $0x10] sm:$0xff]
      %v2528 = vld [vmem:[%s2524 + $0x18] sm:$0xff]
      %v2529 = vld [vmem:[%s2524 + $0x20] sm:$0xff]
      %v2530 = vld [vmem:[%s2524 + $0x28] sm:$0xff]
      %v2531 = vld [vmem:[%s2524 + $0x30] sm:$0xff]
      %v2532 = vld [vmem:[%s2524 + $0x38] sm:$0xff]
      %v2533 = vld [vmem:[%s2524 + $0x40] sm:$0xff]
      %v2534 = vld [vmem:[%s2524 + $0x48] sm:$0xff]
      %v2535 = vld [vmem:[%s2524 + $0x50] sm:$0xff]
      %v2536 = vld [vmem:[%s2524 + $0x58] sm:$0xff]
      %v2537 = vld [vmem:[%s2524 + $0x60] sm:$0xff]
      %v2538 = vld [vmem:[%s2524 + $0x68] sm:$0xff]
      %v2539 = vld [vmem:[%s2524 + $0x70] sm:$0xff]
      %v2540 = vld [vmem:[%s2524 + $0x78] sm:$0xff]
      %2541 = vmatprep.subr.mxu0 0.0
      %2542 = vmatpush1.msra.mxu0 %v2540
      %2543 = vmatprep.subr.mxu0 0.0
      %2544 = vmatpush1.msra.mxu0 %v2539
      %2545 = vmatprep.subr.mxu0 0.0
      %2546 = vmatpush1.msra.mxu0 %v2538
      %2547 = vmatprep.subr.mxu0 0.0
      %2548 = vmatpush1.msra.mxu0 %v2537
      %2549 = vmatprep.subr.mxu0 0.0
      %2550 = vmatpush1.msra.mxu0 %v2536
      %2551 = vmatprep.subr.mxu0 0.0
      %2552 = vmatpush1.msra.mxu0 %v2535
      %2553 = vmatprep.subr.mxu0 0.0
      %2554 = vmatpush1.msra.mxu0 %v2534
      %2555 = vmatprep.subr.mxu0 0.0
      %2556 = vmatpush1.msra.mxu0 %v2533
      %2557 = vmatprep.subr.mxu0 0.0
      %2558 = vmatpush1.msra.mxu0 %v2532
      %2559 = vmatprep.subr.mxu0 0.0
      %2560 = vmatpush1.msra.mxu0 %v2531
      %2561 = vmatprep.subr.mxu0 0.0
      %2562 = vmatpush1.msra.mxu0 %v2530
      %2563 = vmatprep.subr.mxu0 0.0
      %2564 = vmatpush1.msra.mxu0 %v2529
      %2565 = vmatprep.subr.mxu0 0.0
      %2566 = vmatpush1.msra.mxu0 %v2528
      %2567 = vmatprep.subr.mxu0 0.0
      %2568 = vmatpush1.msra.mxu0 %v2527
      %2569 = vmatprep.subr.mxu0 0.0
      %2570 = vmatpush1.msra.mxu0 %v2526
      %2571 = vmatprep.subr.mxu0 0.0
      %2572 = vmatpush1.msra.mxu0 %v2525
      %2573 = vmatprep.subr.mxu0 0.0
      %2574 = vmatpush2.msra.mxu0 0.0
      %2575 = vmatprep.subr.mxu0 0.0
      %2576 = vmatpush2.msra.mxu0 0.0
      %2577 = vmatprep.subr.mxu0 0.0
      %2578 = vmatpush2.msra.mxu0 0.0
      %2579 = vmatprep.subr.mxu0 0.0
      %2580 = vmatpush2.msra.mxu0 0.0
      %2581 = vmatprep.subr.mxu0 0.0
      %2582 = vmatpush2.msra.mxu0 0.0
      %2583 = vmatprep.subr.mxu0 0.0
      %2584 = vmatpush2.msra.mxu0 0.0
      %2585 = vmatprep.subr.mxu0 0.0
      %2586 = vmatpush2.msra.mxu0 0.0
      %2587 = vmatprep.subr.mxu0 0.0
      %2588 = vmatpush2.msra.mxu0 0.0
      %2589 = vmatprep.subr.mxu0 0.0
      %2590 = vmatpush2.msra.mxu0 0.0
      %2591 = vmatprep.subr.mxu0 0.0
      %2592 = vmatpush2.msra.mxu0 0.0
      %2593 = vmatprep.subr.mxu0 0.0
      %2594 = vmatpush2.msra.mxu0 0.0
      %2595 = vmatprep.subr.mxu0 0.0
      %2596 = vmatpush2.msra.mxu0 0.0
      %2597 = vmatprep.subr.mxu0 0.0
      %2598 = vmatpush2.msra.mxu0 0.0
      %2599 = vmatprep.subr.mxu0 0.0
      %2600 = vmatpush2.msra.mxu0 0.0
      %2601 = vmatprep.subr.mxu0 0.0
      %2602 = vmatpush2.msra.mxu0 0.0
      %2603 = vmatprep.subr.mxu0 0.0
      %2604 = vmatpush2.msra.mxu0 0.0
      %2605 = vmatprep.mubr.f32.mxu0 0.0
      %2606 = vmatmul.mubr.f32.gmra.mxu0 %v2145
      %v2607 = vpop.f32.mrf.mxu0
      %v2608 = vadd.f32 0.0, %v2607
      %v2609 = vpop.f32.mrf.mxu0
      %2610 = vmatprep.mubr.f32.mxu0 0.0
      %2611 = vmatmul.mubr.f32.gmra.mxu0 %v2150
      %v2612 = vpop.f32.mrf.mxu0
      %v2613 = vadd.f32 0.0, %v2612
      %v2614 = vpop.f32.mrf.mxu0
      %2615 = vdwg.mxu0
      %v2616 = vadd.f32 %v2522, %v2608
      %v2617 = vadd.f32 %v2523, %v2613
      %v2618 = vld [vmem:[%s13] sm:$0x1]
      %v2620 = vlaneseq
      %v2621 = vshrl.u32 %v2620, 7
      %v2622 = vsub.s32 0, %v2621
      %v2623 = vrot.slane %v2618, %v2622
      %v2625 = vadd.f32 %v2616, %v2623
      %v2626 = vadd.f32 %v2617, %v2623
      %v2627 = vmax.f32 %v2625, 0.0
      %v2628 = vmax.f32 %v2626, 0.0
      %v2629 = vld [vmem:[%s14] sm:$0xff]
      %v2630 = vld [vmem:[%s14 + $0x8] sm:$0xff]
      %v2631 = vld [vmem:[%s14 + $0x10] sm:$0xff]
      %v2632 = vld [vmem:[%s14 + $0x18] sm:$0xff]
      %v2633 = vld [vmem:[%s14 + $0x20] sm:$0xff]
      %v2634 = vld [vmem:[%s14 + $0x28] sm:$0xff]
      %v2635 = vld [vmem:[%s14 + $0x30] sm:$0xff]
      %v2636 = vld [vmem:[%s14 + $0x38] sm:$0xff]
      %v2637 = vld [vmem:[%s14 + $0x40] sm:$0xff]
      %v2638 = vld [vmem:[%s14 + $0x48] sm:$0xff]
      %v2640 = vsel %vm561, %v2629, 0
      %v2643 = vsel %vm561, %v2630, 0
      %v2646 = vsel %vm561, %v2631, 0
      %v2649 = vsel %vm561, %v2632, 0
      %v2652 = vsel %vm561, %v2633, 0
      %v2655 = vsel %vm561, %v2634, 0
      %v2658 = vsel %vm561, %v2635, 0
      %v2661 = vsel %vm561, %v2636, 0
      %v2664 = vsel %vm561, %v2637, 0
      %v2667 = vsel %vm561, %v2638, 0
      %2669 = vmatprep.subr.mxu0 0.0
      %2670 = vmatpush1.msra.mxu0 0.0
      %2671 = vmatprep.subr.mxu0 0.0
      %2672 = vmatpush1.msra.mxu0 0.0
      %2673 = vmatprep.subr.mxu0 0.0
      %2674 = vmatpush1.msra.mxu0 0.0
      %2675 = vmatprep.subr.mxu0 0.0
      %2676 = vmatpush1.msra.mxu0 0.0
      %2677 = vmatprep.subr.mxu0 0.0
      %2678 = vmatpush1.msra.mxu0 0.0
      %2679 = vmatprep.subr.mxu0 0.0
      %2680 = vmatpush1.msra.mxu0 0.0
      %2681 = vmatprep.subr.mxu0 0.0
      %2682 = vmatpush1.msra.mxu0 0.0
      %2683 = vmatprep.subr.mxu0 0.0
      %2684 = vmatpush1.msra.mxu0 0.0
      %2685 = vmatprep.subr.mxu0 0.0
      %2686 = vmatpush1.msra.mxu0 0.0
      %2687 = vmatprep.subr.mxu0 0.0
      %2688 = vmatpush1.msra.mxu0 0.0
      %2689 = vmatprep.subr.mxu0 0.0
      %2690 = vmatpush1.msra.mxu0 0.0
      %2691 = vmatprep.subr.mxu0 0.0
      %2692 = vmatpush1.msra.mxu0 0.0
      %2693 = vmatprep.subr.mxu0 0.0
      %2694 = vmatpush1.msra.mxu0 0.0
      %2695 = vmatprep.subr.mxu0 0.0
      %2696 = vmatpush1.msra.mxu0 0.0
      %2697 = vmatprep.subr.mxu0 %v1142
      %2698 = vmatpush1.msra.mxu0 %v2628
      %2699 = vmatprep.subr.mxu0 %v1141
      %2700 = vmatpush1.msra.mxu0 %v2627
      %2701 = vmatprep.subr.mxu0 0.0
      %2702 = vmatpush2.msra.mxu0 0.0
      %2703 = vmatprep.subr.mxu0 0.0
      %2704 = vmatpush2.msra.mxu0 0.0
      %2705 = vmatprep.subr.mxu0 0.0
      %2706 = vmatpush2.msra.mxu0 0.0
      %2707 = vmatprep.subr.mxu0 0.0
      %2708 = vmatpush2.msra.mxu0 0.0
      %2709 = vmatprep.subr.mxu0 0.0
      %2710 = vmatpush2.msra.mxu0 0.0
      %2711 = vmatprep.subr.mxu0 0.0
      %2712 = vmatpush2.msra.mxu0 0.0
      %2713 = vmatprep.subr.mxu0 0.0
      %2714 = vmatpush2.msra.mxu0 0.0
      %2715 = vmatprep.subr.mxu0 0.0
      %2716 = vmatpush2.msra.mxu0 0.0
      %2717 = vmatprep.subr.mxu0 0.0
      %2718 = vmatpush2.msra.mxu0 0.0
      %2719 = vmatprep.subr.mxu0 0.0
      %2720 = vmatpush2.msra.mxu0 0.0
      %2721 = vmatprep.subr.mxu0 0.0
      %2722 = vmatpush2.msra.mxu0 0.0
      %2723 = vmatprep.subr.mxu0 0.0
      %2724 = vmatpush2.msra.mxu0 0.0
      %2725 = vmatprep.subr.mxu0 0.0
      %2726 = vmatpush2.msra.mxu0 0.0
      %2727 = vmatprep.subr.mxu0 0.0
      %2728 = vmatpush2.msra.mxu0 0.0
      %2729 = vmatprep.subr.mxu0 0.0
      %2730 = vmatpush2.msra.mxu0 0.0
      %2731 = vmatprep.subr.mxu0 0.0
      %2732 = vmatpush2.msra.mxu0 0.0
      %2733 = vmatprep.mubr.f32.mxu0 0.0
      %2734 = vmatmul.mubr.f32.gmra.mxu0 %v2640
      %v2735 = vpop.f32.mrf.mxu0
      %v2736 = vadd.f32 0.0, %v2735
      %v2737 = vpop.f32.mrf.mxu0
      %v2738 = vadd.f32 0.0, %v2737
      %2739 = vmatprep.mubr.f32.mxu0 0.0
      %2740 = vmatmul.mubr.f32.gmra.mxu0 %v2643
      %v2741 = vpop.f32.mrf.mxu0
      %v2742 = vadd.f32 0.0, %v2741
      %v2743 = vpop.f32.mrf.mxu0
      %v2744 = vadd.f32 0.0, %v2743
      %2745 = vmatprep.mubr.f32.mxu0 0.0
      %2746 = vmatmul.mubr.f32.gmra.mxu0 %v2646
      %v2747 = vpop.f32.mrf.mxu0
      %v2748 = vadd.f32 0.0, %v2747
      %v2749 = vpop.f32.mrf.mxu0
      %v2750 = vadd.f32 0.0, %v2749
      %2751 = vmatprep.mubr.f32.mxu0 0.0
      %2752 = vmatmul.mubr.f32.gmra.mxu0 %v2649
      %v2753 = vpop.f32.mrf.mxu0
      %v2754 = vadd.f32 0.0, %v2753
      %v2755 = vpop.f32.mrf.mxu0
      %v2756 = vadd.f32 0.0, %v2755
      %2757 = vmatprep.mubr.f32.mxu0 0.0
      %2758 = vmatmul.mubr.f32.gmra.mxu0 %v2652
      %v2759 = vpop.f32.mrf.mxu0
      %v2760 = vadd.f32 0.0, %v2759
      %v2761 = vpop.f32.mrf.mxu0
      %v2762 = vadd.f32 0.0, %v2761
      %2763 = vmatprep.mubr.f32.mxu0 0.0
      %2764 = vmatmul.mubr.f32.gmra.mxu0 %v2655
      %v2765 = vpop.f32.mrf.mxu0
      %v2766 = vadd.f32 0.0, %v2765
      %v2767 = vpop.f32.mrf.mxu0
      %v2768 = vadd.f32 0.0, %v2767
      %2769 = vmatprep.mubr.f32.mxu0 0.0
      %2770 = vmatmul.mubr.f32.gmra.mxu0 %v2658
      %v2771 = vpop.f32.mrf.mxu0
      %v2772 = vadd.f32 0.0, %v2771
      %v2773 = vpop.f32.mrf.mxu0
      %v2774 = vadd.f32 0.0, %v2773
      %2775 = vmatprep.mubr.f32.mxu0 0.0
      %2776 = vmatmul.mubr.f32.gmra.mxu0 %v2661
      %v2777 = vpop.f32.mrf.mxu0
      %v2778 = vadd.f32 0.0, %v2777
      %v2779 = vpop.f32.mrf.mxu0
      %v2780 = vadd.f32 0.0, %v2779
      %2781 = vmatprep.mubr.f32.mxu0 0.0
      %2782 = vmatmul.mubr.f32.gmra.mxu0 %v2664
      %v2783 = vpop.f32.mrf.mxu0
      %v2784 = vadd.f32 0.0, %v2783
      %v2785 = vpop.f32.mrf.mxu0
      %v2786 = vadd.f32 0.0, %v2785
      %2787 = vmatprep.mubr.f32.mxu0 0.0
      %2788 = vmatmul.mubr.f32.gmra.mxu0 %v2667
      %v2789 = vpop.f32.mrf.mxu0
      %v2790 = vadd.f32 0.0, %v2789
      %v2791 = vpop.f32.mrf.mxu0
      %v2792 = vadd.f32 0.0, %v2791
      %2793 = vdwg.mxu0
      %v2794 = vld [vmem:[%s15] sm:$0xff]
      %v2795 = vld [vmem:[%s15 + $0x8] sm:$0xff]
      %v2796 = vld [vmem:[%s15 + $0x10] sm:$0xff]
      %v2797 = vld [vmem:[%s15 + $0x18] sm:$0xff]
      %v2798 = vld [vmem:[%s15 + $0x20] sm:$0xff]
      %v2799 = vld [vmem:[%s15 + $0x28] sm:$0xff]
      %v2800 = vld [vmem:[%s15 + $0x30] sm:$0xff]
      %v2801 = vld [vmem:[%s15 + $0x38] sm:$0xff]
      %v2802 = vld [vmem:[%s15 + $0x40] sm:$0xff]
      %v2803 = vld [vmem:[%s15 + $0x48] sm:$0xff]
      %v2804 = vld [vmem:[%s15 + $0x50] sm:$0xff]
      %v2805 = vld [vmem:[%s15 + $0x58] sm:$0xff]
      %v2806 = vld [vmem:[%s15 + $0x60] sm:$0xff]
      %v2807 = vld [vmem:[%s15 + $0x68] sm:$0xff]
      %v2808 = vld [vmem:[%s15 + $0x70] sm:$0xff]
      %v2809 = vld [vmem:[%s15 + $0x78] sm:$0xff]
      %v2810 = vld [vmem:[%s15 + $0x80] sm:$0xff]
      %v2811 = vld [vmem:[%s15 + $0x88] sm:$0xff]
      %v2812 = vld [vmem:[%s15 + $0x90] sm:$0xff]
      %v2813 = vld [vmem:[%s15 + $0x98] sm:$0xff]
      %v2814 = vld [vmem:[%s15 + $0xa0] sm:$0xff]
      %v2815 = vld [vmem:[%s15 + $0xa8] sm:$0xff]
      %v2816 = vld [vmem:[%s15 + $0xb0] sm:$0xff]
      %v2817 = vld [vmem:[%s15 + $0xb8] sm:$0xff]
      %v2818 = vld [vmem:[%s15 + $0xc0] sm:$0xff]
      %v2819 = vld [vmem:[%s15 + $0xc8] sm:$0xff]
      %v2820 = vld [vmem:[%s15 + $0xd0] sm:$0xff]
      %v2821 = vld [vmem:[%s15 + $0xd8] sm:$0xff]
      %v2822 = vld [vmem:[%s15 + $0xe0] sm:$0xff]
      %v2823 = vld [vmem:[%s15 + $0xe8] sm:$0xff]
      %v2824 = vld [vmem:[%s15 + $0xf0] sm:$0xff]
      %v2825 = vld [vmem:[%s15 + $0xf8] sm:$0xff]
      %s2826 = scalar_lea.vmem %s15, 256
      %v2827 = vld [vmem:[%s2826] sm:$0xff]
      %v2828 = vld [vmem:[%s2826 + $0x8] sm:$0xff]
      %v2829 = vld [vmem:[%s2826 + $0x10] sm:$0xff]
      %v2830 = vld [vmem:[%s2826 + $0x18] sm:$0xff]
      %v2831 = vld [vmem:[%s2826 + $0x20] sm:$0xff]
      %v2832 = vld [vmem:[%s2826 + $0x28] sm:$0xff]
      %v2833 = vld [vmem:[%s2826 + $0x30] sm:$0xff]
      %v2834 = vld [vmem:[%s2826 + $0x38] sm:$0xff]
      %v2835 = vld [vmem:[%s2826 + $0x40] sm:$0xff]
      %v2836 = vld [vmem:[%s2826 + $0x48] sm:$0xff]
      %v2837 = vld [vmem:[%s2826 + $0x50] sm:$0xff]
      %v2838 = vld [vmem:[%s2826 + $0x58] sm:$0xff]
      %v2839 = vld [vmem:[%s2826 + $0x60] sm:$0xff]
      %v2840 = vld [vmem:[%s2826 + $0x68] sm:$0xff]
      %v2841 = vld [vmem:[%s2826 + $0x70] sm:$0xff]
      %v2842 = vld [vmem:[%s2826 + $0x78] sm:$0xff]
      %v2843 = vld [vmem:[%s2826 + $0x80] sm:$0xff]
      %v2844 = vld [vmem:[%s2826 + $0x88] sm:$0xff]
      %v2845 = vld [vmem:[%s2826 + $0x90] sm:$0xff]
      %v2846 = vld [vmem:[%s2826 + $0x98] sm:$0xff]
      %v2847 = vld [vmem:[%s2826 + $0xa0] sm:$0xff]
      %v2848 = vld [vmem:[%s2826 + $0xa8] sm:$0xff]
      %v2849 = vld [vmem:[%s2826 + $0xb0] sm:$0xff]
      %v2850 = vld [vmem:[%s2826 + $0xb8] sm:$0xff]
      %v2851 = vld [vmem:[%s2826 + $0xc0] sm:$0xff]
      %v2852 = vld [vmem:[%s2826 + $0xc8] sm:$0xff]
      %v2853 = vld [vmem:[%s2826 + $0xd0] sm:$0xff]
      %v2854 = vld [vmem:[%s2826 + $0xd8] sm:$0xff]
      %v2855 = vld [vmem:[%s2826 + $0xe0] sm:$0xff]
      %v2856 = vld [vmem:[%s2826 + $0xe8] sm:$0xff]
      %v2857 = vld [vmem:[%s2826 + $0xf0] sm:$0xff]
      %v2858 = vld [vmem:[%s2826 + $0xf8] sm:$0xff]
      %2859 = vmatprep.subr.mxu0 0.0
      %2860 = vmatpush1.msra.mxu0 %v2842
      %2861 = vmatprep.subr.mxu0 0.0
      %2862 = vmatpush1.msra.mxu0 %v2841
      %2863 = vmatprep.subr.mxu0 0.0
      %2864 = vmatpush1.msra.mxu0 %v2840
      %2865 = vmatprep.subr.mxu0 0.0
      %2866 = vmatpush1.msra.mxu0 %v2839
      %2867 = vmatprep.subr.mxu0 0.0
      %2868 = vmatpush1.msra.mxu0 %v2838
      %2869 = vmatprep.subr.mxu0 0.0
      %2870 = vmatpush1.msra.mxu0 %v2837
      %2871 = vmatprep.subr.mxu0 0.0
      %2872 = vmatpush1.msra.mxu0 %v2836
      %2873 = vmatprep.subr.mxu0 0.0
      %2874 = vmatpush1.msra.mxu0 %v2835
      %2875 = vmatprep.subr.mxu0 0.0
      %2876 = vmatpush1.msra.mxu0 %v2834
      %2877 = vmatprep.subr.mxu0 0.0
      %2878 = vmatpush1.msra.mxu0 %v2833
      %2879 = vmatprep.subr.mxu0 0.0
      %2880 = vmatpush1.msra.mxu0 %v2832
      %2881 = vmatprep.subr.mxu0 0.0
      %2882 = vmatpush1.msra.mxu0 %v2831
      %2883 = vmatprep.subr.mxu0 0.0
      %2884 = vmatpush1.msra.mxu0 %v2830
      %2885 = vmatprep.subr.mxu0 0.0
      %2886 = vmatpush1.msra.mxu0 %v2829
      %2887 = vmatprep.subr.mxu0 0.0
      %2888 = vmatpush1.msra.mxu0 %v2828
      %2889 = vmatprep.subr.mxu0 0.0
      %2890 = vmatpush1.msra.mxu0 %v2827
      %2891 = vmatprep.subr.mxu0 0.0
      %2892 = vmatpush2.msra.mxu0 %v2858
      %2893 = vmatprep.subr.mxu0 0.0
      %2894 = vmatpush2.msra.mxu0 %v2857
      %2895 = vmatprep.subr.mxu0 0.0
      %2896 = vmatpush2.msra.mxu0 %v2856
      %2897 = vmatprep.subr.mxu0 0.0
      %2898 = vmatpush2.msra.mxu0 %v2855
      %2899 = vmatprep.subr.mxu0 0.0
      %2900 = vmatpush2.msra.mxu0 %v2854
      %2901 = vmatprep.subr.mxu0 0.0
      %2902 = vmatpush2.msra.mxu0 %v2853
      %2903 = vmatprep.subr.mxu0 0.0
      %2904 = vmatpush2.msra.mxu0 %v2852
      %2905 = vmatprep.subr.mxu0 0.0
      %2906 = vmatpush2.msra.mxu0 %v2851
      %2907 = vmatprep.subr.mxu0 0.0
      %2908 = vmatpush2.msra.mxu0 %v2850
      %2909 = vmatprep.subr.mxu0 0.0
      %2910 = vmatpush2.msra.mxu0 %v2849
      %2911 = vmatprep.subr.mxu0 0.0
      %2912 = vmatpush2.msra.mxu0 %v2848
      %2913 = vmatprep.subr.mxu0 0.0
      %2914 = vmatpush2.msra.mxu0 %v2847
      %2915 = vmatprep.subr.mxu0 0.0
      %2916 = vmatpush2.msra.mxu0 %v2846
      %2917 = vmatprep.subr.mxu0 0.0
      %2918 = vmatpush2.msra.mxu0 %v2845
      %2919 = vmatprep.subr.mxu0 0.0
      %2920 = vmatpush2.msra.mxu0 %v2844
      %2921 = vmatprep.subr.mxu0 0.0
      %2922 = vmatpush2.msra.mxu0 %v2843
      %2923 = vmatprep.mubr.f32.mxu0 %v2750
      %2924 = vmatmul.mubr.f32.gmra.mxu0 %v2748
      %v2925 = vpop.f32.mrf.mxu0
      %v2926 = vadd.f32 0.0, %v2925
      %v2927 = vpop.f32.mrf.mxu0
      %2928 = vmatprep.mubr.f32.mxu0 %v2756
      %2929 = vmatmul.mubr.f32.gmra.mxu0 %v2754
      %v2930 = vpop.f32.mrf.mxu0
      %v2931 = vadd.f32 0.0, %v2930
      %v2932 = vpop.f32.mrf.mxu0
      %2933 = vdwg.mxu0
      %2934 = vmatprep.subr.mxu0 0.0
      %2935 = vmatpush1.msra.mxu0 %v2809
      %2936 = vmatprep.subr.mxu0 0.0
      %2937 = vmatpush1.msra.mxu0 %v2808
      %2938 = vmatprep.subr.mxu0 0.0
      %2939 = vmatpush1.msra.mxu0 %v2807
      %2940 = vmatprep.subr.mxu0 0.0
      %2941 = vmatpush1.msra.mxu0 %v2806
      %2942 = vmatprep.subr.mxu0 0.0
      %2943 = vmatpush1.msra.mxu0 %v2805
      %2944 = vmatprep.subr.mxu0 0.0
      %2945 = vmatpush1.msra.mxu0 %v2804
      %2946 = vmatprep.subr.mxu0 0.0
      %2947 = vmatpush1.msra.mxu0 %v2803
      %2948 = vmatprep.subr.mxu0 0.0
      %2949 = vmatpush1.msra.mxu0 %v2802
      %2950 = vmatprep.subr.mxu0 0.0
      %2951 = vmatpush1.msra.mxu0 %v2801
      %2952 = vmatprep.subr.mxu0 0.0
      %2953 = vmatpush1.msra.mxu0 %v2800
      %2954 = vmatprep.subr.mxu0 0.0
      %2955 = vmatpush1.msra.mxu0 %v2799
      %2956 = vmatprep.subr.mxu0 0.0
      %2957 = vmatpush1.msra.mxu0 %v2798
      %2958 = vmatprep.subr.mxu0 0.0
      %2959 = vmatpush1.msra.mxu0 %v2797
      %2960 = vmatprep.subr.mxu0 0.0
      %2961 = vmatpush1.msra.mxu0 %v2796
      %2962 = vmatprep.subr.mxu0 0.0
      %2963 = vmatpush1.msra.mxu0 %v2795
      %2964 = vmatprep.subr.mxu0 0.0
      %2965 = vmatpush1.msra.mxu0 %v2794
      %2966 = vmatprep.subr.mxu0 0.0
      %2967 = vmatpush2.msra.mxu0 %v2825
      %2968 = vmatprep.subr.mxu0 0.0
      %2969 = vmatpush2.msra.mxu0 %v2824
      %2970 = vmatprep.subr.mxu0 0.0
      %2971 = vmatpush2.msra.mxu0 %v2823
      %2972 = vmatprep.subr.mxu0 0.0
      %2973 = vmatpush2.msra.mxu0 %v2822
      %2974 = vmatprep.subr.mxu0 0.0
      %2975 = vmatpush2.msra.mxu0 %v2821
      %2976 = vmatprep.subr.mxu0 0.0
      %2977 = vmatpush2.msra.mxu0 %v2820
      %2978 = vmatprep.subr.mxu0 0.0
      %2979 = vmatpush2.msra.mxu0 %v2819
      %2980 = vmatprep.subr.mxu0 0.0
      %2981 = vmatpush2.msra.mxu0 %v2818
      %2982 = vmatprep.subr.mxu0 0.0
      %2983 = vmatpush2.msra.mxu0 %v2817
      %2984 = vmatprep.subr.mxu0 0.0
      %2985 = vmatpush2.msra.mxu0 %v2816
      %2986 = vmatprep.subr.mxu0 0.0
      %2987 = vmatpush2.msra.mxu0 %v2815
      %2988 = vmatprep.subr.mxu0 0.0
      %2989 = vmatpush2.msra.mxu0 %v2814
      %2990 = vmatprep.subr.mxu0 0.0
      %2991 = vmatpush2.msra.mxu0 %v2813
      %2992 = vmatprep.subr.mxu0 0.0
      %2993 = vmatpush2.msra.mxu0 %v2812
      %2994 = vmatprep.subr.mxu0 0.0
      %2995 = vmatpush2.msra.mxu0 %v2811
      %2996 = vmatprep.subr.mxu0 0.0
      %2997 = vmatpush2.msra.mxu0 %v2810
      %2998 = vmatprep.mubr.f32.mxu0 %v2738
      %2999 = vmatmul.mubr.f32.gmra.mxu0 %v2736
      %v3000 = vpop.f32.mrf.mxu0
      %v3001 = vadd.f32 %v2926, %v3000
      %v3002 = vpop.f32.mrf.mxu0
      %3003 = vmatprep.mubr.f32.mxu0 %v2744
      %3004 = vmatmul.mubr.f32.gmra.mxu0 %v2742
      %v3005 = vpop.f32.mrf.mxu0
      %v3006 = vadd.f32 %v2931, %v3005
      %v3007 = vpop.f32.mrf.mxu0
      %3008 = vdwg.mxu0
      %s3009 = scalar_lea.vmem %s15, 512
      %v3010 = vld [vmem:[%s3009] sm:$0xff]
      %v3011 = vld [vmem:[%s3009 + $0x8] sm:$0xff]
      %v3012 = vld [vmem:[%s3009 + $0x10] sm:$0xff]
      %v3013 = vld [vmem:[%s3009 + $0x18] sm:$0xff]
      %v3014 = vld [vmem:[%s3009 + $0x20] sm:$0xff]
      %v3015 = vld [vmem:[%s3009 + $0x28] sm:$0xff]
      %v3016 = vld [vmem:[%s3009 + $0x30] sm:$0xff]
      %v3017 = vld [vmem:[%s3009 + $0x38] sm:$0xff]
      %v3018 = vld [vmem:[%s3009 + $0x40] sm:$0xff]
      %v3019 = vld [vmem:[%s3009 + $0x48] sm:$0xff]
      %v3020 = vld [vmem:[%s3009 + $0x50] sm:$0xff]
      %v3021 = vld [vmem:[%s3009 + $0x58] sm:$0xff]
      %v3022 = vld [vmem:[%s3009 + $0x60] sm:$0xff]
      %v3023 = vld [vmem:[%s3009 + $0x68] sm:$0xff]
      %v3024 = vld [vmem:[%s3009 + $0x70] sm:$0xff]
      %v3025 = vld [vmem:[%s3009 + $0x78] sm:$0xff]
      %v3026 = vld [vmem:[%s3009 + $0x80] sm:$0xff]
      %v3027 = vld [vmem:[%s3009 + $0x88] sm:$0xff]
      %v3028 = vld [vmem:[%s3009 + $0x90] sm:$0xff]
      %v3029 = vld [vmem:[%s3009 + $0x98] sm:$0xff]
      %v3030 = vld [vmem:[%s3009 + $0xa0] sm:$0xff]
      %v3031 = vld [vmem:[%s3009 + $0xa8] sm:$0xff]
      %v3032 = vld [vmem:[%s3009 + $0xb0] sm:$0xff]
      %v3033 = vld [vmem:[%s3009 + $0xb8] sm:$0xff]
      %v3034 = vld [vmem:[%s3009 + $0xc0] sm:$0xff]
      %v3035 = vld [vmem:[%s3009 + $0xc8] sm:$0xff]
      %v3036 = vld [vmem:[%s3009 + $0xd0] sm:$0xff]
      %v3037 = vld [vmem:[%s3009 + $0xd8] sm:$0xff]
      %v3038 = vld [vmem:[%s3009 + $0xe0] sm:$0xff]
      %v3039 = vld [vmem:[%s3009 + $0xe8] sm:$0xff]
      %v3040 = vld [vmem:[%s3009 + $0xf0] sm:$0xff]
      %v3041 = vld [vmem:[%s3009 + $0xf8] sm:$0xff]
      %3042 = vmatprep.subr.mxu0 0.0
      %3043 = vmatpush1.msra.mxu0 %v3025
      %3044 = vmatprep.subr.mxu0 0.0
      %3045 = vmatpush1.msra.mxu0 %v3024
      %3046 = vmatprep.subr.mxu0 0.0
      %3047 = vmatpush1.msra.mxu0 %v3023
      %3048 = vmatprep.subr.mxu0 0.0
      %3049 = vmatpush1.msra.mxu0 %v3022
      %3050 = vmatprep.subr.mxu0 0.0
      %3051 = vmatpush1.msra.mxu0 %v3021
      %3052 = vmatprep.subr.mxu0 0.0
      %3053 = vmatpush1.msra.mxu0 %v3020
      %3054 = vmatprep.subr.mxu0 0.0
      %3055 = vmatpush1.msra.mxu0 %v3019
      %3056 = vmatprep.subr.mxu0 0.0
      %3057 = vmatpush1.msra.mxu0 %v3018
      %3058 = vmatprep.subr.mxu0 0.0
      %3059 = vmatpush1.msra.mxu0 %v3017
      %3060 = vmatprep.subr.mxu0 0.0
      %3061 = vmatpush1.msra.mxu0 %v3016
      %3062 = vmatprep.subr.mxu0 0.0
      %3063 = vmatpush1.msra.mxu0 %v3015
      %3064 = vmatprep.subr.mxu0 0.0
      %3065 = vmatpush1.msra.mxu0 %v3014
      %3066 = vmatprep.subr.mxu0 0.0
      %3067 = vmatpush1.msra.mxu0 %v3013
      %3068 = vmatprep.subr.mxu0 0.0
      %3069 = vmatpush1.msra.mxu0 %v3012
      %3070 = vmatprep.subr.mxu0 0.0
      %3071 = vmatpush1.msra.mxu0 %v3011
      %3072 = vmatprep.subr.mxu0 0.0
      %3073 = vmatpush1.msra.mxu0 %v3010
      %3074 = vmatprep.subr.mxu0 0.0
      %3075 = vmatpush2.msra.mxu0 %v3041
      %3076 = vmatprep.subr.mxu0 0.0
      %3077 = vmatpush2.msra.mxu0 %v3040
      %3078 = vmatprep.subr.mxu0 0.0
      %3079 = vmatpush2.msra.mxu0 %v3039
      %3080 = vmatprep.subr.mxu0 0.0
      %3081 = vmatpush2.msra.mxu0 %v3038
      %3082 = vmatprep.subr.mxu0 0.0
      %3083 = vmatpush2.msra.mxu0 %v3037
      %3084 = vmatprep.subr.mxu0 0.0
      %3085 = vmatpush2.msra.mxu0 %v3036
      %3086 = vmatprep.subr.mxu0 0.0
      %3087 = vmatpush2.msra.mxu0 %v3035
      %3088 = vmatprep.subr.mxu0 0.0
      %3089 = vmatpush2.msra.mxu0 %v3034
      %3090 = vmatprep.subr.mxu0 0.0
      %3091 = vmatpush2.msra.mxu0 %v3033
      %3092 = vmatprep.subr.mxu0 0.0
      %3093 = vmatpush2.msra.mxu0 %v3032
      %3094 = vmatprep.subr.mxu0 0.0
      %3095 = vmatpush2.msra.mxu0 %v3031
      %3096 = vmatprep.subr.mxu0 0.0
      %3097 = vmatpush2.msra.mxu0 %v3030
      %3098 = vmatprep.subr.mxu0 0.0
      %3099 = vmatpush2.msra.mxu0 %v3029
      %3100 = vmatprep.subr.mxu0 0.0
      %3101 = vmatpush2.msra.mxu0 %v3028
      %3102 = vmatprep.subr.mxu0 0.0
      %3103 = vmatpush2.msra.mxu0 %v3027
      %3104 = vmatprep.subr.mxu0 0.0
      %3105 = vmatpush2.msra.mxu0 %v3026
      %3106 = vmatprep.mubr.f32.mxu0 %v2762
      %3107 = vmatmul.mubr.f32.gmra.mxu0 %v2760
      %v3108 = vpop.f32.mrf.mxu0
      %v3109 = vadd.f32 0.0, %v3108
      %v3110 = vpop.f32.mrf.mxu0
      %3111 = vmatprep.mubr.f32.mxu0 %v2768
      %3112 = vmatmul.mubr.f32.gmra.mxu0 %v2766
      %v3113 = vpop.f32.mrf.mxu0
      %v3114 = vadd.f32 0.0, %v3113
      %v3115 = vpop.f32.mrf.mxu0
      %3116 = vdwg.mxu0
      %v3117 = vadd.f32 %v3001, %v3109
      %v3118 = vadd.f32 %v3006, %v3114
      %s3119 = scalar_lea.vmem %s15, 768
      %v3120 = vld [vmem:[%s3119] sm:$0xff]
      %v3121 = vld [vmem:[%s3119 + $0x8] sm:$0xff]
      %v3122 = vld [vmem:[%s3119 + $0x10] sm:$0xff]
      %v3123 = vld [vmem:[%s3119 + $0x18] sm:$0xff]
      %v3124 = vld [vmem:[%s3119 + $0x20] sm:$0xff]
      %v3125 = vld [vmem:[%s3119 + $0x28] sm:$0xff]
      %v3126 = vld [vmem:[%s3119 + $0x30] sm:$0xff]
      %v3127 = vld [vmem:[%s3119 + $0x38] sm:$0xff]
      %v3128 = vld [vmem:[%s3119 + $0x40] sm:$0xff]
      %v3129 = vld [vmem:[%s3119 + $0x48] sm:$0xff]
      %v3130 = vld [vmem:[%s3119 + $0x50] sm:$0xff]
      %v3131 = vld [vmem:[%s3119 + $0x58] sm:$0xff]
      %v3132 = vld [vmem:[%s3119 + $0x60] sm:$0xff]
      %v3133 = vld [vmem:[%s3119 + $0x68] sm:$0xff]
      %v3134 = vld [vmem:[%s3119 + $0x70] sm:$0xff]
      %v3135 = vld [vmem:[%s3119 + $0x78] sm:$0xff]
      %v3136 = vld [vmem:[%s3119 + $0x80] sm:$0xff]
      %v3137 = vld [vmem:[%s3119 + $0x88] sm:$0xff]
      %v3138 = vld [vmem:[%s3119 + $0x90] sm:$0xff]
      %v3139 = vld [vmem:[%s3119 + $0x98] sm:$0xff]
      %v3140 = vld [vmem:[%s3119 + $0xa0] sm:$0xff]
      %v3141 = vld [vmem:[%s3119 + $0xa8] sm:$0xff]
      %v3142 = vld [vmem:[%s3119 + $0xb0] sm:$0xff]
      %v3143 = vld [vmem:[%s3119 + $0xb8] sm:$0xff]
      %v3144 = vld [vmem:[%s3119 + $0xc0] sm:$0xff]
      %v3145 = vld [vmem:[%s3119 + $0xc8] sm:$0xff]
      %v3146 = vld [vmem:[%s3119 + $0xd0] sm:$0xff]
      %v3147 = vld [vmem:[%s3119 + $0xd8] sm:$0xff]
      %v3148 = vld [vmem:[%s3119 + $0xe0] sm:$0xff]
      %v3149 = vld [vmem:[%s3119 + $0xe8] sm:$0xff]
      %v3150 = vld [vmem:[%s3119 + $0xf0] sm:$0xff]
      %v3151 = vld [vmem:[%s3119 + $0xf8] sm:$0xff]
      %3152 = vmatprep.subr.mxu0 0.0
      %3153 = vmatpush1.msra.mxu0 %v3135
      %3154 = vmatprep.subr.mxu0 0.0
      %3155 = vmatpush1.msra.mxu0 %v3134
      %3156 = vmatprep.subr.mxu0 0.0
      %3157 = vmatpush1.msra.mxu0 %v3133
      %3158 = vmatprep.subr.mxu0 0.0
      %3159 = vmatpush1.msra.mxu0 %v3132
      %3160 = vmatprep.subr.mxu0 0.0
      %3161 = vmatpush1.msra.mxu0 %v3131
      %3162 = vmatprep.subr.mxu0 0.0
      %3163 = vmatpush1.msra.mxu0 %v3130
      %3164 = vmatprep.subr.mxu0 0.0
      %3165 = vmatpush1.msra.mxu0 %v3129
      %3166 = vmatprep.subr.mxu0 0.0
      %3167 = vmatpush1.msra.mxu0 %v3128
      %3168 = vmatprep.subr.mxu0 0.0
      %3169 = vmatpush1.msra.mxu0 %v3127
      %3170 = vmatprep.subr.mxu0 0.0
      %3171 = vmatpush1.msra.mxu0 %v3126
      %3172 = vmatprep.subr.mxu0 0.0
      %3173 = vmatpush1.msra.mxu0 %v3125
      %3174 = vmatprep.subr.mxu0 0.0
      %3175 = vmatpush1.msra.mxu0 %v3124
      %3176 = vmatprep.subr.mxu0 0.0
      %3177 = vmatpush1.msra.mxu0 %v3123
      %3178 = vmatprep.subr.mxu0 0.0
      %3179 = vmatpush1.msra.mxu0 %v3122
      %3180 = vmatprep.subr.mxu0 0.0
      %3181 = vmatpush1.msra.mxu0 %v3121
      %3182 = vmatprep.subr.mxu0 0.0
      %3183 = vmatpush1.msra.mxu0 %v3120
      %3184 = vmatprep.subr.mxu0 0.0
      %3185 = vmatpush2.msra.mxu0 %v3151
      %3186 = vmatprep.subr.mxu0 0.0
      %3187 = vmatpush2.msra.mxu0 %v3150
      %3188 = vmatprep.subr.mxu0 0.0
      %3189 = vmatpush2.msra.mxu0 %v3149
      %3190 = vmatprep.subr.mxu0 0.0
      %3191 = vmatpush2.msra.mxu0 %v3148
      %3192 = vmatprep.subr.mxu0 0.0
      %3193 = vmatpush2.msra.mxu0 %v3147
      %3194 = vmatprep.subr.mxu0 0.0
      %3195 = vmatpush2.msra.mxu0 %v3146
      %3196 = vmatprep.subr.mxu0 0.0
      %3197 = vmatpush2.msra.mxu0 %v3145
      %3198 = vmatprep.subr.mxu0 0.0
      %3199 = vmatpush2.msra.mxu0 %v3144
      %3200 = vmatprep.subr.mxu0 0.0
      %3201 = vmatpush2.msra.mxu0 %v3143
      %3202 = vmatprep.subr.mxu0 0.0
      %3203 = vmatpush2.msra.mxu0 %v3142
      %3204 = vmatprep.subr.mxu0 0.0
      %3205 = vmatpush2.msra.mxu0 %v3141
      %3206 = vmatprep.subr.mxu0 0.0
      %3207 = vmatpush2.msra.mxu0 %v3140
      %3208 = vmatprep.subr.mxu0 0.0
      %3209 = vmatpush2.msra.mxu0 %v3139
      %3210 = vmatprep.subr.mxu0 0.0
      %3211 = vmatpush2.msra.mxu0 %v3138
      %3212 = vmatprep.subr.mxu0 0.0
      %3213 = vmatpush2.msra.mxu0 %v3137
      %3214 = vmatprep.subr.mxu0 0.0
      %3215 = vmatpush2.msra.mxu0 %v3136
      %3216 = vmatprep.mubr.f32.mxu0 %v2774
      %3217 = vmatmul.mubr.f32.gmra.mxu0 %v2772
      %v3218 = vpop.f32.mrf.mxu0
      %v3219 = vadd.f32 0.0, %v3218
      %v3220 = vpop.f32.mrf.mxu0
      %3221 = vmatprep.mubr.f32.mxu0 %v2780
      %3222 = vmatmul.mubr.f32.gmra.mxu0 %v2778
      %v3223 = vpop.f32.mrf.mxu0
      %v3224 = vadd.f32 0.0, %v3223
      %v3225 = vpop.f32.mrf.mxu0
      %3226 = vdwg.mxu0
      %v3227 = vadd.f32 %v3117, %v3219
      %v3228 = vadd.f32 %v3118, %v3224
      %s3229 = scalar_lea.vmem %s15, 1024
      %v3230 = vld [vmem:[%s3229] sm:$0xff]
      %v3231 = vld [vmem:[%s3229 + $0x8] sm:$0xff]
      %v3232 = vld [vmem:[%s3229 + $0x10] sm:$0xff]
      %v3233 = vld [vmem:[%s3229 + $0x18] sm:$0xff]
      %v3234 = vld [vmem:[%s3229 + $0x20] sm:$0xff]
      %v3235 = vld [vmem:[%s3229 + $0x28] sm:$0xff]
      %v3236 = vld [vmem:[%s3229 + $0x30] sm:$0xff]
      %v3237 = vld [vmem:[%s3229 + $0x38] sm:$0xff]
      %v3238 = vld [vmem:[%s3229 + $0x40] sm:$0xff]
      %v3239 = vld [vmem:[%s3229 + $0x48] sm:$0xff]
      %v3240 = vld [vmem:[%s3229 + $0x50] sm:$0xff]
      %v3241 = vld [vmem:[%s3229 + $0x58] sm:$0xff]
      %v3242 = vld [vmem:[%s3229 + $0x60] sm:$0xff]
      %v3243 = vld [vmem:[%s3229 + $0x68] sm:$0xff]
      %v3244 = vld [vmem:[%s3229 + $0x70] sm:$0xff]
      %v3245 = vld [vmem:[%s3229 + $0x78] sm:$0xff]
      %v3246 = vld [vmem:[%s3229 + $0x80] sm:$0xff]
      %v3247 = vld [vmem:[%s3229 + $0x88] sm:$0xff]
      %v3248 = vld [vmem:[%s3229 + $0x90] sm:$0xff]
      %v3249 = vld [vmem:[%s3229 + $0x98] sm:$0xff]
      %v3250 = vld [vmem:[%s3229 + $0xa0] sm:$0xff]
      %v3251 = vld [vmem:[%s3229 + $0xa8] sm:$0xff]
      %v3252 = vld [vmem:[%s3229 + $0xb0] sm:$0xff]
      %v3253 = vld [vmem:[%s3229 + $0xb8] sm:$0xff]
      %v3254 = vld [vmem:[%s3229 + $0xc0] sm:$0xff]
      %v3255 = vld [vmem:[%s3229 + $0xc8] sm:$0xff]
      %v3256 = vld [vmem:[%s3229 + $0xd0] sm:$0xff]
      %v3257 = vld [vmem:[%s3229 + $0xd8] sm:$0xff]
      %v3258 = vld [vmem:[%s3229 + $0xe0] sm:$0xff]
      %v3259 = vld [vmem:[%s3229 + $0xe8] sm:$0xff]
      %v3260 = vld [vmem:[%s3229 + $0xf0] sm:$0xff]
      %v3261 = vld [vmem:[%s3229 + $0xf8] sm:$0xff]
      %3262 = vmatprep.subr.mxu0 0.0
      %3263 = vmatpush1.msra.mxu0 %v3245
      %3264 = vmatprep.subr.mxu0 0.0
      %3265 = vmatpush1.msra.mxu0 %v3244
      %3266 = vmatprep.subr.mxu0 0.0
      %3267 = vmatpush1.msra.mxu0 %v3243
      %3268 = vmatprep.subr.mxu0 0.0
      %3269 = vmatpush1.msra.mxu0 %v3242
      %3270 = vmatprep.subr.mxu0 0.0
      %3271 = vmatpush1.msra.mxu0 %v3241
      %3272 = vmatprep.subr.mxu0 0.0
      %3273 = vmatpush1.msra.mxu0 %v3240
      %3274 = vmatprep.subr.mxu0 0.0
      %3275 = vmatpush1.msra.mxu0 %v3239
      %3276 = vmatprep.subr.mxu0 0.0
      %3277 = vmatpush1.msra.mxu0 %v3238
      %3278 = vmatprep.subr.mxu0 0.0
      %3279 = vmatpush1.msra.mxu0 %v3237
      %3280 = vmatprep.subr.mxu0 0.0
      %3281 = vmatpush1.msra.mxu0 %v3236
      %3282 = vmatprep.subr.mxu0 0.0
      %3283 = vmatpush1.msra.mxu0 %v3235
      %3284 = vmatprep.subr.mxu0 0.0
      %3285 = vmatpush1.msra.mxu0 %v3234
      %3286 = vmatprep.subr.mxu0 0.0
      %3287 = vmatpush1.msra.mxu0 %v3233
      %3288 = vmatprep.subr.mxu0 0.0
      %3289 = vmatpush1.msra.mxu0 %v3232
      %3290 = vmatprep.subr.mxu0 0.0
      %3291 = vmatpush1.msra.mxu0 %v3231
      %3292 = vmatprep.subr.mxu0 0.0
      %3293 = vmatpush1.msra.mxu0 %v3230
      %3294 = vmatprep.subr.mxu0 0.0
      %3295 = vmatpush2.msra.mxu0 %v3261
      %3296 = vmatprep.subr.mxu0 0.0
      %3297 = vmatpush2.msra.mxu0 %v3260
      %3298 = vmatprep.subr.mxu0 0.0
      %3299 = vmatpush2.msra.mxu0 %v3259
      %3300 = vmatprep.subr.mxu0 0.0
      %3301 = vmatpush2.msra.mxu0 %v3258
      %3302 = vmatprep.subr.mxu0 0.0
      %3303 = vmatpush2.msra.mxu0 %v3257
      %3304 = vmatprep.subr.mxu0 0.0
      %3305 = vmatpush2.msra.mxu0 %v3256
      %3306 = vmatprep.subr.mxu0 0.0
      %3307 = vmatpush2.msra.mxu0 %v3255
      %3308 = vmatprep.subr.mxu0 0.0
      %3309 = vmatpush2.msra.mxu0 %v3254
      %3310 = vmatprep.subr.mxu0 0.0
      %3311 = vmatpush2.msra.mxu0 %v3253
      %3312 = vmatprep.subr.mxu0 0.0
      %3313 = vmatpush2.msra.mxu0 %v3252
      %3314 = vmatprep.subr.mxu0 0.0
      %3315 = vmatpush2.msra.mxu0 %v3251
      %3316 = vmatprep.subr.mxu0 0.0
      %3317 = vmatpush2.msra.mxu0 %v3250
      %3318 = vmatprep.subr.mxu0 0.0
      %3319 = vmatpush2.msra.mxu0 %v3249
      %3320 = vmatprep.subr.mxu0 0.0
      %3321 = vmatpush2.msra.mxu0 %v3248
      %3322 = vmatprep.subr.mxu0 0.0
      %3323 = vmatpush2.msra.mxu0 %v3247
      %3324 = vmatprep.subr.mxu0 0.0
      %3325 = vmatpush2.msra.mxu0 %v3246
      %3326 = vmatprep.mubr.f32.mxu0 %v2786
      %3327 = vmatmul.mubr.f32.gmra.mxu0 %v2784
      %v3328 = vpop.f32.mrf.mxu0
      %v3329 = vadd.f32 0.0, %v3328
      %v3330 = vpop.f32.mrf.mxu0
      %3331 = vmatprep.mubr.f32.mxu0 %v2792
      %3332 = vmatmul.mubr.f32.gmra.mxu0 %v2790
      %v3333 = vpop.f32.mrf.mxu0
      %v3334 = vadd.f32 0.0, %v3333
      %v3335 = vpop.f32.mrf.mxu0
      %3336 = vdwg.mxu0
      %v3337 = vadd.f32 %v3227, %v3329
      %v3338 = vadd.f32 %v3228, %v3334
      %v3339 = vld [vmem:[%s16] sm:$0x1]
      %v3341 = vlaneseq
      %v3342 = vshrl.u32 %v3341, 7
      %v3343 = vsub.s32 0, %v3342
      %v3344 = vrot.slane %v3339, %v3343
      %v3346 = vadd.f32 %v3337, %v3344
      %v3347 = vadd.f32 %v3338, %v3344
      %3348 = vst.msk [vmem:[%s548] sm:$0xff] %vm1593, %v3346
      %3349 = vst.msk [vmem:[%s548 + $0x8] sm:$0xff] %vm1593, %v3347
      %p3350 = scmp.lt.s32.totalorder %s28, 1
      %s3351 = scalar_select %p3350, %s28, 1
      %s3352 = smul.addr %s3351, 2
      %s3353 = smul.addr %s3352, 8
      %s3354 = scalar_lea.vmem %s17, %s3353
      // Predicated region
      $region89: #{net2_forward.1} parent=87 // pred_check
        %p3355 = pneg %p408
      $region90: #{net2_forward.1} parent=87 // pred_check_branch
        %3357 = sbr.rel (%p3355) target = $region92
      $region91: #{net2_forward.1} parent=87 // pred_region
        _
      $region92: #{net2_forward.1} parent=87 // pred_fallthru
        _
    $region88: #{net2_forward.1} parent=5 // pred_fallthru
      _
    %p3358 = scmp.le.s32.totalorder 2, %s23
    // Predicated region
    $region93: #{net2_forward.1} parent=5 // pred_check
      %p3359 = pneg %p3358
    $region94: #{net2_forward.1} parent=5 // pred_check_branch
      %3361 = sbr.rel (%p3359) target = $region96
    $region95: #{net2_forward.1} parent=5 // pred_region
      %s3362 = ssub.s32 %s23, 2
      // Predicated region
      $region97: #{net2_forward.1} parent=95 // pred_check
        %p3363 = pneg %p414
      $region98: #{net2_forward.1} parent=95 // pred_check_branch
        %3365 = sbr.rel (%p3363) target = $region100
      $region99: #{net2_forward.1} parent=95 // pred_region
        %p3366 = scmp.lt.s32.totalorder %s29, 1
        %s3367 = scalar_select %p3366, %s29, 1
        %s3368 = smul.addr %s3367, 2
        %s3369 = smul.addr %s3368, 8
        %s3370 = scalar_lea.vmem %s17, %s3369
      $region100: #{net2_forward.1} parent=95 // pred_fallthru
        _
    $region96: #{net2_forward.1} parent=5 // pred_fallthru
      _
  $region6: #{net2_forward.1} parent=0 // loop_footer
    %s27 = sadd.s32 1, %s23
  $region7: #{net2_forward.1} parent=0 // loop_footer_branch
    %22 = sbr.rel target = $region3
  $region8: #{net2_forward.1} parent=0 // loop_exit
    _

</llo_original>
